<compile_context>
chip_gen: v5e
topology: v5e:2x2
jax: 0.10.0
libtpu: 0.0.40
codegen_flags: <defaults>
</compile_context>

<pallas_src>
import jax
import jax.numpy as jnp
import numpy as np
from jax.experimental import pallas as pl
from jax.experimental.pallas import tpu as pltpu


# ------------------------------ fused kernel ------------------------------- #

def _bottleneck_kernel(x_ref, w1_ref, b1_ref, w2_ref, b2_ref, w3_ref, b3_ref,
                       caw1_ref, cab1_ref, caw23_ref, cab23_ref,
                       o_ref, o1_scr):
    _, H, W, Cin = x_ref.shape
    width = w1_ref.shape[-1]
    Cout = w3_ref.shape[-1]

    # The halo tile must hold exactly the zero-padded conv1 output for the 3x3 conv.
    # Scratch persists across grid steps, so the halo is re-zeroed every step
    # before the interior is (re)written.
    o1_scr[...] = jnp.zeros_like(o1_scr)

    x = x_ref[0]                                                  # (H, W, Cin) f32

    # ---- conv1 (1x1) + folded BN1 + ReLU, interior pixels only (M = H*W) ----
    o1 = jnp.dot(x.reshape(H * W, Cin).astype(jnp.bfloat16), w1_ref[...],
                 preferred_element_type=jnp.float32)
    o1 = jnp.maximum(o1 + b1_ref[...], 0.0)
    o1_scr[1:H + 1, 1:W + 1, :] = o1.reshape(H, W, width).astype(o1_scr.dtype)

    # ---- conv2 (3x3, pad=1) as ONE MXU dot over an im2col slab built in VMEM ----
    # Column order (dy, dx, c) matches w2_ref, which was reshaped
    # (3, 3, width, width) -> (9*width, width) at fold time.
    patches = [o1_scr[dy:dy + H, dx:dx + W, :].reshape(H * W, width)
               for dy in range(3) for dx in range(3)]
    xcol = jnp.concatenate(patches, axis=-1)                      # (H*W, 9*width) bf16
    o2 = jnp.dot(xcol, w2_ref[...], preferred_element_type=jnp.float32)
    o2 = jnp.maximum(o2 + b2_ref[...], 0.0)                       # (H*W, width) f32

    # ---- conv3 (1x1) + folded BN3 (no ReLU) ----
    o3 = jnp.dot(o2.astype(jnp.bfloat16), w3_ref[...],
                 preferred_element_type=jnp.float32) + b3_ref[...]
    o3hw = o3.reshape(H, W, Cout)                                 # f32

    # ---- CoordAttention (kept f32: tiny matmuls, v5e has no bf16 VPU/EUP) ----
    xh = jnp.mean(o3hw, axis=1)                                   # (H, Cout)  mean over W
    xw = jnp.mean(o3hw, axis=0)                                   # (W, Cout)  mean over H
    xcat = jnp.concatenate([xh, xw], axis=0)                      # (H+W, Cout)
    y = jnp.dot(xcat, caw1_ref[...], preferred_element_type=jnp.float32) + cab1_ref[...]
    y = y * (jnp.clip(y + 3.0, 0.0, 6.0) * (1.0 / 6.0))           # h_swish
    s = jax.nn.sigmoid(jnp.dot(y, caw23_ref[...], preferred_element_type=jnp.float32)
                       + cab23_ref[...])                          # (H+W, 2*Cout)
    oh = s[:H, :Cout]                                             # sigmoid(conv2(y_h))
    ow = s[H:, Cout:]                                             # sigmoid(conv3(y_w))

    # ---- out * ow * oh + identity (aligned input block), ReLU ----
    out = o3hw * ow[None, :, :] * oh[:, None, :] + x
    o_ref[0] = jnp.maximum(out, 0.0).astype(o_ref.dtype)


# --------------------------- parameter preparation -------------------------- #

def fold_bn_params(p):
    """One-time constant fold: BN scale into (bf16) conv weights, BN shift as f32 bias.
    conv2 is packed for the im2col single-dot; CA conv2/conv3 are concatenated."""
    width = p["w1"].shape[1]
    cout = p["w3"].shape[1]
    tc = p["ca_w1"].shape[1]
    fp = {}
    fp["w1"] = (p["w1"] * p["bn1_scale"][None, :]).astype(jnp.bfloat16)
    fp["b1"] = p["bn1_shift"].reshape(1, width).astype(jnp.float32)
    # rows = (dy*3 + dx)*width + cin  (matches in-kernel patch concat order)
    fp["w2"] = (p["w2"] * p["bn2_scale"][None, None, None, :]
                ).reshape(9 * width, width).astype(jnp.bfloat16)
    fp["b2"] = p["bn2_shift"].reshape(1, width).astype(jnp.float32)
    fp["w3"] = (p["w3"] * p["bn3_scale"][None, :]).astype(jnp.bfloat16)
    fp["b3"] = p["bn3_shift"].reshape(1, cout).astype(jnp.float32)
    fp["ca_w1"] = (p["ca_w1"] * p["ca_bn1_scale"][None, :]).astype(jnp.float32)
    fp["ca_b1"] = (p["ca_b1"] * p["ca_bn1_scale"] + p["ca_bn1_shift"]
                   ).reshape(1, tc).astype(jnp.float32)
    fp["ca_w23"] = jnp.concatenate([p["ca_w2"], p["ca_w3"]], axis=1).astype(jnp.float32)
    fp["ca_b23"] = jnp.concatenate([p["ca_b2"], p["ca_b3"]]
                                   ).reshape(1, 2 * cout).astype(jnp.float32)
    return fp


# ------------------------------ model wrapper ------------------------------- #

def bottleneck_forward(x_nchw, fp):
    # TODO(synk): at production sizes accept/return NHWC to skip these XLA transposes.
    x = jnp.transpose(x_nchw, (0, 2, 3, 1)).astype(jnp.float32)   # NCHW -> NHWC
    N, H, W, Cin = x.shape
    width = fp["w1"].shape[1]
    Cout = fp["w3"].shape[1]
    tc = fp["ca_w1"].shape[1]
    assert Cin == Cout, "downsample=None requires inplanes == planes * expansion"

    # Halo-tile scratch for the 3x3 conv (1-pixel zero halo); W axis rounded up so
    # the in-kernel (Hp, Wp, C) slices/reshapes stay sublane-friendly.
    Hp = H + 2
    Wp = ((W + 2 + 7) // 8) * 8

    y = pl.pallas_call(
        _bottleneck_kernel,
        out_shape=jax.ShapeDtypeStruct((N, H, W, Cout), jnp.float32),
        grid=(N,),
        in_specs=[
            pl.BlockSpec((1, H, W, Cin), lambda n: (n, 0, 0, 0)),   # x: conv1 input + residual
            pl.BlockSpec((Cin, width), lambda n: (0, 0)),           # conv1 w (BN folded, bf16)
            pl.BlockSpec((1, width), lambda n: (0, 0)),             # conv1 bias (BN shift)
            pl.BlockSpec((9 * width, width), lambda n: (0, 0)),     # conv2 w, im2col-packed bf16
            pl.BlockSpec((1, width), lambda n: (0, 0)),             # conv2 bias
            pl.BlockSpec((width, Cout), lambda n: (0, 0)),          # conv3 w (BN folded, bf16)
            pl.BlockSpec((1, Cout), lambda n: (0, 0)),              # conv3 bias
            pl.BlockSpec((Cout, tc), lambda n: (0, 0)),             # CA conv1 w (BN folded)
            pl.BlockSpec((1, tc), lambda n: (0, 0)),                # CA conv1 bias
            pl.BlockSpec((tc, 2 * Cout), lambda n: (0, 0)),         # CA [conv2 | conv3] w
            pl.BlockSpec((1, 2 * Cout), lambda n: (0, 0)),          # CA [b2 | b3]
        ],
        out_specs=pl.BlockSpec((1, H, W, Cout), lambda n: (n, 0, 0, 0)),
        scratch_shapes=[pltpu.VMEM((Hp, Wp, width), jnp.bfloat16)],
        compiler_params=pltpu.CompilerParams(
            dimension_semantics=("parallel",),
            vmem_limit_bytes=32 * 1024 * 1024),
    )(x, fp["w1"], fp["b1"], fp["w2"], fp["b2"], fp["w3"], fp["b3"],
      fp["ca_w1"], fp["ca_b1"], fp["ca_w23"], fp["ca_b23"])

    return jnp.transpose(y, (0, 3, 1, 2))                          # back to NCHW


# --------------------------- params & reference ---------------------------- #

def init_params(key, inplanes, planes, base_width=64, groups=1):
    expansion = 4
    width = int(planes * (base_width / 64.0)) * groups
    cout = planes * expansion
    tc = max(8, cout // 32)   # CoordAttention temp_c

    def bn(k, c):
        k1, k2, k3, k4 = jax.random.split(k, 4)
        gamma = jax.random.uniform(k1, (c,), minval=0.5, maxval=1.5)
        beta = jax.random.normal(k2, (c,)) * 0.1
        mean = jax.random.normal(k3, (c,)) * 0.1
        var = jax.random.uniform(k4, (c,), minval=0.5, maxval=1.5)
        scale = gamma / jnp.sqrt(var + 1e-5)
        shift = beta - mean * scale
        return scale.astype(jnp.float32), shift.astype(jnp.float32)

    ks = jax.random.split(key, 13)
    p = {}
    p["w1"] = (jax.random.normal(ks[0], (inplanes, width)) * 0.1).astype(jnp.float32)
    p["bn1_scale"], p["bn1_shift"] = bn(ks[1], width)
    p["w2"] = (jax.random.normal(ks[2], (3, 3, width, width)) * 0.1).astype(jnp.float32)
    p["bn2_scale"], p["bn2_shift"] = bn(ks[3], width)
    p["w3"] = (jax.random.normal(ks[4], (width, cout)) * 0.1).astype(jnp.float32)
    p["bn3_scale"], p["bn3_shift"] = bn(ks[5], cout)
    p["ca_w1"] = (jax.random.normal(ks[6], (cout, tc)) * 0.1).astype(jnp.float32)
    p["ca_b1"] = (jax.random.normal(ks[7], (tc,)) * 0.1).astype(jnp.float32)
    p["ca_bn1_scale"], p["ca_bn1_shift"] = bn(ks[8], tc)
    p["ca_w2"] = (jax.random.normal(ks[9], (tc, cout)) * 0.1).astype(jnp.float32)
    p["ca_b2"] = (jax.random.normal(ks[10], (cout,)) * 0.1).astype(jnp.float32)
    p["ca_w3"] = (jax.random.normal(ks[11], (tc, cout)) * 0.1).astype(jnp.float32)
    p["ca_b3"] = (jax.random.normal(ks[12], (cout,)) * 0.1).astype(jnp.float32)
    return p


def reference_forward(x_nchw, p):
    # Pure-JAX f32 reference of the same forward (eval-mode BN), for correctness check.
    x = jnp.transpose(x_nchw, (0, 2, 3, 1)).astype(jnp.float32)
    N, H, W, Cin = x.shape
    o = jnp.einsum("nhwi,io->nhwo", x, p["w1"]) * p["bn1_scale"] + p["bn1_shift"]
    o = jax.nn.relu(o)
    o = jax.lax.conv_general_dilated(o, p["w2"], (1, 1), "SAME",
                                     dimension_numbers=("NHWC", "HWIO", "NHWC"))
    o = o * p["bn2_scale"] + p["bn2_shift"]
    o = jax.nn.relu(o)
    o = jnp.einsum("nhwi,io->nhwo", o, p["w3"]) * p["bn3_scale"] + p["bn3_shift"]
    xh = jnp.mean(o, axis=2)   # (N,H,C)
    xw = jnp.mean(o, axis=1)   # (N,W,C)
    xcat = jnp.concatenate([xh, xw], axis=1)
    y = xcat @ p["ca_w1"] + p["ca_b1"]
    y = y * p["ca_bn1_scale"] + p["ca_bn1_shift"]
    y = y * (jnp.clip(y + 3.0, 0.0, 6.0) / 6.0)
    yh, yw = y[:, :H, :], y[:, H:, :]
    oh = jax.nn.sigmoid(yh @ p["ca_w2"] + p["ca_b2"])
    ow = jax.nn.sigmoid(yw @ p["ca_w3"] + p["ca_b3"])
    out = o * ow[:, None, :, :] * oh[:, :, None, :]
    out = jax.nn.relu(out + x)
    return jnp.transpose(out, (0, 3, 1, 2))


# --------------------------------- main ------------------------------------ #

if __name__ == "__main__":
    key = jax.random.PRNGKey(0)
    kx, kp = jax.random.split(key)

    # inplanes must equal planes * expansion (downsample=None) for the residual add.
    # N=2 keeps both v7x TensorCores busy via the "parallel" batch grid axis.
    N, inplanes, planes, H, W = 2, 32, 8, 16, 16
    x = jax.random.uniform(kx, (N, inplanes, H, W), dtype=jnp.float32)  # NCHW like PyTorch
    params = init_params(kp, inplanes, planes)
    folded = fold_bn_params(params)      # one-time BN constant fold + bf16 weight cast

    fwd = jax.jit(bottleneck_forward)
    out = jax.block_until_ready(fwd(x, folded))
    assert out.shape == (N, planes * 4, H, W)

    ref = reference_forward(x, params)
    # Tolerance accounts for bf16 MXU operands (accumulation is f32).
    np.testing.assert_allclose(np.asarray(out), np.asarray(ref), rtol=2e-2, atol=2e-2)

    print("KERNEL_OK")
</pallas_src>

<mosaic_0001>
module attributes {stable_mosaic.version = 11 : i64} {
  func.func @_bottleneck_kernel(%arg0: i32, %arg1: memref<1x16x16x32xf32, #tpu.memory_space<vmem>>, %arg2: memref<32x8xbf16, #tpu.memory_space<vmem>>, %arg3: memref<1x8xf32, #tpu.memory_space<vmem>>, %arg4: memref<72x8xbf16, #tpu.memory_space<vmem>>, %arg5: memref<1x8xf32, #tpu.memory_space<vmem>>, %arg6: memref<8x32xbf16, #tpu.memory_space<vmem>>, %arg7: memref<1x32xf32, #tpu.memory_space<vmem>>, %arg8: memref<32x8xf32, #tpu.memory_space<vmem>>, %arg9: memref<1x8xf32, #tpu.memory_space<vmem>>, %arg10: memref<8x64xf32, #tpu.memory_space<vmem>>, %arg11: memref<1x64xf32, #tpu.memory_space<vmem>>, %arg12: memref<1x16x16x32xf32, #tpu.memory_space<vmem>>, %arg13: memref<18x24x8xbf16, #tpu.memory_space<vmem>>) attributes {dimension_semantics = [#tpu.dimension_semantics<parallel>], iteration_bounds = array<i64: 2>, scalar_prefetch = 0 : i64, scratch_operands = 1 : i64, tpu.core_type = #tpu.core_type<tc>, window_params = [{transform_indices = @transform_0, window_bounds = array<i64: 1, 16, 16, 32>}, {pipeline_mode = #tpu.pipeline_mode<synchronous>, transform_indices = @transform_1, window_bounds = array<i64: 32, 8>}, {pipeline_mode = #tpu.pipeline_mode<synchronous>, transform_indices = @transform_2, window_bounds = array<i64: 1, 8>}, {pipeline_mode = #tpu.pipeline_mode<synchronous>, transform_indices = @transform_3, window_bounds = array<i64: 72, 8>}, {pipeline_mode = #tpu.pipeline_mode<synchronous>, transform_indices = @transform_4, window_bounds = array<i64: 1, 8>}, {pipeline_mode = #tpu.pipeline_mode<synchronous>, transform_indices = @transform_5, window_bounds = array<i64: 8, 32>}, {pipeline_mode = #tpu.pipeline_mode<synchronous>, transform_indices = @transform_6, window_bounds = array<i64: 1, 32>}, {pipeline_mode = #tpu.pipeline_mode<synchronous>, transform_indices = @transform_7, window_bounds = array<i64: 32, 8>}, {pipeline_mode = #tpu.pipeline_mode<synchronous>, transform_indices = @transform_8, window_bounds = array<i64: 1, 8>}, {pipeline_mode = #tpu.pipeline_mode<synchronous>, transform_indices = @transform_9, window_bounds = array<i64: 8, 64>}, {pipeline_mode = #tpu.pipeline_mode<synchronous>, transform_indices = @transform_10, window_bounds = array<i64: 1, 64>}, {transform_indices = @transform_11, window_bounds = array<i64: 1, 16, 16, 32>}]} {
    %cst = arith.constant 0.000000e+00 : bf16
    %0 = vector.broadcast %cst : bf16 to vector<18x24x8xbf16>
    %c0 = arith.constant 0 : index
    %c0_0 = arith.constant 0 : index
    %c0_1 = arith.constant 0 : index
    %1 = vector.load %arg13[%c0, %c0_0, %c0_1] : memref<18x24x8xbf16, #tpu.memory_space<vmem>>, vector<18x24x8xbf16>
    tpu.vector_store %arg13[%c0, %c0_0, %c0_1], %0 {strides = array<i32>} : memref<18x24x8xbf16, #tpu.memory_space<vmem>>, vector<18x24x8xbf16>,
    %c0_2 = arith.constant 0 : index
    %c0_3 = arith.constant 0 : index
    %c0_4 = arith.constant 0 : index
    %c0_5 = arith.constant 0 : index
    %2 = vector.load %arg1[%c0_2, %c0_3, %c0_4, %c0_5] : memref<1x16x16x32xf32, #tpu.memory_space<vmem>>, vector<1x16x16x32xf32>
    %3 = vector.shape_cast %2 : vector<1x16x16x32xf32> to vector<16x16x32xf32>
    %4 = vector.shape_cast %3 : vector<16x16x32xf32> to vector<256x32xf32>
    %5 = arith.truncf %4 : vector<256x32xf32> to vector<256x32xbf16>
    %c0_6 = arith.constant 0 : index
    %c0_7 = arith.constant 0 : index
    %6 = vector.load %arg2[%c0_6, %c0_7] : memref<32x8xbf16, #tpu.memory_space<vmem>>, vector<32x8xbf16>
    %cst_8 = arith.constant dense<0.000000e+00> : vector<256x8xf32>
    %7 = tpu.matmul %5, %6, %cst_8 {dimension_numbers = #tpu.dot_dimension_numbers<[1], [0], [0], [1], [0, 0, 1, 1], [], []>} : vector<256x32xbf16>, vector<32x8xbf16>, vector<256x8xf32> -> vector<256x8xf32>
    %c0_9 = arith.constant 0 : index
    %c0_10 = arith.constant 0 : index
    %8 = vector.load %arg3[%c0_9, %c0_10] : memref<1x8xf32, #tpu.memory_space<vmem>>, vector<1x8xf32>
    %9 = vector.broadcast %8 : vector<1x8xf32> to vector<256x8xf32>
    %10 = arith.addf %7, %9 : vector<256x8xf32>
    %cst_11 = arith.constant 0.000000e+00 : f32
    %11 = vector.broadcast %cst_11 : f32 to vector<256x8xf32>
    %12 = arith.maximumf %10, %11 : vector<256x8xf32>
    %13 = vector.shape_cast %12 : vector<256x8xf32> to vector<16x16x8xf32>
    %14 = arith.truncf %13 : vector<16x16x8xf32> to vector<16x16x8xbf16>
    %c1 = arith.constant 1 : index
    %c1_12 = arith.constant 1 : index
    %c0_13 = arith.constant 0 : index
    %15 = vector.load %arg13[%c1, %c1_12, %c0_13] : memref<18x24x8xbf16, #tpu.memory_space<vmem>>, vector<16x16x8xbf16>
    tpu.vector_store %arg13[%c1, %c1_12, %c0_13], %14 {strides = array<i32>} : memref<18x24x8xbf16, #tpu.memory_space<vmem>>, vector<16x16x8xbf16>,
    %c0_14 = arith.constant 0 : index
    %c0_15 = arith.constant 0 : index
    %c0_16 = arith.constant 0 : index
    %16 = vector.load %arg13[%c0_14, %c0_15, %c0_16] : memref<18x24x8xbf16, #tpu.memory_space<vmem>>, vector<16x16x8xbf16>
    %17 = vector.shape_cast %16 : vector<16x16x8xbf16> to vector<256x8xbf16>
    %c0_17 = arith.constant 0 : index
    %c1_18 = arith.constant 1 : index
    %c0_19 = arith.constant 0 : index
    %18 = vector.load %arg13[%c0_17, %c1_18, %c0_19] : memref<18x24x8xbf16, #tpu.memory_space<vmem>>, vector<16x16x8xbf16>
    %19 = vector.shape_cast %18 : vector<16x16x8xbf16> to vector<256x8xbf16>
    %c0_20 = arith.constant 0 : index
    %c2 = arith.constant 2 : index
    %c0_21 = arith.constant 0 : index
    %20 = vector.load %arg13[%c0_20, %c2, %c0_21] : memref<18x24x8xbf16, #tpu.memory_space<vmem>>, vector<16x16x8xbf16>
    %21 = vector.shape_cast %20 : vector<16x16x8xbf16> to vector<256x8xbf16>
    %c1_22 = arith.constant 1 : index
    %c0_23 = arith.constant 0 : index
    %c0_24 = arith.constant 0 : index
    %22 = vector.load %arg13[%c1_22, %c0_23, %c0_24] : memref<18x24x8xbf16, #tpu.memory_space<vmem>>, vector<16x16x8xbf16>
    %23 = vector.shape_cast %22 : vector<16x16x8xbf16> to vector<256x8xbf16>
    %c1_25 = arith.constant 1 : index
    %c1_26 = arith.constant 1 : index
    %c0_27 = arith.constant 0 : index
    %24 = vector.load %arg13[%c1_25, %c1_26, %c0_27] : memref<18x24x8xbf16, #tpu.memory_space<vmem>>, vector<16x16x8xbf16>
    %25 = vector.shape_cast %24 : vector<16x16x8xbf16> to vector<256x8xbf16>
    %c1_28 = arith.constant 1 : index
    %c2_29 = arith.constant 2 : index
    %c0_30 = arith.constant 0 : index
    %26 = vector.load %arg13[%c1_28, %c2_29, %c0_30] : memref<18x24x8xbf16, #tpu.memory_space<vmem>>, vector<16x16x8xbf16>
    %27 = vector.shape_cast %26 : vector<16x16x8xbf16> to vector<256x8xbf16>
    %c2_31 = arith.constant 2 : index
    %c0_32 = arith.constant 0 : index
    %c0_33 = arith.constant 0 : index
    %28 = vector.load %arg13[%c2_31, %c0_32, %c0_33] : memref<18x24x8xbf16, #tpu.memory_space<vmem>>, vector<16x16x8xbf16>
    %29 = vector.shape_cast %28 : vector<16x16x8xbf16> to vector<256x8xbf16>
    %c2_34 = arith.constant 2 : index
    %c1_35 = arith.constant 1 : index
    %c0_36 = arith.constant 0 : index
    %30 = vector.load %arg13[%c2_34, %c1_35, %c0_36] : memref<18x24x8xbf16, #tpu.memory_space<vmem>>, vector<16x16x8xbf16>
    %31 = vector.shape_cast %30 : vector<16x16x8xbf16> to vector<256x8xbf16>
    %c2_37 = arith.constant 2 : index
    %c2_38 = arith.constant 2 : index
    %c0_39 = arith.constant 0 : index
    %32 = vector.load %arg13[%c2_37, %c2_38, %c0_39] : memref<18x24x8xbf16, #tpu.memory_space<vmem>>, vector<16x16x8xbf16>
    %33 = vector.shape_cast %32 : vector<16x16x8xbf16> to vector<256x8xbf16>
    %34 = tpu.concatenate %17, %19, %21, %23, %25, %27, %29, %31, %33 in 1 : vector<256x8xbf16>, vector<256x8xbf16>, vector<256x8xbf16>, vector<256x8xbf16>, vector<256x8xbf16>, vector<256x8xbf16>, vector<256x8xbf16>, vector<256x8xbf16>, vector<256x8xbf16> -> vector<256x72xbf16>
    %c0_40 = arith.constant 0 : index
    %c0_41 = arith.constant 0 : index
    %35 = vector.load %arg4[%c0_40, %c0_41] : memref<72x8xbf16, #tpu.memory_space<vmem>>, vector<72x8xbf16>
    %cst_42 = arith.constant dense<0.000000e+00> : vector<256x8xf32>
    %36 = tpu.matmul %34, %35, %cst_42 {dimension_numbers = #tpu.dot_dimension_numbers<[1], [0], [0], [1], [0, 0, 1, 1], [], []>} : vector<256x72xbf16>, vector<72x8xbf16>, vector<256x8xf32> -> vector<256x8xf32>
    %c0_43 = arith.constant 0 : index
    %c0_44 = arith.constant 0 : index
    %37 = vector.load %arg5[%c0_43, %c0_44] : memref<1x8xf32, #tpu.memory_space<vmem>>, vector<1x8xf32>
    %38 = vector.broadcast %37 : vector<1x8xf32> to vector<256x8xf32>
    %39 = arith.addf %36, %38 : vector<256x8xf32>
    %cst_45 = arith.constant 0.000000e+00 : f32
    %40 = vector.broadcast %cst_45 : f32 to vector<256x8xf32>
    %41 = arith.maximumf %39, %40 : vector<256x8xf32>
    %42 = arith.truncf %41 : vector<256x8xf32> to vector<256x8xbf16>
    %c0_46 = arith.constant 0 : index
    %c0_47 = arith.constant 0 : index
    %43 = vector.load %arg6[%c0_46, %c0_47] : memref<8x32xbf16, #tpu.memory_space<vmem>>, vector<8x32xbf16>
    %cst_48 = arith.constant dense<0.000000e+00> : vector<256x32xf32>
    %44 = tpu.matmul %42, %43, %cst_48 {dimension_numbers = #tpu.dot_dimension_numbers<[1], [0], [0], [1], [0, 0, 1, 1], [], []>} : vector<256x8xbf16>, vector<8x32xbf16>, vector<256x32xf32> -> vector<256x32xf32>
    %c0_49 = arith.constant 0 : index
    %c0_50 = arith.constant 0 : index
    %45 = vector.load %arg7[%c0_49, %c0_50] : memref<1x32xf32, #tpu.memory_space<vmem>>, vector<1x32xf32>
    %46 = vector.broadcast %45 : vector<1x32xf32> to vector<256x32xf32>
    %47 = arith.addf %44, %46 : vector<256x32xf32>
    %48 = vector.shape_cast %47 : vector<256x32xf32> to vector<16x16x32xf32>
    %cst_51 = arith.constant dense<0.000000e+00> : vector<16x32xf32>
    %49 = vector.multi_reduction <add>, %48, %cst_51 [1] : vector<16x16x32xf32> to vector<16x32xf32>
    %cst_52 = arith.constant 1.600000e+01 : f32
    %50 = vector.broadcast %cst_52 : f32 to vector<16x32xf32>
    %51 = arith.divf %49, %50 : vector<16x32xf32>
    %cst_53 = arith.constant dense<0.000000e+00> : vector<16x32xf32>
    %52 = vector.multi_reduction <add>, %48, %cst_53 [0] : vector<16x16x32xf32> to vector<16x32xf32>
    %cst_54 = arith.constant 1.600000e+01 : f32
    %53 = vector.broadcast %cst_54 : f32 to vector<16x32xf32>
    %54 = arith.divf %52, %53 : vector<16x32xf32>
    %55 = tpu.concatenate %51, %54 in 0 : vector<16x32xf32>, vector<16x32xf32> -> vector<32x32xf32>
    %c0_55 = arith.constant 0 : index
    %c0_56 = arith.constant 0 : index
    %56 = vector.load %arg8[%c0_55, %c0_56] : memref<32x8xf32, #tpu.memory_space<vmem>>, vector<32x8xf32>
    %cst_57 = arith.constant dense<0.000000e+00> : vector<32x8xf32>
    %57 = tpu.matmul %55, %56, %cst_57 {dimension_numbers = #tpu.dot_dimension_numbers<[1], [0], [0], [1], [0, 0, 1, 1], [], []>} : vector<32x32xf32>, vector<32x8xf32>, vector<32x8xf32> -> vector<32x8xf32>
    %c0_58 = arith.constant 0 : index
    %c0_59 = arith.constant 0 : index
    %58 = vector.load %arg9[%c0_58, %c0_59] : memref<1x8xf32, #tpu.memory_space<vmem>>, vector<1x8xf32>
    %59 = vector.broadcast %58 : vector<1x8xf32> to vector<32x8xf32>
    %60 = arith.addf %57, %59 : vector<32x8xf32>
    %cst_60 = arith.constant 3.000000e+00 : f32
    %61 = vector.broadcast %cst_60 : f32 to vector<32x8xf32>
    %62 = arith.addf %60, %61 : vector<32x8xf32>
    %cst_61 = arith.constant 0.000000e+00 : f32
    %cst_62 = arith.constant 6.000000e+00 : f32
    %63 = vector.broadcast %cst_61 : f32 to vector<32x8xf32>
    %64 = arith.maximumf %63, %62 : vector<32x8xf32>
    %65 = vector.broadcast %cst_62 : f32 to vector<32x8xf32>
    %66 = arith.minimumf %65, %64 : vector<32x8xf32>
    %cst_63 = arith.constant 0.166666672 : f32
    %67 = vector.broadcast %cst_63 : f32 to vector<32x8xf32>
    %68 = arith.mulf %66, %67 : vector<32x8xf32>
    %69 = arith.mulf %60, %68 : vector<32x8xf32>
    %c0_64 = arith.constant 0 : index
    %c0_65 = arith.constant 0 : index
    %70 = vector.load %arg10[%c0_64, %c0_65] : memref<8x64xf32, #tpu.memory_space<vmem>>, vector<8x64xf32>
    %cst_66 = arith.constant dense<0.000000e+00> : vector<32x64xf32>
    %71 = tpu.matmul %69, %70, %cst_66 {dimension_numbers = #tpu.dot_dimension_numbers<[1], [0], [0], [1], [0, 0, 1, 1], [], []>} : vector<32x8xf32>, vector<8x64xf32>, vector<32x64xf32> -> vector<32x64xf32>
    %c0_67 = arith.constant 0 : index
    %c0_68 = arith.constant 0 : index
    %72 = vector.load %arg11[%c0_67, %c0_68] : memref<1x64xf32, #tpu.memory_space<vmem>>, vector<1x64xf32>
    %73 = vector.broadcast %72 : vector<1x64xf32> to vector<32x64xf32>
    %74 = arith.addf %71, %73 : vector<32x64xf32>
    %75 = arith.negf %74 : vector<32x64xf32>
    %76 = math.exp %75 : vector<32x64xf32>
    %cst_69 = arith.constant 1.000000e+00 : f32
    %77 = vector.broadcast %cst_69 : f32 to vector<32x64xf32>
    %78 = arith.addf %77, %76 : vector<32x64xf32>
    %79 = arith.divf %77, %78 : vector<32x64xf32>
    %80 = vector.extract_strided_slice %79 {offsets = [0, 0], sizes = [16, 32], strides = [1, 1]} : vector<32x64xf32> to vector<16x32xf32>
    %81 = vector.extract_strided_slice %79 {offsets = [16, 32], sizes = [16, 32], strides = [1, 1]} : vector<32x64xf32> to vector<16x32xf32>
    %82 = vector.shape_cast %81 : vector<16x32xf32> to vector<1x16x32xf32>
    %83 = vector.broadcast %82 : vector<1x16x32xf32> to vector<16x16x32xf32>
    %84 = arith.mulf %48, %83 : vector<16x16x32xf32>
    %85 = vector.shape_cast %80 : vector<16x32xf32> to vector<16x1x32xf32>
    %86 = vector.broadcast %85 : vector<16x1x32xf32> to vector<16x16x32xf32>
    %87 = arith.mulf %84, %86 : vector<16x16x32xf32>
    %88 = arith.addf %87, %3 : vector<16x16x32xf32>
    %cst_70 = arith.constant 0.000000e+00 : f32
    %89 = vector.broadcast %cst_70 : f32 to vector<16x16x32xf32>
    %90 = arith.maximumf %88, %89 : vector<16x16x32xf32>
    %c0_71 = arith.constant 0 : index
    %c0_72 = arith.constant 0 : index
    %c0_73 = arith.constant 0 : index
    %c0_74 = arith.constant 0 : index
    %91 = vector.load %arg12[%c0_71, %c0_72, %c0_73, %c0_74] : memref<1x16x16x32xf32, #tpu.memory_space<vmem>>, vector<1x16x16x32xf32>
    %92 = vector.shape_cast %91 : vector<1x16x16x32xf32> to vector<16x16x32xf32>
    %93 = vector.shape_cast %90 : vector<16x16x32xf32> to vector<1x16x16x32xf32>
    tpu.vector_store %arg12[%c0_71, %c0_72, %c0_73, %c0_74], %93 {strides = array<i32>} : memref<1x16x16x32xf32, #tpu.memory_space<vmem>>, vector<1x16x16x32xf32>,
    return
  }
  func.func @transform_0(%arg0: i32) -> (i32, i32, i32, i32) {
    %c0_i32 = arith.constant 0 : i32
    %c0_i32_0 = arith.constant 0 : i32
    %c0_i32_1 = arith.constant 0 : i32
    %c0_i32_2 = arith.constant 0 : i32
    return %arg0, %c0_i32, %c0_i32_0, %c0_i32_1 : i32, i32, i32, i32
  }
  func.func @transform_1(%arg0: i32) -> (i32, i32) {
    %c0_i32 = arith.constant 0 : i32
    %c0_i32_0 = arith.constant 0 : i32
    %c0_i32_1 = arith.constant 0 : i32
    return %c0_i32, %c0_i32_0 : i32, i32
  }
  func.func @transform_2(%arg0: i32) -> (i32, i32) {
    %c0_i32 = arith.constant 0 : i32
    %c0_i32_0 = arith.constant 0 : i32
    %c0_i32_1 = arith.constant 0 : i32
    return %c0_i32, %c0_i32_0 : i32, i32
  }
  func.func @transform_3(%arg0: i32) -> (i32, i32) {
    %c0_i32 = arith.constant 0 : i32
    %c0_i32_0 = arith.constant 0 : i32
    %c0_i32_1 = arith.constant 0 : i32
    return %c0_i32, %c0_i32_0 : i32, i32
  }
  func.func @transform_4(%arg0: i32) -> (i32, i32) {
    %c0_i32 = arith.constant 0 : i32
    %c0_i32_0 = arith.constant 0 : i32
    %c0_i32_1 = arith.constant 0 : i32
    return %c0_i32, %c0_i32_0 : i32, i32
  }
  func.func @transform_5(%arg0: i32) -> (i32, i32) {
    %c0_i32 = arith.constant 0 : i32
    %c0_i32_0 = arith.constant 0 : i32
    %c0_i32_1 = arith.constant 0 : i32
    return %c0_i32, %c0_i32_0 : i32, i32
  }
  func.func @transform_6(%arg0: i32) -> (i32, i32) {
    %c0_i32 = arith.constant 0 : i32
    %c0_i32_0 = arith.constant 0 : i32
    %c0_i32_1 = arith.constant 0 : i32
    return %c0_i32, %c0_i32_0 : i32, i32
  }
  func.func @transform_7(%arg0: i32) -> (i32, i32) {
    %c0_i32 = arith.constant 0 : i32
    %c0_i32_0 = arith.constant 0 : i32
    %c0_i32_1 = arith.constant 0 : i32
    return %c0_i32, %c0_i32_0 : i32, i32
  }
  func.func @transform_8(%arg0: i32) -> (i32, i32) {
    %c0_i32 = arith.constant 0 : i32
    %c0_i32_0 = arith.constant 0 : i32
    %c0_i32_1 = arith.constant 0 : i32
    return %c0_i32, %c0_i32_0 : i32, i32
  }
  func.func @transform_9(%arg0: i32) -> (i32, i32) {
    %c0_i32 = arith.constant 0 : i32
    %c0_i32_0 = arith.constant 0 : i32
    %c0_i32_1 = arith.constant 0 : i32
    return %c0_i32, %c0_i32_0 : i32, i32
  }
  func.func @transform_10(%arg0: i32) -> (i32, i32) {
    %c0_i32 = arith.constant 0 : i32
    %c0_i32_0 = arith.constant 0 : i32
    %c0_i32_1 = arith.constant 0 : i32
    return %c0_i32, %c0_i32_0 : i32, i32
  }
  func.func @transform_11(%arg0: i32) -> (i32, i32, i32, i32) {
    %c0_i32 = arith.constant 0 : i32
    %c0_i32_0 = arith.constant 0 : i32
    %c0_i32_1 = arith.constant 0 : i32
    %c0_i32_2 = arith.constant 0 : i32
    return %arg0, %c0_i32, %c0_i32_0, %c0_i32_1 : i32, i32, i32, i32
  }
}

</mosaic_0001>

<llo_original>
// kernel: bottleneck_forward.1
$region0: #{bottleneck_forward.1}
  #allocation0 [shape = 'u32[]', space=smem, size = 0x4, offset = 0x4, fixed_abs, tag = 'smem constant byte address 0x4 - core index']
  #allocation1 [shape = 'u32[72,128]{1,0:T(1,128)}', space=vmem, size = 0x9000, scoped, tag = 'internal scratch']
  #allocation2 [shape = 'bf16[18,24,8]{2,1,0:T(8,128)(2,1)}', space=vmem, size = 0x1b000, scoped, tag = 'scratch operand']
  %s0 = inlined_call_operand.hbm [shape: f32[2,16,16,32], index: 0, kind: input, shape index: {}]
  %s1 = inlined_call_operand.vmem [shape: bf16[32,8], index: 1, kind: input, shape index: {}]
  %s2 = inlined_call_operand.vmem [shape: f32[1,8], index: 2, kind: input, shape index: {}]
  %s3 = inlined_call_operand.vmem [shape: bf16[72,8], index: 3, kind: input, shape index: {}]
  %s4 = inlined_call_operand.vmem [shape: f32[1,8], index: 4, kind: input, shape index: {}]
  %s5 = inlined_call_operand.vmem [shape: bf16[8,32], index: 5, kind: input, shape index: {}]
  %s6 = inlined_call_operand.vmem [shape: f32[1,32], index: 6, kind: input, shape index: {}]
  %s7 = inlined_call_operand.vmem [shape: f32[32,8], index: 7, kind: input, shape index: {}]
  %s8 = inlined_call_operand.vmem [shape: f32[1,8], index: 8, kind: input, shape index: {}]
  %s9 = inlined_call_operand.vmem [shape: f32[8,64], index: 9, kind: input, shape index: {}]
  %s10 = inlined_call_operand.vmem [shape: f32[1,64], index: 10, kind: input, shape index: {}]
  %s11 = inlined_call_operand.hbm [shape: f32[2,16,16,32], index: 11, kind: output, shape index: {}]
  %s12 = sld [smem:[#allocation0]]
  $region81: #{bottleneck_forward.1} parent=0
    _
  %s14 = ssub.s32 1, %s12
  %s15 = scalar_select 0, %s14, %s12
  $region1: #{bottleneck_forward.1} parent=0
    #allocation3 [shape = 'u8[262144]{0}', space=vmem, size = 0x40000, scoped, tag = 'input window, operand 0']
    #allocation4 [shape = 's32[2]{0}', space=sflag, size = 0x8, scoped, tag = 'scoped memory for bottleneck_forward.1']
    #allocation5 [shape = 's32[2]{0}', space=sflag, size = 0x8, scoped, tag = 'scoped memory for bottleneck_forward.1']
    #allocation6 [shape = 'u8[262144]{0}', space=vmem, size = 0x40000, scoped, tag = 'output window, operand 0']
    %16 = vsyncpa [#allocation4], 0
    %s17 = scalar_lea.sflag [#allocation4], 1
    %18 = vsyncpa %s17, 0
    %19 = vsyncpa [#allocation5], 0
    %s20 = scalar_lea.sflag [#allocation5], 1
    %21 = vsyncpa %s20, 0
    loop: start=0, step=1, limit=4
    $region2: #{bottleneck_forward.1} parent=1 // loop_pre_header
      _
    $region3: #{bottleneck_forward.1} parent=1 // loop_header
      %s23 = sphi 0, %s27
      %p24 = scmp.ge.s32.totalorder %s23, 4
      %s33 = sphi 0, %s35
      %s36 = sphi 0, %s33
      %s37 = sphi 0, %s36
      %s53 = sphi 0, %s37
      %s57 = sphi 0, %s57
      %s59 = sphi 0, %s57
      %s60 = sphi 0, %s59
      %s74 = sphi 0, %s60
      %s78 = sphi 0, %s78
      %s80 = sphi 0, %s78
      %s81 = sphi 0, %s80
      %s95 = sphi 0, %s81
      %s99 = sphi 0, %s99
      %s101 = sphi 0, %s99
      %s102 = sphi 0, %s101
      %s116 = sphi 0, %s102
      %s120 = sphi 0, %s120
      %s122 = sphi 0, %s120
      %s123 = sphi 0, %s122
      %s137 = sphi 0, %s123
      %s141 = sphi 0, %s141
      %s143 = sphi 0, %s141
      %s144 = sphi 0, %s143
      %s158 = sphi 0, %s144
      %s162 = sphi 0, %s162
      %s164 = sphi 0, %s162
      %s165 = sphi 0, %s164
      %s179 = sphi 0, %s165
      %s183 = sphi 0, %s183
      %s185 = sphi 0, %s183
      %s186 = sphi 0, %s185
      %s200 = sphi 0, %s186
      %s204 = sphi 0, %s204
      %s206 = sphi 0, %s204
      %s207 = sphi 0, %s206
      %s221 = sphi 0, %s207
      %s225 = sphi 0, %s225
      %s227 = sphi 0, %s225
      %s228 = sphi 0, %s227
      %s242 = sphi 0, %s228
      %s246 = sphi 0, %s246
      %s248 = sphi 0, %s246
      %s249 = sphi 0, %s248
      %s263 = sphi 0, %s249
      %s269 = sphi 0, %s271
      %s272 = sphi 0, %s269
      %s273 = sphi 0, %s272
      %s289 = sphi 0, %s273
    $region4: #{bottleneck_forward.1} parent=1 // loop_header_branch
      %26 = sbr.rel (%p24) target = $region8
    $region5: #{bottleneck_forward.1} parent=1 // loop_body
      %s28 = ssub.s32 %s23, 1
      %s29 = ssub.s32 %s23, 2
      %s30 = sadd.s32 %s23, 1
      %s31 = ssub.s32 %s23, %s30
      %p32 = scmp.eq.s32.totalorder %s31, 0
      %s34 = sadd.s32 %s33, 1
      %s35 = scalar_select %p32, %s33, %s34
      %p38 = pneg %p32
      %p39 = scmp.eq.s32.totalorder %s23, 1
      %p40 = por %p38, %p39
      %p41 = scmp.ne.s32.totalorder %s33, %s36
      %p42 = scmp.eq.s32.totalorder %s23, 0
      %p43 = por %p41, %p42
      %p44 = scmp.ne.s32.totalorder %s33, %s36
      %p45 = scmp.eq.s32.totalorder %s28, 1
      %p46 = por %p44, %p45
      %p47 = scmp.ne.s32.totalorder %s36, %s37
      %p48 = scmp.eq.s32.totalorder %s28, 0
      %p49 = por %p47, %p48
      %p50 = scmp.ne.s32.totalorder %s36, %s37
      %p51 = scmp.eq.s32.totalorder %s29, 1
      %p52 = por %p50, %p51
      %p54 = scmp.ne.s32.totalorder %s37, %s53
      %p55 = scmp.eq.s32.totalorder %s29, 0
      %p56 = por %p54, %p55
      %s58 = sadd.s32 %s57, 1
      %p61 = scmp.eq.s32.totalorder %s23, 1
      %p62 = scmp.ne.s32.totalorder %s57, %s59
      %p63 = scmp.eq.s32.totalorder %s23, 0
      %p64 = por %p62, %p63
      %p65 = scmp.ne.s32.totalorder %s57, %s59
      %p66 = scmp.eq.s32.totalorder %s28, 1
      %p67 = por %p65, %p66
      %p68 = scmp.ne.s32.totalorder %s59, %s60
      %p69 = scmp.eq.s32.totalorder %s28, 0
      %p70 = por %p68, %p69
      %p71 = scmp.ne.s32.totalorder %s59, %s60
      %p72 = scmp.eq.s32.totalorder %s29, 1
      %p73 = por %p71, %p72
      %p75 = scmp.ne.s32.totalorder %s60, %s74
      %p76 = scmp.eq.s32.totalorder %s29, 0
      %p77 = por %p75, %p76
      %s79 = sadd.s32 %s78, 1
      %p82 = scmp.eq.s32.totalorder %s23, 1
      %p83 = scmp.ne.s32.totalorder %s78, %s80
      %p84 = scmp.eq.s32.totalorder %s23, 0
      %p85 = por %p83, %p84
      %p86 = scmp.ne.s32.totalorder %s78, %s80
      %p87 = scmp.eq.s32.totalorder %s28, 1
      %p88 = por %p86, %p87
      %p89 = scmp.ne.s32.totalorder %s80, %s81
      %p90 = scmp.eq.s32.totalorder %s28, 0
      %p91 = por %p89, %p90
      %p92 = scmp.ne.s32.totalorder %s80, %s81
      %p93 = scmp.eq.s32.totalorder %s29, 1
      %p94 = por %p92, %p93
      %p96 = scmp.ne.s32.totalorder %s81, %s95
      %p97 = scmp.eq.s32.totalorder %s29, 0
      %p98 = por %p96, %p97
      %s100 = sadd.s32 %s99, 1
      %p103 = scmp.eq.s32.totalorder %s23, 1
      %p104 = scmp.ne.s32.totalorder %s99, %s101
      %p105 = scmp.eq.s32.totalorder %s23, 0
      %p106 = por %p104, %p105
      %p107 = scmp.ne.s32.totalorder %s99, %s101
      %p108 = scmp.eq.s32.totalorder %s28, 1
      %p109 = por %p107, %p108
      %p110 = scmp.ne.s32.totalorder %s101, %s102
      %p111 = scmp.eq.s32.totalorder %s28, 0
      %p112 = por %p110, %p111
      %p113 = scmp.ne.s32.totalorder %s101, %s102
      %p114 = scmp.eq.s32.totalorder %s29, 1
      %p115 = por %p113, %p114
      %p117 = scmp.ne.s32.totalorder %s102, %s116
      %p118 = scmp.eq.s32.totalorder %s29, 0
      %p119 = por %p117, %p118
      %s121 = sadd.s32 %s120, 1
      %p124 = scmp.eq.s32.totalorder %s23, 1
      %p125 = scmp.ne.s32.totalorder %s120, %s122
      %p126 = scmp.eq.s32.totalorder %s23, 0
      %p127 = por %p125, %p126
      %p128 = scmp.ne.s32.totalorder %s120, %s122
      %p129 = scmp.eq.s32.totalorder %s28, 1
      %p130 = por %p128, %p129
      %p131 = scmp.ne.s32.totalorder %s122, %s123
      %p132 = scmp.eq.s32.totalorder %s28, 0
      %p133 = por %p131, %p132
      %p134 = scmp.ne.s32.totalorder %s122, %s123
      %p135 = scmp.eq.s32.totalorder %s29, 1
      %p136 = por %p134, %p135
      %p138 = scmp.ne.s32.totalorder %s123, %s137
      %p139 = scmp.eq.s32.totalorder %s29, 0
      %p140 = por %p138, %p139
      %s142 = sadd.s32 %s141, 1
      %p145 = scmp.eq.s32.totalorder %s23, 1
      %p146 = scmp.ne.s32.totalorder %s141, %s143
      %p147 = scmp.eq.s32.totalorder %s23, 0
      %p148 = por %p146, %p147
      %p149 = scmp.ne.s32.totalorder %s141, %s143
      %p150 = scmp.eq.s32.totalorder %s28, 1
      %p151 = por %p149, %p150
      %p152 = scmp.ne.s32.totalorder %s143, %s144
      %p153 = scmp.eq.s32.totalorder %s28, 0
      %p154 = por %p152, %p153
      %p155 = scmp.ne.s32.totalorder %s143, %s144
      %p156 = scmp.eq.s32.totalorder %s29, 1
      %p157 = por %p155, %p156
      %p159 = scmp.ne.s32.totalorder %s144, %s158
      %p160 = scmp.eq.s32.totalorder %s29, 0
      %p161 = por %p159, %p160
      %s163 = sadd.s32 %s162, 1
      %p166 = scmp.eq.s32.totalorder %s23, 1
      %p167 = scmp.ne.s32.totalorder %s162, %s164
      %p168 = scmp.eq.s32.totalorder %s23, 0
      %p169 = por %p167, %p168
      %p170 = scmp.ne.s32.totalorder %s162, %s164
      %p171 = scmp.eq.s32.totalorder %s28, 1
      %p172 = por %p170, %p171
      %p173 = scmp.ne.s32.totalorder %s164, %s165
      %p174 = scmp.eq.s32.totalorder %s28, 0
      %p175 = por %p173, %p174
      %p176 = scmp.ne.s32.totalorder %s164, %s165
      %p177 = scmp.eq.s32.totalorder %s29, 1
      %p178 = por %p176, %p177
      %p180 = scmp.ne.s32.totalorder %s165, %s179
      %p181 = scmp.eq.s32.totalorder %s29, 0
      %p182 = por %p180, %p181
      %s184 = sadd.s32 %s183, 1
      %p187 = scmp.eq.s32.totalorder %s23, 1
      %p188 = scmp.ne.s32.totalorder %s183, %s185
      %p189 = scmp.eq.s32.totalorder %s23, 0
      %p190 = por %p188, %p189
      %p191 = scmp.ne.s32.totalorder %s183, %s185
      %p192 = scmp.eq.s32.totalorder %s28, 1
      %p193 = por %p191, %p192
      %p194 = scmp.ne.s32.totalorder %s185, %s186
      %p195 = scmp.eq.s32.totalorder %s28, 0
      %p196 = por %p194, %p195
      %p197 = scmp.ne.s32.totalorder %s185, %s186
      %p198 = scmp.eq.s32.totalorder %s29, 1
      %p199 = por %p197, %p198
      %p201 = scmp.ne.s32.totalorder %s186, %s200
      %p202 = scmp.eq.s32.totalorder %s29, 0
      %p203 = por %p201, %p202
      %s205 = sadd.s32 %s204, 1
      %p208 = scmp.eq.s32.totalorder %s23, 1
      %p209 = scmp.ne.s32.totalorder %s204, %s206
      %p210 = scmp.eq.s32.totalorder %s23, 0
      %p211 = por %p209, %p210
      %p212 = scmp.ne.s32.totalorder %s204, %s206
      %p213 = scmp.eq.s32.totalorder %s28, 1
      %p214 = por %p212, %p213
      %p215 = scmp.ne.s32.totalorder %s206, %s207
      %p216 = scmp.eq.s32.totalorder %s28, 0
      %p217 = por %p215, %p216
      %p218 = scmp.ne.s32.totalorder %s206, %s207
      %p219 = scmp.eq.s32.totalorder %s29, 1
      %p220 = por %p218, %p219
      %p222 = scmp.ne.s32.totalorder %s207, %s221
      %p223 = scmp.eq.s32.totalorder %s29, 0
      %p224 = por %p222, %p223
      %s226 = sadd.s32 %s225, 1
      %p229 = scmp.eq.s32.totalorder %s23, 1
      %p230 = scmp.ne.s32.totalorder %s225, %s227
      %p231 = scmp.eq.s32.totalorder %s23, 0
      %p232 = por %p230, %p231
      %p233 = scmp.ne.s32.totalorder %s225, %s227
      %p234 = scmp.eq.s32.totalorder %s28, 1
      %p235 = por %p233, %p234
      %p236 = scmp.ne.s32.totalorder %s227, %s228
      %p237 = scmp.eq.s32.totalorder %s28, 0
      %p238 = por %p236, %p237
      %p239 = scmp.ne.s32.totalorder %s227, %s228
      %p240 = scmp.eq.s32.totalorder %s29, 1
      %p241 = por %p239, %p240
      %p243 = scmp.ne.s32.totalorder %s228, %s242
      %p244 = scmp.eq.s32.totalorder %s29, 0
      %p245 = por %p243, %p244
      %s247 = sadd.s32 %s246, 1
      %p250 = scmp.eq.s32.totalorder %s23, 1
      %p251 = scmp.ne.s32.totalorder %s246, %s248
      %p252 = scmp.eq.s32.totalorder %s23, 0
      %p253 = por %p251, %p252
      %p254 = scmp.ne.s32.totalorder %s246, %s248
      %p255 = scmp.eq.s32.totalorder %s28, 1
      %p256 = por %p254, %p255
      %p257 = scmp.ne.s32.totalorder %s248, %s249
      %p258 = scmp.eq.s32.totalorder %s28, 0
      %p259 = por %p257, %p258
      %p260 = scmp.ne.s32.totalorder %s248, %s249
      %p261 = scmp.eq.s32.totalorder %s29, 1
      %p262 = por %p260, %p261
      %p264 = scmp.ne.s32.totalorder %s249, %s263
      %p265 = scmp.eq.s32.totalorder %s29, 0
      %p266 = por %p264, %p265
      %s267 = ssub.s32 %s23, %s30
      %p268 = scmp.eq.s32.totalorder %s267, 0
      %s270 = sadd.s32 %s269, 1
      %s271 = scalar_select %p268, %s269, %s270
      %p274 = pneg %p268
      %p275 = scmp.eq.s32.totalorder %s23, 1
      %p276 = por %p274, %p275
      %p277 = scmp.ne.s32.totalorder %s269, %s272
      %p278 = scmp.eq.s32.totalorder %s23, 0
      %p279 = por %p277, %p278
      %p280 = scmp.ne.s32.totalorder %s269, %s272
      %p281 = scmp.eq.s32.totalorder %s28, 1
      %p282 = por %p280, %p281
      %p283 = scmp.ne.s32.totalorder %s272, %s273
      %p284 = scmp.eq.s32.totalorder %s28, 0
      %p285 = por %p283, %p284
      %p286 = scmp.ne.s32.totalorder %s272, %s273
      %p287 = scmp.eq.s32.totalorder %s29, 1
      %p288 = por %p286, %p287
      %p290 = scmp.ne.s32.totalorder %s273, %s289
      %p291 = scmp.eq.s32.totalorder %s29, 0
      %p292 = por %p290, %p291
      %p293 = scmp.le.s32.totalorder 1, %s23
      %p294 = scmp.lt.s32.totalorder %s23, 3
      %p295 = pnand %p293, %p294
      %p296 = pneg %p295
      // Predicated region
      $region9: #{bottleneck_forward.1} parent=5 // pred_check
        _
      $region10: #{bottleneck_forward.1} parent=5 // pred_check_branch
        %298 = sbr.rel (%p295) target = $region12
      $region11: #{bottleneck_forward.1} parent=5 // pred_region
        %s299 = ssub.s32 %s23, 1
        // Predicated region
        $region13: #{bottleneck_forward.1} parent=11 // pred_check
          %p300 = pneg %p70
        $region14: #{bottleneck_forward.1} parent=11 // pred_check_branch
          %302 = sbr.rel (%p300) target = $region16
        $region15: #{bottleneck_forward.1} parent=11 // pred_region
          _
        $region16: #{bottleneck_forward.1} parent=11 // pred_fallthru
          _
        // Predicated region
        $region17: #{bottleneck_forward.1} parent=11 // pred_check
          %p303 = pneg %p91
        $region18: #{bottleneck_forward.1} parent=11 // pred_check_branch
          %305 = sbr.rel (%p303) target = $region20
        $region19: #{bottleneck_forward.1} parent=11 // pred_region
          _
        $region20: #{bottleneck_forward.1} parent=11 // pred_fallthru
          _
        // Predicated region
        $region21: #{bottleneck_forward.1} parent=11 // pred_check
          %p306 = pneg %p112
        $region22: #{bottleneck_forward.1} parent=11 // pred_check_branch
          %308 = sbr.rel (%p306) target = $region24
        $region23: #{bottleneck_forward.1} parent=11 // pred_region
          _
        $region24: #{bottleneck_forward.1} parent=11 // pred_fallthru
          _
        // Predicated region
        $region25: #{bottleneck_forward.1} parent=11 // pred_check
          %p309 = pneg %p133
        $region26: #{bottleneck_forward.1} parent=11 // pred_check_branch
          %311 = sbr.rel (%p309) target = $region28
        $region27: #{bottleneck_forward.1} parent=11 // pred_region
          _
        $region28: #{bottleneck_forward.1} parent=11 // pred_fallthru
          _
        // Predicated region
        $region29: #{bottleneck_forward.1} parent=11 // pred_check
          %p312 = pneg %p154
        $region30: #{bottleneck_forward.1} parent=11 // pred_check_branch
          %314 = sbr.rel (%p312) target = $region32
        $region31: #{bottleneck_forward.1} parent=11 // pred_region
          _
        $region32: #{bottleneck_forward.1} parent=11 // pred_fallthru
          _
        // Predicated region
        $region33: #{bottleneck_forward.1} parent=11 // pred_check
          %p315 = pneg %p175
        $region34: #{bottleneck_forward.1} parent=11 // pred_check_branch
          %317 = sbr.rel (%p315) target = $region36
        $region35: #{bottleneck_forward.1} parent=11 // pred_region
          _
        $region36: #{bottleneck_forward.1} parent=11 // pred_fallthru
          _
        // Predicated region
        $region37: #{bottleneck_forward.1} parent=11 // pred_check
          %p318 = pneg %p196
        $region38: #{bottleneck_forward.1} parent=11 // pred_check_branch
          %320 = sbr.rel (%p318) target = $region40
        $region39: #{bottleneck_forward.1} parent=11 // pred_region
          _
        $region40: #{bottleneck_forward.1} parent=11 // pred_fallthru
          _
        // Predicated region
        $region41: #{bottleneck_forward.1} parent=11 // pred_check
          %p321 = pneg %p217
        $region42: #{bottleneck_forward.1} parent=11 // pred_check_branch
          %323 = sbr.rel (%p321) target = $region44
        $region43: #{bottleneck_forward.1} parent=11 // pred_region
          _
        $region44: #{bottleneck_forward.1} parent=11 // pred_fallthru
          _
        // Predicated region
        $region45: #{bottleneck_forward.1} parent=11 // pred_check
          %p324 = pneg %p238
        $region46: #{bottleneck_forward.1} parent=11 // pred_check_branch
          %326 = sbr.rel (%p324) target = $region48
        $region47: #{bottleneck_forward.1} parent=11 // pred_region
          _
        $region48: #{bottleneck_forward.1} parent=11 // pred_fallthru
          _
        // Predicated region
        $region49: #{bottleneck_forward.1} parent=11 // pred_check
          %p327 = pneg %p259
        $region50: #{bottleneck_forward.1} parent=11 // pred_check_branch
          %329 = sbr.rel (%p327) target = $region52
        $region51: #{bottleneck_forward.1} parent=11 // pred_region
          _
        $region52: #{bottleneck_forward.1} parent=11 // pred_fallthru
          _
      $region12: #{bottleneck_forward.1} parent=5 // pred_fallthru
        _
      %p330 = scmp.lt.s32.totalorder %s23, 2
      // Predicated region
      $region53: #{bottleneck_forward.1} parent=5 // pred_check
        %p331 = pneg %p330
      $region54: #{bottleneck_forward.1} parent=5 // pred_check_branch
        %333 = sbr.rel (%p331) target = $region56
      $region55: #{bottleneck_forward.1} parent=5 // pred_region
        // Predicated region
        $region57: #{bottleneck_forward.1} parent=55 // pred_check
          %p334 = pneg %p43
        $region58: #{bottleneck_forward.1} parent=55 // pred_check_branch
          %336 = sbr.rel (%p334) target = $region60
        $region59: #{bottleneck_forward.1} parent=55 // pred_region
          %s337 = sand.u32 %s33, 1
          %s338 = scalar_lea.sflag [#allocation4], %s337
          %s339 = sand.u32 %s33, 1
          %s340 = smul.addr %s339, 256
          %s341 = scalar_lea.vmem [#allocation3], %s340
          %343 = vsyncadd %s338, 0
          %s344 = smul.addr %s23, 32
          %s345 = smul.addr %s344, 8
          %s346 = scalar_lea.hbm %s0, %s345
          %s347 = sshll.u32 %s346, 4
          %s348 = int_to_ptr.hbm [resolvable:$true] %s347
          %s349 = sshll.u32 %s341, 4
          %s350 = int_to_ptr.vmem [resolvable:$true] %s349
          %355 = dma.hbm_to_vmem [thread:$0]  %s348, 4096, %s350, %s338, 128, 128, 8
        $region60: #{bottleneck_forward.1} parent=55 // pred_fallthru
          _
      $region56: #{bottleneck_forward.1} parent=5 // pred_fallthru
        _
      %p356 = scmp.le.s32.totalorder 1, %s23
      %p357 = scmp.lt.s32.totalorder %s23, 3
      %p358 = pnand %p356, %p357
      %p359 = pneg %p358
      // Predicated region
      $region61: #{bottleneck_forward.1} parent=5 // pred_check
        _
      $region62: #{bottleneck_forward.1} parent=5 // pred_check_branch
        %361 = sbr.rel (%p358) target = $region64
      $region63: #{bottleneck_forward.1} parent=5 // pred_region
        %s362 = ssub.s32 %s23, 1
        %s363 = sand.u32 %s36, 1
        %s364 = scalar_lea.sflag [#allocation4], %s363
        %s365 = sand.u32 %s36, 1
        %s366 = smul.addr %s365, 256
        %s367 = scalar_lea.vmem [#allocation3], %s366
        // Predicated region
        $region65: #{bottleneck_forward.1} parent=63 // pred_check
          %p368 = pneg %p49
        $region66: #{bottleneck_forward.1} parent=63 // pred_check_branch
          %370 = sbr.rel (%p368) target = $region68
        $region67: #{bottleneck_forward.1} parent=63 // pred_region
          %372 = dma.done %s364, 4096
        $region68: #{bottleneck_forward.1} parent=63 // pred_fallthru
          _
        %s373 = sand.u32 %s36, 1
        %s374 = scalar_lea.sflag [#allocation4], %s373
        %s375 = sand.u32 %s36, 1
        %s376 = smul.addr %s375, 256
        %s377 = scalar_lea.vmem [#allocation3], %s376
        %p378 = pneg %p49
        %p379 = pneg %p46
        %p380 = pneg %p70
        %p381 = pneg %p67
        %p382 = pneg %p91
        %p383 = pneg %p88
        %p384 = pneg %p112
        %p385 = pneg %p109
        %p386 = pneg %p133
        %p387 = pneg %p130
        %p388 = pneg %p154
        %p389 = pneg %p151
        %p390 = pneg %p175
        %p391 = pneg %p172
        %p392 = pneg %p196
        %p393 = pneg %p193
        %p394 = pneg %p217
        %p395 = pneg %p214
        %p396 = pneg %p238
        %p397 = pneg %p235
        %p398 = pneg %p259
        %p399 = pneg %p256
        %p400 = pneg %p285
        %p401 = pneg %p282
        %s402 = sand.u32 %s272, 1
        %s403 = scalar_lea.sflag [#allocation5], %s402
        %s404 = sand.u32 %s272, 1
        %s405 = smul.addr %s404, 256
        %s406 = scalar_lea.vmem [#allocation6], %s405
        %vm408 = vcmask 60416
        %409 = vst.msk [vmem:[#allocation2] sm:$0xf] %vm408, 0
        %410 = vst.msk [vmem:[#allocation2 + $0x4] sm:$0xf] %vm408, 0
        %411 = vst.msk [vmem:[#allocation2 + $0x8] sm:$0xf] %vm408, 0
        %412 = vst.msk [vmem:[#allocation2 + $0xc] sm:$0xf] %vm408, 0
        %413 = vst.msk [vmem:[#allocation2 + $0x10] sm:$0xf] %vm408, 0
        %414 = vst.msk [vmem:[#allocation2 + $0x14] sm:$0xf] %vm408, 0
        %415 = vst.msk [vmem:[#allocation2 + $0x18] sm:$0xf] %vm408, 0
        %416 = vst.msk [vmem:[#allocation2 + $0x1c] sm:$0xf] %vm408, 0
        %417 = vst.msk [vmem:[#allocation2 + $0x20] sm:$0xf] %vm408, 0
        %418 = vst.msk [vmem:[#allocation2 + $0x24] sm:$0xf] %vm408, 0
        %419 = vst.msk [vmem:[#allocation2 + $0x28] sm:$0xf] %vm408, 0
        %420 = vst.msk [vmem:[#allocation2 + $0x2c] sm:$0xf] %vm408, 0
        %421 = vst.msk [vmem:[#allocation2 + $0x30] sm:$0xf] %vm408, 0
        %422 = vst.msk [vmem:[#allocation2 + $0x34] sm:$0xf] %vm408, 0
        %423 = vst.msk [vmem:[#allocation2 + $0x38] sm:$0xf] %vm408, 0
        %424 = vst.msk [vmem:[#allocation2 + $0x3c] sm:$0xf] %vm408, 0
        %425 = vst.msk [vmem:[#allocation2 + $0x40] sm:$0xf] %vm408, 0
        %426 = vst.msk [vmem:[#allocation2 + $0x44] sm:$0xf] %vm408, 0
        %427 = vst.msk [vmem:[#allocation2 + $0x48] sm:$0xf] %vm408, 0
        %428 = vst.msk [vmem:[#allocation2 + $0x4c] sm:$0xf] %vm408, 0
        %429 = vst.msk [vmem:[#allocation2 + $0x50] sm:$0xf] %vm408, 0
        %430 = vst.msk [vmem:[#allocation2 + $0x54] sm:$0xf] %vm408, 0
        %431 = vst.msk [vmem:[#allocation2 + $0x58] sm:$0xf] %vm408, 0
        %432 = vst.msk [vmem:[#allocation2 + $0x5c] sm:$0xf] %vm408, 0
        %433 = vst.msk [vmem:[#allocation2 + $0x60] sm:$0xf] %vm408, 0
        %434 = vst.msk [vmem:[#allocation2 + $0x64] sm:$0xf] %vm408, 0
        %435 = vst.msk [vmem:[#allocation2 + $0x68] sm:$0xf] %vm408, 0
        %436 = vst.msk [vmem:[#allocation2 + $0x6c] sm:$0xf] %vm408, 0
        %437 = vst.msk [vmem:[#allocation2 + $0x70] sm:$0xf] %vm408, 0
        %438 = vst.msk [vmem:[#allocation2 + $0x74] sm:$0xf] %vm408, 0
        %439 = vst.msk [vmem:[#allocation2 + $0x78] sm:$0xf] %vm408, 0
        %440 = vst.msk [vmem:[#allocation2 + $0x7c] sm:$0xf] %vm408, 0
        %441 = vst.msk [vmem:[#allocation2 + $0x80] sm:$0xf] %vm408, 0
        %442 = vst.msk [vmem:[#allocation2 + $0x84] sm:$0xf] %vm408, 0
        %443 = vst.msk [vmem:[#allocation2 + $0x88] sm:$0xf] %vm408, 0
        %444 = vst.msk [vmem:[#allocation2 + $0x8c] sm:$0xf] %vm408, 0
        %445 = vst.msk [vmem:[#allocation2 + $0x90] sm:$0xf] %vm408, 0
        %446 = vst.msk [vmem:[#allocation2 + $0x94] sm:$0xf] %vm408, 0
        %447 = vst.msk [vmem:[#allocation2 + $0x98] sm:$0xf] %vm408, 0
        %448 = vst.msk [vmem:[#allocation2 + $0x9c] sm:$0xf] %vm408, 0
        %449 = vst.msk [vmem:[#allocation2 + $0xa0] sm:$0xf] %vm408, 0
        %450 = vst.msk [vmem:[#allocation2 + $0xa4] sm:$0xf] %vm408, 0
        %451 = vst.msk [vmem:[#allocation2 + $0xa8] sm:$0xf] %vm408, 0
        %452 = vst.msk [vmem:[#allocation2 + $0xac] sm:$0xf] %vm408, 0
        %453 = vst.msk [vmem:[#allocation2 + $0xb0] sm:$0xf] %vm408, 0
        %454 = vst.msk [vmem:[#allocation2 + $0xb4] sm:$0xf] %vm408, 0
        %455 = vst.msk [vmem:[#allocation2 + $0xb8] sm:$0xf] %vm408, 0
        %456 = vst.msk [vmem:[#allocation2 + $0xbc] sm:$0xf] %vm408, 0
        %457 = vst.msk [vmem:[#allocation2 + $0xc0] sm:$0xf] %vm408, 0
        %458 = vst.msk [vmem:[#allocation2 + $0xc4] sm:$0xf] %vm408, 0
        %459 = vst.msk [vmem:[#allocation2 + $0xc8] sm:$0xf] %vm408, 0
        %460 = vst.msk [vmem:[#allocation2 + $0xcc] sm:$0xf] %vm408, 0
        %461 = vst.msk [vmem:[#allocation2 + $0xd0] sm:$0xf] %vm408, 0
        %462 = vst.msk [vmem:[#allocation2 + $0xd4] sm:$0xf] %vm408, 0
        %v463 = vld [vmem:[%s367] sm:$0xff]
        %v464 = vld [vmem:[%s367 + $0x8] sm:$0xff]
        %v465 = vld [vmem:[%s367 + $0x10] sm:$0xff]
        %v466 = vld [vmem:[%s367 + $0x18] sm:$0xff]
        %v467 = vld [vmem:[%s367 + $0x20] sm:$0xff]
        %v468 = vld [vmem:[%s367 + $0x28] sm:$0xff]
        %v469 = vld [vmem:[%s367 + $0x30] sm:$0xff]
        %v470 = vld [vmem:[%s367 + $0x38] sm:$0xff]
        %v471 = vld [vmem:[%s367 + $0x40] sm:$0xff]
        %v472 = vld [vmem:[%s367 + $0x48] sm:$0xff]
        %v473 = vld [vmem:[%s367 + $0x50] sm:$0xff]
        %v474 = vld [vmem:[%s367 + $0x58] sm:$0xff]
        %v475 = vld [vmem:[%s367 + $0x60] sm:$0xff]
        %v476 = vld [vmem:[%s367 + $0x68] sm:$0xff]
        %v477 = vld [vmem:[%s367 + $0x70] sm:$0xff]
        %v478 = vld [vmem:[%s367 + $0x78] sm:$0xff]
        %v479 = vld [vmem:[%s367 + $0x80] sm:$0xff]
        %v480 = vld [vmem:[%s367 + $0x88] sm:$0xff]
        %v481 = vld [vmem:[%s367 + $0x90] sm:$0xff]
        %v482 = vld [vmem:[%s367 + $0x98] sm:$0xff]
        %v483 = vld [vmem:[%s367 + $0xa0] sm:$0xff]
        %v484 = vld [vmem:[%s367 + $0xa8] sm:$0xff]
        %v485 = vld [vmem:[%s367 + $0xb0] sm:$0xff]
        %v486 = vld [vmem:[%s367 + $0xb8] sm:$0xff]
        %v487 = vld [vmem:[%s367 + $0xc0] sm:$0xff]
        %v488 = vld [vmem:[%s367 + $0xc8] sm:$0xff]
        %v489 = vld [vmem:[%s367 + $0xd0] sm:$0xff]
        %v490 = vld [vmem:[%s367 + $0xd8] sm:$0xff]
        %v491 = vld [vmem:[%s367 + $0xe0] sm:$0xff]
        %v492 = vld [vmem:[%s367 + $0xe8] sm:$0xff]
        %v493 = vld [vmem:[%s367 + $0xf0] sm:$0xff]
        %v494 = vld [vmem:[%s367 + $0xf8] sm:$0xff]
        %v495 = vpack.c.bf16 %v464, %v463
        %v496 = vpack.c.bf16 %v466, %v465
        %v497 = vpack.c.bf16 %v468, %v467
        %v498 = vpack.c.bf16 %v470, %v469
        %v499 = vpack.c.bf16 %v472, %v471
        %v500 = vpack.c.bf16 %v474, %v473
        %v501 = vpack.c.bf16 %v476, %v475
        %v502 = vpack.c.bf16 %v478, %v477
        %v503 = vpack.c.bf16 %v480, %v479
        %v504 = vpack.c.bf16 %v482, %v481
        %v505 = vpack.c.bf16 %v484, %v483
        %v506 = vpack.c.bf16 %v486, %v485
        %v507 = vpack.c.bf16 %v488, %v487
        %v508 = vpack.c.bf16 %v490, %v489
        %v509 = vpack.c.bf16 %v492, %v491
        %v510 = vpack.c.bf16 %v494, %v493
        %v511 = vld [vmem:[%s1] sm:$0xf]
        %v512 = vld [vmem:[%s1 + $0x4] sm:$0xf]
        %v513 = vld [vmem:[%s1 + $0x8] sm:$0xf]
        %v514 = vld [vmem:[%s1 + $0xc] sm:$0xf]
        %v515 = vld [vmem:[%s2] sm:$0x1]
        %v517 = vperm.slane %v515, 0
        %v523 = vunpack.c.l.b16 %v511
        %v524 = vunpack.c.l.b16 %v512
        %v525 = vunpack.c.l.b16 %v513
        %v526 = vunpack.c.l.b16 %v514
        %v527 = vpack.c.b16 %v524, %v523
        %v528 = vpack.c.b16 %v526, %v525
        %vm531 = vcmask 261120
        %v533 = vsel %vm531, %v495, 0
        %v536 = vsel %vm531, %v496, 0
        %v539 = vsel %vm531, %v497, 0
        %v542 = vsel %vm531, %v498, 0
        %v545 = vsel %vm531, %v499, 0
        %v548 = vsel %vm531, %v500, 0
        %v551 = vsel %vm531, %v501, 0
        %v554 = vsel %vm531, %v502, 0
        %v557 = vsel %vm531, %v503, 0
        %v560 = vsel %vm531, %v504, 0
        %v563 = vsel %vm531, %v505, 0
        %v566 = vsel %vm531, %v506, 0
        %v569 = vsel %vm531, %v507, 0
        %v572 = vsel %vm531, %v508, 0
        %v575 = vsel %vm531, %v509, 0
        %v578 = vsel %vm531, %v510, 0
        %580 = vmatpush.bf16.msra.mxu0 0
        %581 = vmatpush.bf16.msra.mxu0 0
        %582 = vmatpush.bf16.msra.mxu0 0
        %583 = vmatpush.bf16.msra.mxu0 0
        %584 = vmatpush.bf16.msra.mxu0 0
        %585 = vmatpush.bf16.msra.mxu0 0
        %586 = vmatpush.bf16.msra.mxu0 %v528
        %587 = vmatpush.bf16.msra.mxu0 %v527
        %588 = vmatmul.bf16.gmra.mxu0 %v533
        %v589 = vpop.f32.mrf.mxu0
        %v590 = vadd.f32 %v517, %v589
        %v591 = vpop.f32.mrf.mxu0
        %v592 = vadd.f32 %v517, %v591
        %593 = vmatmul.bf16.gmra.mxu0 %v536
        %v594 = vpop.f32.mrf.mxu0
        %v595 = vadd.f32 %v517, %v594
        %v596 = vpop.f32.mrf.mxu0
        %v597 = vadd.f32 %v517, %v596
        %598 = vmatmul.bf16.gmra.mxu0 %v539
        %v599 = vpop.f32.mrf.mxu0
        %v600 = vadd.f32 %v517, %v599
        %v601 = vpop.f32.mrf.mxu0
        %v602 = vadd.f32 %v517, %v601
        %603 = vmatmul.bf16.gmra.mxu0 %v542
        %v604 = vpop.f32.mrf.mxu0
        %v605 = vadd.f32 %v517, %v604
        %v606 = vpop.f32.mrf.mxu0
        %v607 = vadd.f32 %v517, %v606
        %608 = vmatmul.bf16.gmra.mxu0 %v545
        %v609 = vpop.f32.mrf.mxu0
        %v610 = vadd.f32 %v517, %v609
        %v611 = vpop.f32.mrf.mxu0
        %v612 = vadd.f32 %v517, %v611
        %613 = vmatmul.bf16.gmra.mxu0 %v548
        %v614 = vpop.f32.mrf.mxu0
        %v615 = vadd.f32 %v517, %v614
        %v616 = vpop.f32.mrf.mxu0
        %v617 = vadd.f32 %v517, %v616
        %618 = vmatmul.bf16.gmra.mxu0 %v551
        %v619 = vpop.f32.mrf.mxu0
        %v620 = vadd.f32 %v517, %v619
        %v621 = vpop.f32.mrf.mxu0
        %v622 = vadd.f32 %v517, %v621
        %623 = vmatmul.bf16.gmra.mxu0 %v554
        %v624 = vpop.f32.mrf.mxu0
        %v625 = vadd.f32 %v517, %v624
        %v626 = vpop.f32.mrf.mxu0
        %v627 = vadd.f32 %v517, %v626
        %628 = vmatmul.bf16.gmra.mxu0 %v557
        %v629 = vpop.f32.mrf.mxu0
        %v630 = vadd.f32 %v517, %v629
        %v631 = vpop.f32.mrf.mxu0
        %v632 = vadd.f32 %v517, %v631
        %633 = vmatmul.bf16.gmra.mxu0 %v560
        %v634 = vpop.f32.mrf.mxu0
        %v635 = vadd.f32 %v517, %v634
        %v636 = vpop.f32.mrf.mxu0
        %v637 = vadd.f32 %v517, %v636
        %638 = vmatmul.bf16.gmra.mxu0 %v563
        %v639 = vpop.f32.mrf.mxu0
        %v640 = vadd.f32 %v517, %v639
        %v641 = vpop.f32.mrf.mxu0
        %v642 = vadd.f32 %v517, %v641
        %643 = vmatmul.bf16.gmra.mxu0 %v566
        %v644 = vpop.f32.mrf.mxu0
        %v645 = vadd.f32 %v517, %v644
        %v646 = vpop.f32.mrf.mxu0
        %v647 = vadd.f32 %v517, %v646
        %648 = vmatmul.bf16.gmra.mxu0 %v569
        %v649 = vpop.f32.mrf.mxu0
        %v650 = vadd.f32 %v517, %v649
        %v651 = vpop.f32.mrf.mxu0
        %v652 = vadd.f32 %v517, %v651
        %653 = vmatmul.bf16.gmra.mxu0 %v572
        %v654 = vpop.f32.mrf.mxu0
        %v655 = vadd.f32 %v517, %v654
        %v656 = vpop.f32.mrf.mxu0
        %v657 = vadd.f32 %v517, %v656
        %658 = vmatmul.bf16.gmra.mxu0 %v575
        %v659 = vpop.f32.mrf.mxu0
        %v660 = vadd.f32 %v517, %v659
        %v661 = vpop.f32.mrf.mxu0
        %v662 = vadd.f32 %v517, %v661
        %663 = vmatmul.bf16.gmra.mxu0 %v578
        %v664 = vpop.f32.mrf.mxu0
        %v665 = vadd.f32 %v517, %v664
        %v666 = vpop.f32.mrf.mxu0
        %v667 = vadd.f32 %v517, %v666
        %668 = vdwg.mxu0
        %v669 = vmax.f32 %v590, 0.0
        %v670 = vmax.f32 %v592, 0.0
        %v671 = vmax.f32 %v595, 0.0
        %v672 = vmax.f32 %v597, 0.0
        %v673 = vmax.f32 %v600, 0.0
        %v674 = vmax.f32 %v602, 0.0
        %v675 = vmax.f32 %v605, 0.0
        %v676 = vmax.f32 %v607, 0.0
        %v677 = vmax.f32 %v610, 0.0
        %v678 = vmax.f32 %v612, 0.0
        %v679 = vmax.f32 %v615, 0.0
        %v680 = vmax.f32 %v617, 0.0
        %v681 = vmax.f32 %v620, 0.0
        %v682 = vmax.f32 %v622, 0.0
        %v683 = vmax.f32 %v625, 0.0
        %v684 = vmax.f32 %v627, 0.0
        %v685 = vmax.f32 %v630, 0.0
        %v686 = vmax.f32 %v632, 0.0
        %v687 = vmax.f32 %v635, 0.0
        %v688 = vmax.f32 %v637, 0.0
        %v689 = vmax.f32 %v640, 0.0
        %v690 = vmax.f32 %v642, 0.0
        %v691 = vmax.f32 %v645, 0.0
        %v692 = vmax.f32 %v647, 0.0
        %v693 = vmax.f32 %v650, 0.0
        %v694 = vmax.f32 %v652, 0.0
        %v695 = vmax.f32 %v655, 0.0
        %v696 = vmax.f32 %v657, 0.0
        %v697 = vmax.f32 %v660, 0.0
        %v698 = vmax.f32 %v662, 0.0
        %v699 = vmax.f32 %v665, 0.0
        %v700 = vmax.f32 %v667, 0.0
        %v701 = vpack.c.bf16 %v669, %v669
        %v702 = vpack.c.bf16 %v670, %v670
        %v703 = vpack.c.bf16 %v671, %v671
        %v704 = vpack.c.bf16 %v672, %v672
        %v705 = vpack.c.bf16 %v673, %v673
        %v706 = vpack.c.bf16 %v674, %v674
        %v707 = vpack.c.bf16 %v675, %v675
        %v708 = vpack.c.bf16 %v676, %v676
        %v709 = vpack.c.bf16 %v677, %v677
        %v710 = vpack.c.bf16 %v678, %v678
        %v711 = vpack.c.bf16 %v679, %v679
        %v712 = vpack.c.bf16 %v680, %v680
        %v713 = vpack.c.bf16 %v681, %v681
        %v714 = vpack.c.bf16 %v682, %v682
        %v715 = vpack.c.bf16 %v683, %v683
        %v716 = vpack.c.bf16 %v684, %v684
        %v717 = vpack.c.bf16 %v685, %v685
        %v718 = vpack.c.bf16 %v686, %v686
        %v719 = vpack.c.bf16 %v687, %v687
        %v720 = vpack.c.bf16 %v688, %v688
        %v721 = vpack.c.bf16 %v689, %v689
        %v722 = vpack.c.bf16 %v690, %v690
        %v723 = vpack.c.bf16 %v691, %v691
        %v724 = vpack.c.bf16 %v692, %v692
        %v725 = vpack.c.bf16 %v693, %v693
        %v726 = vpack.c.bf16 %v694, %v694
        %v727 = vpack.c.bf16 %v695, %v695
        %v728 = vpack.c.bf16 %v696, %v696
        %v729 = vpack.c.bf16 %v697, %v697
        %v730 = vpack.c.bf16 %v698, %v698
        %v731 = vpack.c.bf16 %v699, %v699
        %v732 = vpack.c.bf16 %v700, %v700
        %vm733 = vsmask.f32 256
        %vm734 = vsmask.f32 4368
        %vm735 = vmor %vm733, %vm734
        %v737 = vshrl.u32 %v701, 16
        %v739 = vrot.slane %v737, 7
        %v740 = vshll.u32 %v701, 16
        %v742 = vor.u32 %v739, %v740
        %v743 = vrot.slane %v739, 4
        %v745 = vshrl.u32 %v702, 16
        %v747 = vrot.slane %v745, 7
        %v748 = vshll.u32 %v702, 16
        %v750 = vor.u32 %v747, %v748
        %v751 = vsel %vm735, %v743, %v750
        %v752 = vrot.slane %v747, 4
        %v754 = vshrl.u32 %v703, 16
        %v756 = vrot.slane %v754, 7
        %v757 = vshll.u32 %v703, 16
        %v759 = vor.u32 %v756, %v757
        %v760 = vrot.slane %v756, 4
        %v762 = vshrl.u32 %v704, 16
        %v764 = vrot.slane %v762, 7
        %v765 = vshll.u32 %v704, 16
        %v767 = vor.u32 %v764, %v765
        %v768 = vsel %vm735, %v760, %v767
        %v769 = vrot.slane %v764, 4
        %v771 = vshrl.u32 %v705, 16
        %v773 = vrot.slane %v771, 7
        %v774 = vshll.u32 %v705, 16
        %v776 = vor.u32 %v773, %v774
        %v777 = vrot.slane %v773, 4
        %v779 = vshrl.u32 %v706, 16
        %v781 = vrot.slane %v779, 7
        %v782 = vshll.u32 %v706, 16
        %v784 = vor.u32 %v781, %v782
        %v785 = vsel %vm735, %v777, %v784
        %v786 = vrot.slane %v781, 4
        %v788 = vshrl.u32 %v707, 16
        %v790 = vrot.slane %v788, 7
        %v791 = vshll.u32 %v707, 16
        %v793 = vor.u32 %v790, %v791
        %v794 = vrot.slane %v790, 4
        %v796 = vshrl.u32 %v708, 16
        %v798 = vrot.slane %v796, 7
        %v799 = vshll.u32 %v708, 16
        %v801 = vor.u32 %v798, %v799
        %v802 = vsel %vm735, %v794, %v801
        %v803 = vrot.slane %v798, 4
        %v805 = vshrl.u32 %v709, 16
        %v807 = vrot.slane %v805, 7
        %v808 = vshll.u32 %v709, 16
        %v810 = vor.u32 %v807, %v808
        %v811 = vrot.slane %v807, 4
        %v813 = vshrl.u32 %v710, 16
        %v815 = vrot.slane %v813, 7
        %v816 = vshll.u32 %v710, 16
        %v818 = vor.u32 %v815, %v816
        %v819 = vsel %vm735, %v811, %v818
        %v820 = vrot.slane %v815, 4
        %v822 = vshrl.u32 %v711, 16
        %v824 = vrot.slane %v822, 7
        %v825 = vshll.u32 %v711, 16
        %v827 = vor.u32 %v824, %v825
        %v828 = vrot.slane %v824, 4
        %v830 = vshrl.u32 %v712, 16
        %v832 = vrot.slane %v830, 7
        %v833 = vshll.u32 %v712, 16
        %v835 = vor.u32 %v832, %v833
        %v836 = vsel %vm735, %v828, %v835
        %v837 = vrot.slane %v832, 4
        %v839 = vshrl.u32 %v713, 16
        %v841 = vrot.slane %v839, 7
        %v842 = vshll.u32 %v713, 16
        %v844 = vor.u32 %v841, %v842
        %v845 = vrot.slane %v841, 4
        %v847 = vshrl.u32 %v714, 16
        %v849 = vrot.slane %v847, 7
        %v850 = vshll.u32 %v714, 16
        %v852 = vor.u32 %v849, %v850
        %v853 = vsel %vm735, %v845, %v852
        %v854 = vrot.slane %v849, 4
        %v856 = vshrl.u32 %v715, 16
        %v858 = vrot.slane %v856, 7
        %v859 = vshll.u32 %v715, 16
        %v861 = vor.u32 %v858, %v859
        %v862 = vrot.slane %v858, 4
        %v864 = vshrl.u32 %v716, 16
        %v866 = vrot.slane %v864, 7
        %v867 = vshll.u32 %v716, 16
        %v869 = vor.u32 %v866, %v867
        %v870 = vsel %vm735, %v862, %v869
        %v871 = vrot.slane %v866, 4
        %v873 = vshrl.u32 %v717, 16
        %v875 = vrot.slane %v873, 7
        %v876 = vshll.u32 %v717, 16
        %v878 = vor.u32 %v875, %v876
        %v879 = vrot.slane %v875, 4
        %v881 = vshrl.u32 %v718, 16
        %v883 = vrot.slane %v881, 7
        %v884 = vshll.u32 %v718, 16
        %v886 = vor.u32 %v883, %v884
        %v887 = vsel %vm735, %v879, %v886
        %v888 = vrot.slane %v883, 4
        %v890 = vshrl.u32 %v719, 16
        %v892 = vrot.slane %v890, 7
        %v893 = vshll.u32 %v719, 16
        %v895 = vor.u32 %v892, %v893
        %v896 = vrot.slane %v892, 4
        %v898 = vshrl.u32 %v720, 16
        %v900 = vrot.slane %v898, 7
        %v901 = vshll.u32 %v720, 16
        %v903 = vor.u32 %v900, %v901
        %v904 = vsel %vm735, %v896, %v903
        %v905 = vrot.slane %v900, 4
        %v907 = vshrl.u32 %v721, 16
        %v909 = vrot.slane %v907, 7
        %v910 = vshll.u32 %v721, 16
        %v912 = vor.u32 %v909, %v910
        %v913 = vrot.slane %v909, 4
        %v915 = vshrl.u32 %v722, 16
        %v917 = vrot.slane %v915, 7
        %v918 = vshll.u32 %v722, 16
        %v920 = vor.u32 %v917, %v918
        %v921 = vsel %vm735, %v913, %v920
        %v922 = vrot.slane %v917, 4
        %v924 = vshrl.u32 %v723, 16
        %v926 = vrot.slane %v924, 7
        %v927 = vshll.u32 %v723, 16
        %v929 = vor.u32 %v926, %v927
        %v930 = vrot.slane %v926, 4
        %v932 = vshrl.u32 %v724, 16
        %v934 = vrot.slane %v932, 7
        %v935 = vshll.u32 %v724, 16
        %v937 = vor.u32 %v934, %v935
        %v938 = vsel %vm735, %v930, %v937
        %v939 = vrot.slane %v934, 4
        %v941 = vshrl.u32 %v725, 16
        %v943 = vrot.slane %v941, 7
        %v944 = vshll.u32 %v725, 16
        %v946 = vor.u32 %v943, %v944
        %v947 = vrot.slane %v943, 4
        %v949 = vshrl.u32 %v726, 16
        %v951 = vrot.slane %v949, 7
        %v952 = vshll.u32 %v726, 16
        %v954 = vor.u32 %v951, %v952
        %v955 = vsel %vm735, %v947, %v954
        %v956 = vrot.slane %v951, 4
        %v958 = vshrl.u32 %v727, 16
        %v960 = vrot.slane %v958, 7
        %v961 = vshll.u32 %v727, 16
        %v963 = vor.u32 %v960, %v961
        %v964 = vrot.slane %v960, 4
        %v966 = vshrl.u32 %v728, 16
        %v968 = vrot.slane %v966, 7
        %v969 = vshll.u32 %v728, 16
        %v971 = vor.u32 %v968, %v969
        %v972 = vsel %vm735, %v964, %v971
        %v973 = vrot.slane %v968, 4
        %v975 = vshrl.u32 %v729, 16
        %v977 = vrot.slane %v975, 7
        %v978 = vshll.u32 %v729, 16
        %v980 = vor.u32 %v977, %v978
        %v981 = vrot.slane %v977, 4
        %v983 = vshrl.u32 %v730, 16
        %v985 = vrot.slane %v983, 7
        %v986 = vshll.u32 %v730, 16
        %v988 = vor.u32 %v985, %v986
        %v989 = vsel %vm735, %v981, %v988
        %v990 = vrot.slane %v985, 4
        %v992 = vshrl.u32 %v731, 16
        %v994 = vrot.slane %v992, 7
        %v995 = vshll.u32 %v731, 16
        %v997 = vor.u32 %v994, %v995
        %v998 = vrot.slane %v994, 4
        %v1000 = vshrl.u32 %v732, 16
        %v1002 = vrot.slane %v1000, 7
        %v1003 = vshll.u32 %v732, 16
        %v1005 = vor.u32 %v1002, %v1003
        %v1006 = vsel %vm735, %v998, %v1005
        %v1007 = vrot.slane %v1002, 4
        %s1056 = scalar_lea.vmem [#allocation2], 12
        %vm1057 = vcmask 60416
        %vm1058 = vsmask.f32 7938
        %vm1059 = vmand %vm1057, %vm1058
        %v1060 = vld [vmem:[%s1056] sm:$0xf]
        %v1061 = vsel %vm1059, %v742, %v1060
        %1062 = vst [vmem:[%s1056] sm:$0xf] %v1061
        %1063 = vst.msk [vmem:[%s1056 + $0x4] sm:$0xf] %vm408, %v751
        %vm1064 = vcmask 57344
        %vm1065 = vmand %vm1064, %vm733
        %v1066 = vld [vmem:[%s1056 + $0x8] sm:$0x1]
        %v1067 = vsel %vm1065, %v752, %v1066
        %1068 = vst [vmem:[%s1056 + $0x8] sm:$0x1] %v1067
        %v1069 = vld [vmem:[%s1056 + $0xc] sm:$0xf]
        %v1070 = vsel %vm1059, %v759, %v1069
        %1071 = vst [vmem:[%s1056 + $0xc] sm:$0xf] %v1070
        %1072 = vst.msk [vmem:[%s1056 + $0x10] sm:$0xf] %vm408, %v768
        %v1073 = vld [vmem:[%s1056 + $0x14] sm:$0x1]
        %v1074 = vsel %vm1065, %v769, %v1073
        %1075 = vst [vmem:[%s1056 + $0x14] sm:$0x1] %v1074
        %v1076 = vld [vmem:[%s1056 + $0x18] sm:$0xf]
        %v1077 = vsel %vm1059, %v776, %v1076
        %1078 = vst [vmem:[%s1056 + $0x18] sm:$0xf] %v1077
        %1079 = vst.msk [vmem:[%s1056 + $0x1c] sm:$0xf] %vm408, %v785
        %v1080 = vld [vmem:[%s1056 + $0x20] sm:$0x1]
        %v1081 = vsel %vm1065, %v786, %v1080
        %1082 = vst [vmem:[%s1056 + $0x20] sm:$0x1] %v1081
        %v1083 = vld [vmem:[%s1056 + $0x24] sm:$0xf]
        %v1084 = vsel %vm1059, %v793, %v1083
        %1085 = vst [vmem:[%s1056 + $0x24] sm:$0xf] %v1084
        %1086 = vst.msk [vmem:[%s1056 + $0x28] sm:$0xf] %vm408, %v802
        %v1087 = vld [vmem:[%s1056 + $0x2c] sm:$0x1]
        %v1088 = vsel %vm1065, %v803, %v1087
        %1089 = vst [vmem:[%s1056 + $0x2c] sm:$0x1] %v1088
        %v1090 = vld [vmem:[%s1056 + $0x30] sm:$0xf]
        %v1091 = vsel %vm1059, %v810, %v1090
        %1092 = vst [vmem:[%s1056 + $0x30] sm:$0xf] %v1091
        %1093 = vst.msk [vmem:[%s1056 + $0x34] sm:$0xf] %vm408, %v819
        %v1094 = vld [vmem:[%s1056 + $0x38] sm:$0x1]
        %v1095 = vsel %vm1065, %v820, %v1094
        %1096 = vst [vmem:[%s1056 + $0x38] sm:$0x1] %v1095
        %v1097 = vld [vmem:[%s1056 + $0x3c] sm:$0xf]
        %v1098 = vsel %vm1059, %v827, %v1097
        %1099 = vst [vmem:[%s1056 + $0x3c] sm:$0xf] %v1098
        %1100 = vst.msk [vmem:[%s1056 + $0x40] sm:$0xf] %vm408, %v836
        %v1101 = vld [vmem:[%s1056 + $0x44] sm:$0x1]
        %v1102 = vsel %vm1065, %v837, %v1101
        %1103 = vst [vmem:[%s1056 + $0x44] sm:$0x1] %v1102
        %v1104 = vld [vmem:[%s1056 + $0x48] sm:$0xf]
        %v1105 = vsel %vm1059, %v844, %v1104
        %1106 = vst [vmem:[%s1056 + $0x48] sm:$0xf] %v1105
        %1107 = vst.msk [vmem:[%s1056 + $0x4c] sm:$0xf] %vm408, %v853
        %v1108 = vld [vmem:[%s1056 + $0x50] sm:$0x1]
        %v1109 = vsel %vm1065, %v854, %v1108
        %1110 = vst [vmem:[%s1056 + $0x50] sm:$0x1] %v1109
        %v1111 = vld [vmem:[%s1056 + $0x54] sm:$0xf]
        %v1112 = vsel %vm1059, %v861, %v1111
        %1113 = vst [vmem:[%s1056 + $0x54] sm:$0xf] %v1112
        %1114 = vst.msk [vmem:[%s1056 + $0x58] sm:$0xf] %vm408, %v870
        %v1115 = vld [vmem:[%s1056 + $0x5c] sm:$0x1]
        %v1116 = vsel %vm1065, %v871, %v1115
        %1117 = vst [vmem:[%s1056 + $0x5c] sm:$0x1] %v1116
        %v1118 = vld [vmem:[%s1056 + $0x60] sm:$0xf]
        %v1119 = vsel %vm1059, %v878, %v1118
        %1120 = vst [vmem:[%s1056 + $0x60] sm:$0xf] %v1119
        %1121 = vst.msk [vmem:[%s1056 + $0x64] sm:$0xf] %vm408, %v887
        %v1122 = vld [vmem:[%s1056 + $0x68] sm:$0x1]
        %v1123 = vsel %vm1065, %v888, %v1122
        %1124 = vst [vmem:[%s1056 + $0x68] sm:$0x1] %v1123
        %v1125 = vld [vmem:[%s1056 + $0x6c] sm:$0xf]
        %v1126 = vsel %vm1059, %v895, %v1125
        %1127 = vst [vmem:[%s1056 + $0x6c] sm:$0xf] %v1126
        %1128 = vst.msk [vmem:[%s1056 + $0x70] sm:$0xf] %vm408, %v904
        %v1129 = vld [vmem:[%s1056 + $0x74] sm:$0x1]
        %v1130 = vsel %vm1065, %v905, %v1129
        %1131 = vst [vmem:[%s1056 + $0x74] sm:$0x1] %v1130
        %v1132 = vld [vmem:[%s1056 + $0x78] sm:$0xf]
        %v1133 = vsel %vm1059, %v912, %v1132
        %1134 = vst [vmem:[%s1056 + $0x78] sm:$0xf] %v1133
        %1135 = vst.msk [vmem:[%s1056 + $0x7c] sm:$0xf] %vm408, %v921
        %v1136 = vld [vmem:[%s1056 + $0x80] sm:$0x1]
        %v1137 = vsel %vm1065, %v922, %v1136
        %1138 = vst [vmem:[%s1056 + $0x80] sm:$0x1] %v1137
        %v1139 = vld [vmem:[%s1056 + $0x84] sm:$0xf]
        %v1140 = vsel %vm1059, %v929, %v1139
        %1141 = vst [vmem:[%s1056 + $0x84] sm:$0xf] %v1140
        %1142 = vst.msk [vmem:[%s1056 + $0x88] sm:$0xf] %vm408, %v938
        %v1143 = vld [vmem:[%s1056 + $0x8c] sm:$0x1]
        %v1144 = vsel %vm1065, %v939, %v1143
        %1145 = vst [vmem:[%s1056 + $0x8c] sm:$0x1] %v1144
        %v1146 = vld [vmem:[%s1056 + $0x90] sm:$0xf]
        %v1147 = vsel %vm1059, %v946, %v1146
        %1148 = vst [vmem:[%s1056 + $0x90] sm:$0xf] %v1147
        %1149 = vst.msk [vmem:[%s1056 + $0x94] sm:$0xf] %vm408, %v955
        %v1150 = vld [vmem:[%s1056 + $0x98] sm:$0x1]
        %v1151 = vsel %vm1065, %v956, %v1150
        %1152 = vst [vmem:[%s1056 + $0x98] sm:$0x1] %v1151
        %v1153 = vld [vmem:[%s1056 + $0x9c] sm:$0xf]
        %v1154 = vsel %vm1059, %v963, %v1153
        %1155 = vst [vmem:[%s1056 + $0x9c] sm:$0xf] %v1154
        %1156 = vst.msk [vmem:[%s1056 + $0xa0] sm:$0xf] %vm408, %v972
        %v1157 = vld [vmem:[%s1056 + $0xa4] sm:$0x1]
        %v1158 = vsel %vm1065, %v973, %v1157
        %1159 = vst [vmem:[%s1056 + $0xa4] sm:$0x1] %v1158
        %v1160 = vld [vmem:[%s1056 + $0xa8] sm:$0xf]
        %v1161 = vsel %vm1059, %v980, %v1160
        %1162 = vst [vmem:[%s1056 + $0xa8] sm:$0xf] %v1161
        %1163 = vst.msk [vmem:[%s1056 + $0xac] sm:$0xf] %vm408, %v989
        %v1164 = vld [vmem:[%s1056 + $0xb0] sm:$0x1]
        %v1165 = vsel %vm1065, %v990, %v1164
        %1166 = vst [vmem:[%s1056 + $0xb0] sm:$0x1] %v1165
        %v1167 = vld [vmem:[%s1056 + $0xb4] sm:$0xf]
        %v1168 = vsel %vm1059, %v997, %v1167
        %1169 = vst [vmem:[%s1056 + $0xb4] sm:$0xf] %v1168
        %1170 = vst.msk [vmem:[%s1056 + $0xb8] sm:$0xf] %vm408, %v1006
        %v1171 = vld [vmem:[%s1056 + $0xbc] sm:$0x1]
        %v1172 = vsel %vm1065, %v1007, %v1171
        %1173 = vst [vmem:[%s1056 + $0xbc] sm:$0x1] %v1172
        %v1174 = vld [vmem:[#allocation2] sm:$0xf]
        %v1175 = vld [vmem:[#allocation2 + $0x4] sm:$0xf]
        %v1176 = vld [vmem:[#allocation2 + $0xc] sm:$0xf]
        %v1177 = vld [vmem:[#allocation2 + $0x10] sm:$0xf]
        %v1178 = vld [vmem:[#allocation2 + $0x18] sm:$0xf]
        %v1179 = vld [vmem:[#allocation2 + $0x1c] sm:$0xf]
        %v1180 = vld [vmem:[#allocation2 + $0x24] sm:$0xf]
        %v1181 = vld [vmem:[#allocation2 + $0x28] sm:$0xf]
        %v1182 = vld [vmem:[#allocation2 + $0x30] sm:$0xf]
        %v1183 = vld [vmem:[#allocation2 + $0x34] sm:$0xf]
        %v1184 = vld [vmem:[#allocation2 + $0x3c] sm:$0xf]
        %v1185 = vld [vmem:[#allocation2 + $0x40] sm:$0xf]
        %v1186 = vld [vmem:[#allocation2 + $0x48] sm:$0xf]
        %v1187 = vld [vmem:[#allocation2 + $0x4c] sm:$0xf]
        %v1188 = vld [vmem:[#allocation2 + $0x54] sm:$0xf]
        %v1189 = vld [vmem:[#allocation2 + $0x58] sm:$0xf]
        %v1190 = vld [vmem:[#allocation2 + $0x60] sm:$0xf]
        %v1191 = vld [vmem:[#allocation2 + $0x64] sm:$0xf]
        %v1192 = vld [vmem:[#allocation2 + $0x6c] sm:$0xf]
        %v1193 = vld [vmem:[#allocation2 + $0x70] sm:$0xf]
        %v1194 = vld [vmem:[#allocation2 + $0x78] sm:$0xf]
        %v1195 = vld [vmem:[#allocation2 + $0x7c] sm:$0xf]
        %v1196 = vld [vmem:[#allocation2 + $0x84] sm:$0xf]
        %v1197 = vld [vmem:[#allocation2 + $0x88] sm:$0xf]
        %v1198 = vld [vmem:[#allocation2 + $0x90] sm:$0xf]
        %v1199 = vld [vmem:[#allocation2 + $0x94] sm:$0xf]
        %v1200 = vld [vmem:[#allocation2 + $0x9c] sm:$0xf]
        %v1201 = vld [vmem:[#allocation2 + $0xa0] sm:$0xf]
        %v1202 = vld [vmem:[#allocation2 + $0xa8] sm:$0xf]
        %v1203 = vld [vmem:[#allocation2 + $0xac] sm:$0xf]
        %v1204 = vld [vmem:[#allocation2 + $0xb4] sm:$0xf]
        %v1205 = vld [vmem:[#allocation2 + $0xb8] sm:$0xf]
        %v1206 = vld [vmem:[#allocation2 + $0x8] sm:$0x1]
        %v1207 = vld [vmem:[#allocation2 + $0x14] sm:$0x1]
        %v1208 = vld [vmem:[#allocation2 + $0x20] sm:$0x1]
        %v1209 = vld [vmem:[#allocation2 + $0x2c] sm:$0x1]
        %v1210 = vld [vmem:[#allocation2 + $0x38] sm:$0x1]
        %v1211 = vld [vmem:[#allocation2 + $0x44] sm:$0x1]
        %v1212 = vld [vmem:[#allocation2 + $0x50] sm:$0x1]
        %v1213 = vld [vmem:[#allocation2 + $0x5c] sm:$0x1]
        %v1214 = vld [vmem:[#allocation2 + $0x68] sm:$0x1]
        %v1215 = vld [vmem:[#allocation2 + $0x74] sm:$0x1]
        %v1216 = vld [vmem:[#allocation2 + $0x80] sm:$0x1]
        %v1217 = vld [vmem:[#allocation2 + $0x8c] sm:$0x1]
        %v1218 = vld [vmem:[#allocation2 + $0x98] sm:$0x1]
        %v1219 = vld [vmem:[#allocation2 + $0xa4] sm:$0x1]
        %v1220 = vld [vmem:[#allocation2 + $0xb0] sm:$0x1]
        %v1221 = vld [vmem:[#allocation2 + $0xbc] sm:$0x1]
        %vm1222 = vsmask.f32 3328
        %vm1223 = vsmask.f32 7440
        %vm1224 = vmor %vm1222, %vm1223
        %v1226 = vshrl.u32 %v1174, 16
        %v1228 = vrot.slane %v1226, 4
        %v1229 = vshll.u32 %v1174, 16
        %v1231 = vrot.slane %v1229, 5
        %v1232 = vor.u32 %v1228, %v1231
        %v1233 = vrot.slane %v1232, 4
        %v1235 = vshll.u32 %v1175, 16
        %v1237 = vrot.slane %v1235, 5
        %v1238 = vsel %vm1224, %v1233, %v1237
        %v1239 = vshrl.u32 %v1175, 16
        %v1241 = vrot.slane %v1239, 4
        %v1242 = vor.u32 %v1241, %v1237
        %v1243 = vrot.slane %v1242, 4
        %v1245 = vshll.u32 %v1206, 16
        %v1247 = vrot.slane %v1245, 5
        %v1248 = vsel %vm1224, %v1243, %v1247
        %v1250 = vshrl.u32 %v1176, 16
        %v1252 = vrot.slane %v1250, 4
        %v1253 = vshll.u32 %v1176, 16
        %v1255 = vrot.slane %v1253, 5
        %v1256 = vor.u32 %v1252, %v1255
        %v1257 = vrot.slane %v1256, 4
        %v1259 = vshll.u32 %v1177, 16
        %v1261 = vrot.slane %v1259, 5
        %v1262 = vsel %vm1224, %v1257, %v1261
        %v1263 = vshrl.u32 %v1177, 16
        %v1265 = vrot.slane %v1263, 4
        %v1266 = vor.u32 %v1265, %v1261
        %v1267 = vrot.slane %v1266, 4
        %v1269 = vshll.u32 %v1207, 16
        %v1271 = vrot.slane %v1269, 5
        %v1272 = vsel %vm1224, %v1267, %v1271
        %v1274 = vshrl.u32 %v1178, 16
        %v1276 = vrot.slane %v1274, 4
        %v1277 = vshll.u32 %v1178, 16
        %v1279 = vrot.slane %v1277, 5
        %v1280 = vor.u32 %v1276, %v1279
        %v1281 = vrot.slane %v1280, 4
        %v1283 = vshll.u32 %v1179, 16
        %v1285 = vrot.slane %v1283, 5
        %v1286 = vsel %vm1224, %v1281, %v1285
        %v1287 = vshrl.u32 %v1179, 16
        %v1289 = vrot.slane %v1287, 4
        %v1290 = vor.u32 %v1289, %v1285
        %v1291 = vrot.slane %v1290, 4
        %v1293 = vshll.u32 %v1208, 16
        %v1295 = vrot.slane %v1293, 5
        %v1296 = vsel %vm1224, %v1291, %v1295
        %v1298 = vshrl.u32 %v1180, 16
        %v1300 = vrot.slane %v1298, 4
        %v1301 = vshll.u32 %v1180, 16
        %v1303 = vrot.slane %v1301, 5
        %v1304 = vor.u32 %v1300, %v1303
        %v1305 = vrot.slane %v1304, 4
        %v1307 = vshll.u32 %v1181, 16
        %v1309 = vrot.slane %v1307, 5
        %v1310 = vsel %vm1224, %v1305, %v1309
        %v1311 = vshrl.u32 %v1181, 16
        %v1313 = vrot.slane %v1311, 4
        %v1314 = vor.u32 %v1313, %v1309
        %v1315 = vrot.slane %v1314, 4
        %v1317 = vshll.u32 %v1209, 16
        %v1319 = vrot.slane %v1317, 5
        %v1320 = vsel %vm1224, %v1315, %v1319
        %v1322 = vshrl.u32 %v1182, 16
        %v1324 = vrot.slane %v1322, 4
        %v1325 = vshll.u32 %v1182, 16
        %v1327 = vrot.slane %v1325, 5
        %v1328 = vor.u32 %v1324, %v1327
        %v1329 = vrot.slane %v1328, 4
        %v1331 = vshll.u32 %v1183, 16
        %v1333 = vrot.slane %v1331, 5
        %v1334 = vsel %vm1224, %v1329, %v1333
        %v1335 = vshrl.u32 %v1183, 16
        %v1337 = vrot.slane %v1335, 4
        %v1338 = vor.u32 %v1337, %v1333
        %v1339 = vrot.slane %v1338, 4
        %v1341 = vshll.u32 %v1210, 16
        %v1343 = vrot.slane %v1341, 5
        %v1344 = vsel %vm1224, %v1339, %v1343
        %v1346 = vshrl.u32 %v1184, 16
        %v1348 = vrot.slane %v1346, 4
        %v1349 = vshll.u32 %v1184, 16
        %v1351 = vrot.slane %v1349, 5
        %v1352 = vor.u32 %v1348, %v1351
        %v1353 = vrot.slane %v1352, 4
        %v1355 = vshll.u32 %v1185, 16
        %v1357 = vrot.slane %v1355, 5
        %v1358 = vsel %vm1224, %v1353, %v1357
        %v1359 = vshrl.u32 %v1185, 16
        %v1361 = vrot.slane %v1359, 4
        %v1362 = vor.u32 %v1361, %v1357
        %v1363 = vrot.slane %v1362, 4
        %v1365 = vshll.u32 %v1211, 16
        %v1367 = vrot.slane %v1365, 5
        %v1368 = vsel %vm1224, %v1363, %v1367
        %v1370 = vshrl.u32 %v1186, 16
        %v1372 = vrot.slane %v1370, 4
        %v1373 = vshll.u32 %v1186, 16
        %v1375 = vrot.slane %v1373, 5
        %v1376 = vor.u32 %v1372, %v1375
        %v1377 = vrot.slane %v1376, 4
        %v1379 = vshll.u32 %v1187, 16
        %v1381 = vrot.slane %v1379, 5
        %v1382 = vsel %vm1224, %v1377, %v1381
        %v1383 = vshrl.u32 %v1187, 16
        %v1385 = vrot.slane %v1383, 4
        %v1386 = vor.u32 %v1385, %v1381
        %v1387 = vrot.slane %v1386, 4
        %v1389 = vshll.u32 %v1212, 16
        %v1391 = vrot.slane %v1389, 5
        %v1392 = vsel %vm1224, %v1387, %v1391
        %v1394 = vshrl.u32 %v1188, 16
        %v1396 = vrot.slane %v1394, 4
        %v1397 = vshll.u32 %v1188, 16
        %v1399 = vrot.slane %v1397, 5
        %v1400 = vor.u32 %v1396, %v1399
        %v1401 = vrot.slane %v1400, 4
        %v1403 = vshll.u32 %v1189, 16
        %v1405 = vrot.slane %v1403, 5
        %v1406 = vsel %vm1224, %v1401, %v1405
        %v1407 = vshrl.u32 %v1189, 16
        %v1409 = vrot.slane %v1407, 4
        %v1410 = vor.u32 %v1409, %v1405
        %v1411 = vrot.slane %v1410, 4
        %v1413 = vshll.u32 %v1213, 16
        %v1415 = vrot.slane %v1413, 5
        %v1416 = vsel %vm1224, %v1411, %v1415
        %v1418 = vshrl.u32 %v1190, 16
        %v1420 = vrot.slane %v1418, 4
        %v1421 = vshll.u32 %v1190, 16
        %v1423 = vrot.slane %v1421, 5
        %v1424 = vor.u32 %v1420, %v1423
        %v1425 = vrot.slane %v1424, 4
        %v1427 = vshll.u32 %v1191, 16
        %v1429 = vrot.slane %v1427, 5
        %v1430 = vsel %vm1224, %v1425, %v1429
        %v1431 = vshrl.u32 %v1191, 16
        %v1433 = vrot.slane %v1431, 4
        %v1434 = vor.u32 %v1433, %v1429
        %v1435 = vrot.slane %v1434, 4
        %v1437 = vshll.u32 %v1214, 16
        %v1439 = vrot.slane %v1437, 5
        %v1440 = vsel %vm1224, %v1435, %v1439
        %v1442 = vshrl.u32 %v1192, 16
        %v1444 = vrot.slane %v1442, 4
        %v1445 = vshll.u32 %v1192, 16
        %v1447 = vrot.slane %v1445, 5
        %v1448 = vor.u32 %v1444, %v1447
        %v1449 = vrot.slane %v1448, 4
        %v1451 = vshll.u32 %v1193, 16
        %v1453 = vrot.slane %v1451, 5
        %v1454 = vsel %vm1224, %v1449, %v1453
        %v1455 = vshrl.u32 %v1193, 16
        %v1457 = vrot.slane %v1455, 4
        %v1458 = vor.u32 %v1457, %v1453
        %v1459 = vrot.slane %v1458, 4
        %v1461 = vshll.u32 %v1215, 16
        %v1463 = vrot.slane %v1461, 5
        %v1464 = vsel %vm1224, %v1459, %v1463
        %v1466 = vshrl.u32 %v1194, 16
        %v1468 = vrot.slane %v1466, 4
        %v1469 = vshll.u32 %v1194, 16
        %v1471 = vrot.slane %v1469, 5
        %v1472 = vor.u32 %v1468, %v1471
        %v1473 = vrot.slane %v1472, 4
        %v1475 = vshll.u32 %v1195, 16
        %v1477 = vrot.slane %v1475, 5
        %v1478 = vsel %vm1224, %v1473, %v1477
        %v1479 = vshrl.u32 %v1195, 16
        %v1481 = vrot.slane %v1479, 4
        %v1482 = vor.u32 %v1481, %v1477
        %v1483 = vrot.slane %v1482, 4
        %v1485 = vshll.u32 %v1216, 16
        %v1487 = vrot.slane %v1485, 5
        %v1488 = vsel %vm1224, %v1483, %v1487
        %v1490 = vshrl.u32 %v1196, 16
        %v1492 = vrot.slane %v1490, 4
        %v1493 = vshll.u32 %v1196, 16
        %v1495 = vrot.slane %v1493, 5
        %v1496 = vor.u32 %v1492, %v1495
        %v1497 = vrot.slane %v1496, 4
        %v1499 = vshll.u32 %v1197, 16
        %v1501 = vrot.slane %v1499, 5
        %v1502 = vsel %vm1224, %v1497, %v1501
        %v1503 = vshrl.u32 %v1197, 16
        %v1505 = vrot.slane %v1503, 4
        %v1506 = vor.u32 %v1505, %v1501
        %v1507 = vrot.slane %v1506, 4
        %v1509 = vshll.u32 %v1217, 16
        %v1511 = vrot.slane %v1509, 5
        %v1512 = vsel %vm1224, %v1507, %v1511
        %v1514 = vshrl.u32 %v1198, 16
        %v1516 = vrot.slane %v1514, 4
        %v1517 = vshll.u32 %v1198, 16
        %v1519 = vrot.slane %v1517, 5
        %v1520 = vor.u32 %v1516, %v1519
        %v1521 = vrot.slane %v1520, 4
        %v1523 = vshll.u32 %v1199, 16
        %v1525 = vrot.slane %v1523, 5
        %v1526 = vsel %vm1224, %v1521, %v1525
        %v1527 = vshrl.u32 %v1199, 16
        %v1529 = vrot.slane %v1527, 4
        %v1530 = vor.u32 %v1529, %v1525
        %v1531 = vrot.slane %v1530, 4
        %v1533 = vshll.u32 %v1218, 16
        %v1535 = vrot.slane %v1533, 5
        %v1536 = vsel %vm1224, %v1531, %v1535
        %v1538 = vshrl.u32 %v1200, 16
        %v1540 = vrot.slane %v1538, 4
        %v1541 = vshll.u32 %v1200, 16
        %v1543 = vrot.slane %v1541, 5
        %v1544 = vor.u32 %v1540, %v1543
        %v1545 = vrot.slane %v1544, 4
        %v1547 = vshll.u32 %v1201, 16
        %v1549 = vrot.slane %v1547, 5
        %v1550 = vsel %vm1224, %v1545, %v1549
        %v1551 = vshrl.u32 %v1201, 16
        %v1553 = vrot.slane %v1551, 4
        %v1554 = vor.u32 %v1553, %v1549
        %v1555 = vrot.slane %v1554, 4
        %v1557 = vshll.u32 %v1219, 16
        %v1559 = vrot.slane %v1557, 5
        %v1560 = vsel %vm1224, %v1555, %v1559
        %v1562 = vshrl.u32 %v1202, 16
        %v1564 = vrot.slane %v1562, 4
        %v1565 = vshll.u32 %v1202, 16
        %v1567 = vrot.slane %v1565, 5
        %v1568 = vor.u32 %v1564, %v1567
        %v1569 = vrot.slane %v1568, 4
        %v1571 = vshll.u32 %v1203, 16
        %v1573 = vrot.slane %v1571, 5
        %v1574 = vsel %vm1224, %v1569, %v1573
        %v1575 = vshrl.u32 %v1203, 16
        %v1577 = vrot.slane %v1575, 4
        %v1578 = vor.u32 %v1577, %v1573
        %v1579 = vrot.slane %v1578, 4
        %v1581 = vshll.u32 %v1220, 16
        %v1583 = vrot.slane %v1581, 5
        %v1584 = vsel %vm1224, %v1579, %v1583
        %v1586 = vshrl.u32 %v1204, 16
        %v1588 = vrot.slane %v1586, 4
        %v1589 = vshll.u32 %v1204, 16
        %v1591 = vrot.slane %v1589, 5
        %v1592 = vor.u32 %v1588, %v1591
        %v1593 = vrot.slane %v1592, 4
        %v1595 = vshll.u32 %v1205, 16
        %v1597 = vrot.slane %v1595, 5
        %v1598 = vsel %vm1224, %v1593, %v1597
        %v1599 = vshrl.u32 %v1205, 16
        %v1601 = vrot.slane %v1599, 4
        %v1602 = vor.u32 %v1601, %v1597
        %v1603 = vrot.slane %v1602, 4
        %v1605 = vshll.u32 %v1221, 16
        %v1607 = vrot.slane %v1605, 5
        %v1608 = vsel %vm1224, %v1603, %v1607
        %v1609 = vld [vmem:[#allocation2] sm:$0xe]
        %v1610 = vld [vmem:[#allocation2 + $0xc] sm:$0xe]
        %v1611 = vld [vmem:[#allocation2 + $0x18] sm:$0xe]
        %v1612 = vld [vmem:[#allocation2 + $0x24] sm:$0xe]
        %v1613 = vld [vmem:[#allocation2 + $0x30] sm:$0xe]
        %v1614 = vld [vmem:[#allocation2 + $0x3c] sm:$0xe]
        %v1615 = vld [vmem:[#allocation2 + $0x48] sm:$0xe]
        %v1616 = vld [vmem:[#allocation2 + $0x54] sm:$0xe]
        %v1617 = vld [vmem:[#allocation2 + $0x60] sm:$0xe]
        %v1618 = vld [vmem:[#allocation2 + $0x6c] sm:$0xe]
        %v1619 = vld [vmem:[#allocation2 + $0x78] sm:$0xe]
        %v1620 = vld [vmem:[#allocation2 + $0x84] sm:$0xe]
        %v1621 = vld [vmem:[#allocation2 + $0x90] sm:$0xe]
        %v1622 = vld [vmem:[#allocation2 + $0x9c] sm:$0xe]
        %v1623 = vld [vmem:[#allocation2 + $0xa8] sm:$0xe]
        %v1624 = vld [vmem:[#allocation2 + $0xb4] sm:$0xe]
        %vm1673 = vcmask 1042432
        %vm1674 = vcmask 1046532
        %vm1675 = vmor %vm1673, %vm1674
        %v1676 = vrot.slane %v1609, 5
        %v1677 = vrot.slane %v1676, 4
        %v1678 = vrot.slane %v1175, 5
        %v1679 = vsel %vm1675, %v1677, %v1678
        %v1680 = vrot.slane %v1678, 4
        %v1681 = vrot.slane %v1206, 5
        %v1682 = vsel %vm1675, %v1680, %v1681
        %v1683 = vrot.slane %v1610, 5
        %v1684 = vrot.slane %v1683, 4
        %v1685 = vrot.slane %v1177, 5
        %v1686 = vsel %vm1675, %v1684, %v1685
        %v1687 = vrot.slane %v1685, 4
        %v1688 = vrot.slane %v1207, 5
        %v1689 = vsel %vm1675, %v1687, %v1688
        %v1690 = vrot.slane %v1611, 5
        %v1691 = vrot.slane %v1690, 4
        %v1692 = vrot.slane %v1179, 5
        %v1693 = vsel %vm1675, %v1691, %v1692
        %v1694 = vrot.slane %v1692, 4
        %v1695 = vrot.slane %v1208, 5
        %v1696 = vsel %vm1675, %v1694, %v1695
        %v1697 = vrot.slane %v1612, 5
        %v1698 = vrot.slane %v1697, 4
        %v1699 = vrot.slane %v1181, 5
        %v1700 = vsel %vm1675, %v1698, %v1699
        %v1701 = vrot.slane %v1699, 4
        %v1702 = vrot.slane %v1209, 5
        %v1703 = vsel %vm1675, %v1701, %v1702
        %v1704 = vrot.slane %v1613, 5
        %v1705 = vrot.slane %v1704, 4
        %v1706 = vrot.slane %v1183, 5
        %v1707 = vsel %vm1675, %v1705, %v1706
        %v1708 = vrot.slane %v1706, 4
        %v1709 = vrot.slane %v1210, 5
        %v1710 = vsel %vm1675, %v1708, %v1709
        %v1711 = vrot.slane %v1614, 5
        %v1712 = vrot.slane %v1711, 4
        %v1713 = vrot.slane %v1185, 5
        %v1714 = vsel %vm1675, %v1712, %v1713
        %v1715 = vrot.slane %v1713, 4
        %v1716 = vrot.slane %v1211, 5
        %v1717 = vsel %vm1675, %v1715, %v1716
        %v1718 = vrot.slane %v1615, 5
        %v1719 = vrot.slane %v1718, 4
        %v1720 = vrot.slane %v1187, 5
        %v1721 = vsel %vm1675, %v1719, %v1720
        %v1722 = vrot.slane %v1720, 4
        %v1723 = vrot.slane %v1212, 5
        %v1724 = vsel %vm1675, %v1722, %v1723
        %v1725 = vrot.slane %v1616, 5
        %v1726 = vrot.slane %v1725, 4
        %v1727 = vrot.slane %v1189, 5
        %v1728 = vsel %vm1675, %v1726, %v1727
        %v1729 = vrot.slane %v1727, 4
        %v1730 = vrot.slane %v1213, 5
        %v1731 = vsel %vm1675, %v1729, %v1730
        %v1732 = vrot.slane %v1617, 5
        %v1733 = vrot.slane %v1732, 4
        %v1734 = vrot.slane %v1191, 5
        %v1735 = vsel %vm1675, %v1733, %v1734
        %v1736 = vrot.slane %v1734, 4
        %v1737 = vrot.slane %v1214, 5
        %v1738 = vsel %vm1675, %v1736, %v1737
        %v1739 = vrot.slane %v1618, 5
        %v1740 = vrot.slane %v1739, 4
        %v1741 = vrot.slane %v1193, 5
        %v1742 = vsel %vm1675, %v1740, %v1741
        %v1743 = vrot.slane %v1741, 4
        %v1744 = vrot.slane %v1215, 5
        %v1745 = vsel %vm1675, %v1743, %v1744
        %v1746 = vrot.slane %v1619, 5
        %v1747 = vrot.slane %v1746, 4
        %v1748 = vrot.slane %v1195, 5
        %v1749 = vsel %vm1675, %v1747, %v1748
        %v1750 = vrot.slane %v1748, 4
        %v1751 = vrot.slane %v1216, 5
        %v1752 = vsel %vm1675, %v1750, %v1751
        %v1753 = vrot.slane %v1620, 5
        %v1754 = vrot.slane %v1753, 4
        %v1755 = vrot.slane %v1197, 5
        %v1756 = vsel %vm1675, %v1754, %v1755
        %v1757 = vrot.slane %v1755, 4
        %v1758 = vrot.slane %v1217, 5
        %v1759 = vsel %vm1675, %v1757, %v1758
        %v1760 = vrot.slane %v1621, 5
        %v1761 = vrot.slane %v1760, 4
        %v1762 = vrot.slane %v1199, 5
        %v1763 = vsel %vm1675, %v1761, %v1762
        %v1764 = vrot.slane %v1762, 4
        %v1765 = vrot.slane %v1218, 5
        %v1766 = vsel %vm1675, %v1764, %v1765
        %v1767 = vrot.slane %v1622, 5
        %v1768 = vrot.slane %v1767, 4
        %v1769 = vrot.slane %v1201, 5
        %v1770 = vsel %vm1675, %v1768, %v1769
        %v1771 = vrot.slane %v1769, 4
        %v1772 = vrot.slane %v1219, 5
        %v1773 = vsel %vm1675, %v1771, %v1772
        %v1774 = vrot.slane %v1623, 5
        %v1775 = vrot.slane %v1774, 4
        %v1776 = vrot.slane %v1203, 5
        %v1777 = vsel %vm1675, %v1775, %v1776
        %v1778 = vrot.slane %v1776, 4
        %v1779 = vrot.slane %v1220, 5
        %v1780 = vsel %vm1675, %v1778, %v1779
        %v1781 = vrot.slane %v1624, 5
        %v1782 = vrot.slane %v1781, 4
        %v1783 = vrot.slane %v1205, 5
        %v1784 = vsel %vm1675, %v1782, %v1783
        %v1785 = vrot.slane %v1783, 4
        %v1786 = vrot.slane %v1221, 5
        %v1787 = vsel %vm1675, %v1785, %v1786
        %v1788 = vld [vmem:[%s1056] sm:$0xf]
        %v1789 = vld [vmem:[%s1056 + $0x4] sm:$0xf]
        %v1790 = vld [vmem:[%s1056 + $0xc] sm:$0xf]
        %v1791 = vld [vmem:[%s1056 + $0x10] sm:$0xf]
        %v1792 = vld [vmem:[%s1056 + $0x18] sm:$0xf]
        %v1793 = vld [vmem:[%s1056 + $0x1c] sm:$0xf]
        %v1794 = vld [vmem:[%s1056 + $0x24] sm:$0xf]
        %v1795 = vld [vmem:[%s1056 + $0x28] sm:$0xf]
        %v1796 = vld [vmem:[%s1056 + $0x30] sm:$0xf]
        %v1797 = vld [vmem:[%s1056 + $0x34] sm:$0xf]
        %v1798 = vld [vmem:[%s1056 + $0x3c] sm:$0xf]
        %v1799 = vld [vmem:[%s1056 + $0x40] sm:$0xf]
        %v1800 = vld [vmem:[%s1056 + $0x48] sm:$0xf]
        %v1801 = vld [vmem:[%s1056 + $0x4c] sm:$0xf]
        %v1802 = vld [vmem:[%s1056 + $0x54] sm:$0xf]
        %v1803 = vld [vmem:[%s1056 + $0x58] sm:$0xf]
        %v1804 = vld [vmem:[%s1056 + $0x60] sm:$0xf]
        %v1805 = vld [vmem:[%s1056 + $0x64] sm:$0xf]
        %v1806 = vld [vmem:[%s1056 + $0x6c] sm:$0xf]
        %v1807 = vld [vmem:[%s1056 + $0x70] sm:$0xf]
        %v1808 = vld [vmem:[%s1056 + $0x78] sm:$0xf]
        %v1809 = vld [vmem:[%s1056 + $0x7c] sm:$0xf]
        %v1810 = vld [vmem:[%s1056 + $0x84] sm:$0xf]
        %v1811 = vld [vmem:[%s1056 + $0x88] sm:$0xf]
        %v1812 = vld [vmem:[%s1056 + $0x90] sm:$0xf]
        %v1813 = vld [vmem:[%s1056 + $0x94] sm:$0xf]
        %v1814 = vld [vmem:[%s1056 + $0x9c] sm:$0xf]
        %v1815 = vld [vmem:[%s1056 + $0xa0] sm:$0xf]
        %v1816 = vld [vmem:[%s1056 + $0xa8] sm:$0xf]
        %v1817 = vld [vmem:[%s1056 + $0xac] sm:$0xf]
        %v1818 = vld [vmem:[%s1056 + $0xb4] sm:$0xf]
        %v1819 = vld [vmem:[%s1056 + $0xb8] sm:$0xf]
        %v1820 = vld [vmem:[%s1056 + $0x8] sm:$0x1]
        %v1821 = vld [vmem:[%s1056 + $0x14] sm:$0x1]
        %v1822 = vld [vmem:[%s1056 + $0x20] sm:$0x1]
        %v1823 = vld [vmem:[%s1056 + $0x2c] sm:$0x1]
        %v1824 = vld [vmem:[%s1056 + $0x38] sm:$0x1]
        %v1825 = vld [vmem:[%s1056 + $0x44] sm:$0x1]
        %v1826 = vld [vmem:[%s1056 + $0x50] sm:$0x1]
        %v1827 = vld [vmem:[%s1056 + $0x5c] sm:$0x1]
        %v1828 = vld [vmem:[%s1056 + $0x68] sm:$0x1]
        %v1829 = vld [vmem:[%s1056 + $0x74] sm:$0x1]
        %v1830 = vld [vmem:[%s1056 + $0x80] sm:$0x1]
        %v1831 = vld [vmem:[%s1056 + $0x8c] sm:$0x1]
        %v1832 = vld [vmem:[%s1056 + $0x98] sm:$0x1]
        %v1833 = vld [vmem:[%s1056 + $0xa4] sm:$0x1]
        %v1834 = vld [vmem:[%s1056 + $0xb0] sm:$0x1]
        %v1835 = vld [vmem:[%s1056 + $0xbc] sm:$0x1]
        %v1837 = vshrl.u32 %v1788, 16
        %v1839 = vrot.slane %v1837, 4
        %v1840 = vshll.u32 %v1788, 16
        %v1842 = vrot.slane %v1840, 5
        %v1843 = vor.u32 %v1839, %v1842
        %v1844 = vrot.slane %v1843, 4
        %v1846 = vshll.u32 %v1789, 16
        %v1848 = vrot.slane %v1846, 5
        %v1849 = vsel %vm1224, %v1844, %v1848
        %v1850 = vshrl.u32 %v1789, 16
        %v1852 = vrot.slane %v1850, 4
        %v1853 = vor.u32 %v1852, %v1848
        %v1854 = vrot.slane %v1853, 4
        %v1856 = vshll.u32 %v1820, 16
        %v1858 = vrot.slane %v1856, 5
        %v1859 = vsel %vm1224, %v1854, %v1858
        %v1861 = vshrl.u32 %v1790, 16
        %v1863 = vrot.slane %v1861, 4
        %v1864 = vshll.u32 %v1790, 16
        %v1866 = vrot.slane %v1864, 5
        %v1867 = vor.u32 %v1863, %v1866
        %v1868 = vrot.slane %v1867, 4
        %v1870 = vshll.u32 %v1791, 16
        %v1872 = vrot.slane %v1870, 5
        %v1873 = vsel %vm1224, %v1868, %v1872
        %v1874 = vshrl.u32 %v1791, 16
        %v1876 = vrot.slane %v1874, 4
        %v1877 = vor.u32 %v1876, %v1872
        %v1878 = vrot.slane %v1877, 4
        %v1880 = vshll.u32 %v1821, 16
        %v1882 = vrot.slane %v1880, 5
        %v1883 = vsel %vm1224, %v1878, %v1882
        %v1885 = vshrl.u32 %v1792, 16
        %v1887 = vrot.slane %v1885, 4
        %v1888 = vshll.u32 %v1792, 16
        %v1890 = vrot.slane %v1888, 5
        %v1891 = vor.u32 %v1887, %v1890
        %v1892 = vrot.slane %v1891, 4
        %v1894 = vshll.u32 %v1793, 16
        %v1896 = vrot.slane %v1894, 5
        %v1897 = vsel %vm1224, %v1892, %v1896
        %v1898 = vshrl.u32 %v1793, 16
        %v1900 = vrot.slane %v1898, 4
        %v1901 = vor.u32 %v1900, %v1896
        %v1902 = vrot.slane %v1901, 4
        %v1904 = vshll.u32 %v1822, 16
        %v1906 = vrot.slane %v1904, 5
        %v1907 = vsel %vm1224, %v1902, %v1906
        %v1909 = vshrl.u32 %v1794, 16
        %v1911 = vrot.slane %v1909, 4
        %v1912 = vshll.u32 %v1794, 16
        %v1914 = vrot.slane %v1912, 5
        %v1915 = vor.u32 %v1911, %v1914
        %v1916 = vrot.slane %v1915, 4
        %v1918 = vshll.u32 %v1795, 16
        %v1920 = vrot.slane %v1918, 5
        %v1921 = vsel %vm1224, %v1916, %v1920
        %v1922 = vshrl.u32 %v1795, 16
        %v1924 = vrot.slane %v1922, 4
        %v1925 = vor.u32 %v1924, %v1920
        %v1926 = vrot.slane %v1925, 4
        %v1928 = vshll.u32 %v1823, 16
        %v1930 = vrot.slane %v1928, 5
        %v1931 = vsel %vm1224, %v1926, %v1930
        %v1933 = vshrl.u32 %v1796, 16
        %v1935 = vrot.slane %v1933, 4
        %v1936 = vshll.u32 %v1796, 16
        %v1938 = vrot.slane %v1936, 5
        %v1939 = vor.u32 %v1935, %v1938
        %v1940 = vrot.slane %v1939, 4
        %v1942 = vshll.u32 %v1797, 16
        %v1944 = vrot.slane %v1942, 5
        %v1945 = vsel %vm1224, %v1940, %v1944
        %v1946 = vshrl.u32 %v1797, 16
        %v1948 = vrot.slane %v1946, 4
        %v1949 = vor.u32 %v1948, %v1944
        %v1950 = vrot.slane %v1949, 4
        %v1952 = vshll.u32 %v1824, 16
        %v1954 = vrot.slane %v1952, 5
        %v1955 = vsel %vm1224, %v1950, %v1954
        %v1957 = vshrl.u32 %v1798, 16
        %v1959 = vrot.slane %v1957, 4
        %v1960 = vshll.u32 %v1798, 16
        %v1962 = vrot.slane %v1960, 5
        %v1963 = vor.u32 %v1959, %v1962
        %v1964 = vrot.slane %v1963, 4
        %v1966 = vshll.u32 %v1799, 16
        %v1968 = vrot.slane %v1966, 5
        %v1969 = vsel %vm1224, %v1964, %v1968
        %v1970 = vshrl.u32 %v1799, 16
        %v1972 = vrot.slane %v1970, 4
        %v1973 = vor.u32 %v1972, %v1968
        %v1974 = vrot.slane %v1973, 4
        %v1976 = vshll.u32 %v1825, 16
        %v1978 = vrot.slane %v1976, 5
        %v1979 = vsel %vm1224, %v1974, %v1978
        %v1981 = vshrl.u32 %v1800, 16
        %v1983 = vrot.slane %v1981, 4
        %v1984 = vshll.u32 %v1800, 16
        %v1986 = vrot.slane %v1984, 5
        %v1987 = vor.u32 %v1983, %v1986
        %v1988 = vrot.slane %v1987, 4
        %v1990 = vshll.u32 %v1801, 16
        %v1992 = vrot.slane %v1990, 5
        %v1993 = vsel %vm1224, %v1988, %v1992
        %v1994 = vshrl.u32 %v1801, 16
        %v1996 = vrot.slane %v1994, 4
        %v1997 = vor.u32 %v1996, %v1992
        %v1998 = vrot.slane %v1997, 4
        %v2000 = vshll.u32 %v1826, 16
        %v2002 = vrot.slane %v2000, 5
        %v2003 = vsel %vm1224, %v1998, %v2002
        %v2005 = vshrl.u32 %v1802, 16
        %v2007 = vrot.slane %v2005, 4
        %v2008 = vshll.u32 %v1802, 16
        %v2010 = vrot.slane %v2008, 5
        %v2011 = vor.u32 %v2007, %v2010
        %v2012 = vrot.slane %v2011, 4
        %v2014 = vshll.u32 %v1803, 16
        %v2016 = vrot.slane %v2014, 5
        %v2017 = vsel %vm1224, %v2012, %v2016
        %v2018 = vshrl.u32 %v1803, 16
        %v2020 = vrot.slane %v2018, 4
        %v2021 = vor.u32 %v2020, %v2016
        %v2022 = vrot.slane %v2021, 4
        %v2024 = vshll.u32 %v1827, 16
        %v2026 = vrot.slane %v2024, 5
        %v2027 = vsel %vm1224, %v2022, %v2026
        %v2029 = vshrl.u32 %v1804, 16
        %v2031 = vrot.slane %v2029, 4
        %v2032 = vshll.u32 %v1804, 16
        %v2034 = vrot.slane %v2032, 5
        %v2035 = vor.u32 %v2031, %v2034
        %v2036 = vrot.slane %v2035, 4
        %v2038 = vshll.u32 %v1805, 16
        %v2040 = vrot.slane %v2038, 5
        %v2041 = vsel %vm1224, %v2036, %v2040
        %v2042 = vshrl.u32 %v1805, 16
        %v2044 = vrot.slane %v2042, 4
        %v2045 = vor.u32 %v2044, %v2040
        %v2046 = vrot.slane %v2045, 4
        %v2048 = vshll.u32 %v1828, 16
        %v2050 = vrot.slane %v2048, 5
        %v2051 = vsel %vm1224, %v2046, %v2050
        %v2053 = vshrl.u32 %v1806, 16
        %v2055 = vrot.slane %v2053, 4
        %v2056 = vshll.u32 %v1806, 16
        %v2058 = vrot.slane %v2056, 5
        %v2059 = vor.u32 %v2055, %v2058
        %v2060 = vrot.slane %v2059, 4
        %v2062 = vshll.u32 %v1807, 16
        %v2064 = vrot.slane %v2062, 5
        %v2065 = vsel %vm1224, %v2060, %v2064
        %v2066 = vshrl.u32 %v1807, 16
        %v2068 = vrot.slane %v2066, 4
        %v2069 = vor.u32 %v2068, %v2064
        %v2070 = vrot.slane %v2069, 4
        %v2072 = vshll.u32 %v1829, 16
        %v2074 = vrot.slane %v2072, 5
        %v2075 = vsel %vm1224, %v2070, %v2074
        %v2077 = vshrl.u32 %v1808, 16
        %v2079 = vrot.slane %v2077, 4
        %v2080 = vshll.u32 %v1808, 16
        %v2082 = vrot.slane %v2080, 5
        %v2083 = vor.u32 %v2079, %v2082
        %v2084 = vrot.slane %v2083, 4
        %v2086 = vshll.u32 %v1809, 16
        %v2088 = vrot.slane %v2086, 5
        %v2089 = vsel %vm1224, %v2084, %v2088
        %v2090 = vshrl.u32 %v1809, 16
        %v2092 = vrot.slane %v2090, 4
        %v2093 = vor.u32 %v2092, %v2088
        %v2094 = vrot.slane %v2093, 4
        %v2096 = vshll.u32 %v1830, 16
        %v2098 = vrot.slane %v2096, 5
        %v2099 = vsel %vm1224, %v2094, %v2098
        %v2101 = vshrl.u32 %v1810, 16
        %v2103 = vrot.slane %v2101, 4
        %v2104 = vshll.u32 %v1810, 16
        %v2106 = vrot.slane %v2104, 5
        %v2107 = vor.u32 %v2103, %v2106
        %v2108 = vrot.slane %v2107, 4
        %v2110 = vshll.u32 %v1811, 16
        %v2112 = vrot.slane %v2110, 5
        %v2113 = vsel %vm1224, %v2108, %v2112
        %v2114 = vshrl.u32 %v1811, 16
        %v2116 = vrot.slane %v2114, 4
        %v2117 = vor.u32 %v2116, %v2112
        %v2118 = vrot.slane %v2117, 4
        %v2120 = vshll.u32 %v1831, 16
        %v2122 = vrot.slane %v2120, 5
        %v2123 = vsel %vm1224, %v2118, %v2122
        %v2125 = vshrl.u32 %v1812, 16
        %v2127 = vrot.slane %v2125, 4
        %v2128 = vshll.u32 %v1812, 16
        %v2130 = vrot.slane %v2128, 5
        %v2131 = vor.u32 %v2127, %v2130
        %v2132 = vrot.slane %v2131, 4
        %v2134 = vshll.u32 %v1813, 16
        %v2136 = vrot.slane %v2134, 5
        %v2137 = vsel %vm1224, %v2132, %v2136
        %v2138 = vshrl.u32 %v1813, 16
        %v2140 = vrot.slane %v2138, 4
        %v2141 = vor.u32 %v2140, %v2136
        %v2142 = vrot.slane %v2141, 4
        %v2144 = vshll.u32 %v1832, 16
        %v2146 = vrot.slane %v2144, 5
        %v2147 = vsel %vm1224, %v2142, %v2146
        %v2149 = vshrl.u32 %v1814, 16
        %v2151 = vrot.slane %v2149, 4
        %v2152 = vshll.u32 %v1814, 16
        %v2154 = vrot.slane %v2152, 5
        %v2155 = vor.u32 %v2151, %v2154
        %v2156 = vrot.slane %v2155, 4
        %v2158 = vshll.u32 %v1815, 16
        %v2160 = vrot.slane %v2158, 5
        %v2161 = vsel %vm1224, %v2156, %v2160
        %v2162 = vshrl.u32 %v1815, 16
        %v2164 = vrot.slane %v2162, 4
        %v2165 = vor.u32 %v2164, %v2160
        %v2166 = vrot.slane %v2165, 4
        %v2168 = vshll.u32 %v1833, 16
        %v2170 = vrot.slane %v2168, 5
        %v2171 = vsel %vm1224, %v2166, %v2170
        %v2173 = vshrl.u32 %v1816, 16
        %v2175 = vrot.slane %v2173, 4
        %v2176 = vshll.u32 %v1816, 16
        %v2178 = vrot.slane %v2176, 5
        %v2179 = vor.u32 %v2175, %v2178
        %v2180 = vrot.slane %v2179, 4
        %v2182 = vshll.u32 %v1817, 16
        %v2184 = vrot.slane %v2182, 5
        %v2185 = vsel %vm1224, %v2180, %v2184
        %v2186 = vshrl.u32 %v1817, 16
        %v2188 = vrot.slane %v2186, 4
        %v2189 = vor.u32 %v2188, %v2184
        %v2190 = vrot.slane %v2189, 4
        %v2192 = vshll.u32 %v1834, 16
        %v2194 = vrot.slane %v2192, 5
        %v2195 = vsel %vm1224, %v2190, %v2194
        %v2197 = vshrl.u32 %v1818, 16
        %v2199 = vrot.slane %v2197, 4
        %v2200 = vshll.u32 %v1818, 16
        %v2202 = vrot.slane %v2200, 5
        %v2203 = vor.u32 %v2199, %v2202
        %v2204 = vrot.slane %v2203, 4
        %v2206 = vshll.u32 %v1819, 16
        %v2208 = vrot.slane %v2206, 5
        %v2209 = vsel %vm1224, %v2204, %v2208
        %v2210 = vshrl.u32 %v1819, 16
        %v2212 = vrot.slane %v2210, 4
        %v2213 = vor.u32 %v2212, %v2208
        %v2214 = vrot.slane %v2213, 4
        %v2216 = vshll.u32 %v1835, 16
        %v2218 = vrot.slane %v2216, 5
        %v2219 = vsel %vm1224, %v2214, %v2218
        %v2220 = vld [vmem:[%s1056] sm:$0xe]
        %v2221 = vld [vmem:[%s1056 + $0xc] sm:$0xe]
        %v2222 = vld [vmem:[%s1056 + $0x18] sm:$0xe]
        %v2223 = vld [vmem:[%s1056 + $0x24] sm:$0xe]
        %v2224 = vld [vmem:[%s1056 + $0x30] sm:$0xe]
        %v2225 = vld [vmem:[%s1056 + $0x3c] sm:$0xe]
        %v2226 = vld [vmem:[%s1056 + $0x48] sm:$0xe]
        %v2227 = vld [vmem:[%s1056 + $0x54] sm:$0xe]
        %v2228 = vld [vmem:[%s1056 + $0x60] sm:$0xe]
        %v2229 = vld [vmem:[%s1056 + $0x6c] sm:$0xe]
        %v2230 = vld [vmem:[%s1056 + $0x78] sm:$0xe]
        %v2231 = vld [vmem:[%s1056 + $0x84] sm:$0xe]
        %v2232 = vld [vmem:[%s1056 + $0x90] sm:$0xe]
        %v2233 = vld [vmem:[%s1056 + $0x9c] sm:$0xe]
        %v2234 = vld [vmem:[%s1056 + $0xa8] sm:$0xe]
        %v2235 = vld [vmem:[%s1056 + $0xb4] sm:$0xe]
        %v2284 = vrot.slane %v2220, 5
        %v2285 = vrot.slane %v2284, 4
        %v2286 = vrot.slane %v1789, 5
        %v2287 = vsel %vm1675, %v2285, %v2286
        %v2288 = vrot.slane %v2286, 4
        %v2289 = vrot.slane %v1820, 5
        %v2290 = vsel %vm1675, %v2288, %v2289
        %v2291 = vrot.slane %v2221, 5
        %v2292 = vrot.slane %v2291, 4
        %v2293 = vrot.slane %v1791, 5
        %v2294 = vsel %vm1675, %v2292, %v2293
        %v2295 = vrot.slane %v2293, 4
        %v2296 = vrot.slane %v1821, 5
        %v2297 = vsel %vm1675, %v2295, %v2296
        %v2298 = vrot.slane %v2222, 5
        %v2299 = vrot.slane %v2298, 4
        %v2300 = vrot.slane %v1793, 5
        %v2301 = vsel %vm1675, %v2299, %v2300
        %v2302 = vrot.slane %v2300, 4
        %v2303 = vrot.slane %v1822, 5
        %v2304 = vsel %vm1675, %v2302, %v2303
        %v2305 = vrot.slane %v2223, 5
        %v2306 = vrot.slane %v2305, 4
        %v2307 = vrot.slane %v1795, 5
        %v2308 = vsel %vm1675, %v2306, %v2307
        %v2309 = vrot.slane %v2307, 4
        %v2310 = vrot.slane %v1823, 5
        %v2311 = vsel %vm1675, %v2309, %v2310
        %v2312 = vrot.slane %v2224, 5
        %v2313 = vrot.slane %v2312, 4
        %v2314 = vrot.slane %v1797, 5
        %v2315 = vsel %vm1675, %v2313, %v2314
        %v2316 = vrot.slane %v2314, 4
        %v2317 = vrot.slane %v1824, 5
        %v2318 = vsel %vm1675, %v2316, %v2317
        %v2319 = vrot.slane %v2225, 5
        %v2320 = vrot.slane %v2319, 4
        %v2321 = vrot.slane %v1799, 5
        %v2322 = vsel %vm1675, %v2320, %v2321
        %v2323 = vrot.slane %v2321, 4
        %v2324 = vrot.slane %v1825, 5
        %v2325 = vsel %vm1675, %v2323, %v2324
        %v2326 = vrot.slane %v2226, 5
        %v2327 = vrot.slane %v2326, 4
        %v2328 = vrot.slane %v1801, 5
        %v2329 = vsel %vm1675, %v2327, %v2328
        %v2330 = vrot.slane %v2328, 4
        %v2331 = vrot.slane %v1826, 5
        %v2332 = vsel %vm1675, %v2330, %v2331
        %v2333 = vrot.slane %v2227, 5
        %v2334 = vrot.slane %v2333, 4
        %v2335 = vrot.slane %v1803, 5
        %v2336 = vsel %vm1675, %v2334, %v2335
        %v2337 = vrot.slane %v2335, 4
        %v2338 = vrot.slane %v1827, 5
        %v2339 = vsel %vm1675, %v2337, %v2338
        %v2340 = vrot.slane %v2228, 5
        %v2341 = vrot.slane %v2340, 4
        %v2342 = vrot.slane %v1805, 5
        %v2343 = vsel %vm1675, %v2341, %v2342
        %v2344 = vrot.slane %v2342, 4
        %v2345 = vrot.slane %v1828, 5
        %v2346 = vsel %vm1675, %v2344, %v2345
        %v2347 = vrot.slane %v2229, 5
        %v2348 = vrot.slane %v2347, 4
        %v2349 = vrot.slane %v1807, 5
        %v2350 = vsel %vm1675, %v2348, %v2349
        %v2351 = vrot.slane %v2349, 4
        %v2352 = vrot.slane %v1829, 5
        %v2353 = vsel %vm1675, %v2351, %v2352
        %v2354 = vrot.slane %v2230, 5
        %v2355 = vrot.slane %v2354, 4
        %v2356 = vrot.slane %v1809, 5
        %v2357 = vsel %vm1675, %v2355, %v2356
        %v2358 = vrot.slane %v2356, 4
        %v2359 = vrot.slane %v1830, 5
        %v2360 = vsel %vm1675, %v2358, %v2359
        %v2361 = vrot.slane %v2231, 5
        %v2362 = vrot.slane %v2361, 4
        %v2363 = vrot.slane %v1811, 5
        %v2364 = vsel %vm1675, %v2362, %v2363
        %v2365 = vrot.slane %v2363, 4
        %v2366 = vrot.slane %v1831, 5
        %v2367 = vsel %vm1675, %v2365, %v2366
        %v2368 = vrot.slane %v2232, 5
        %v2369 = vrot.slane %v2368, 4
        %v2370 = vrot.slane %v1813, 5
        %v2371 = vsel %vm1675, %v2369, %v2370
        %v2372 = vrot.slane %v2370, 4
        %v2373 = vrot.slane %v1832, 5
        %v2374 = vsel %vm1675, %v2372, %v2373
        %v2375 = vrot.slane %v2233, 5
        %v2376 = vrot.slane %v2375, 4
        %v2377 = vrot.slane %v1815, 5
        %v2378 = vsel %vm1675, %v2376, %v2377
        %v2379 = vrot.slane %v2377, 4
        %v2380 = vrot.slane %v1833, 5
        %v2381 = vsel %vm1675, %v2379, %v2380
        %v2382 = vrot.slane %v2234, 5
        %v2383 = vrot.slane %v2382, 4
        %v2384 = vrot.slane %v1817, 5
        %v2385 = vsel %vm1675, %v2383, %v2384
        %v2386 = vrot.slane %v2384, 4
        %v2387 = vrot.slane %v1834, 5
        %v2388 = vsel %vm1675, %v2386, %v2387
        %v2389 = vrot.slane %v2235, 5
        %v2390 = vrot.slane %v2389, 4
        %v2391 = vrot.slane %v1819, 5
        %v2392 = vsel %vm1675, %v2390, %v2391
        %v2393 = vrot.slane %v2391, 4
        %v2394 = vrot.slane %v1835, 5
        %v2395 = vsel %vm1675, %v2393, %v2394
        %s2396 = scalar_lea.vmem [#allocation2], 24
        %v2397 = vld [vmem:[%s2396] sm:$0xf]
        %v2398 = vld [vmem:[%s2396 + $0x4] sm:$0xf]
        %v2399 = vld [vmem:[%s2396 + $0xc] sm:$0xf]
        %v2400 = vld [vmem:[%s2396 + $0x10] sm:$0xf]
        %v2401 = vld [vmem:[%s2396 + $0x18] sm:$0xf]
        %v2402 = vld [vmem:[%s2396 + $0x1c] sm:$0xf]
        %v2403 = vld [vmem:[%s2396 + $0x24] sm:$0xf]
        %v2404 = vld [vmem:[%s2396 + $0x28] sm:$0xf]
        %v2405 = vld [vmem:[%s2396 + $0x30] sm:$0xf]
        %v2406 = vld [vmem:[%s2396 + $0x34] sm:$0xf]
        %v2407 = vld [vmem:[%s2396 + $0x3c] sm:$0xf]
        %v2408 = vld [vmem:[%s2396 + $0x40] sm:$0xf]
        %v2409 = vld [vmem:[%s2396 + $0x48] sm:$0xf]
        %v2410 = vld [vmem:[%s2396 + $0x4c] sm:$0xf]
        %v2411 = vld [vmem:[%s2396 + $0x54] sm:$0xf]
        %v2412 = vld [vmem:[%s2396 + $0x58] sm:$0xf]
        %v2413 = vld [vmem:[%s2396 + $0x60] sm:$0xf]
        %v2414 = vld [vmem:[%s2396 + $0x64] sm:$0xf]
        %v2415 = vld [vmem:[%s2396 + $0x6c] sm:$0xf]
        %v2416 = vld [vmem:[%s2396 + $0x70] sm:$0xf]
        %v2417 = vld [vmem:[%s2396 + $0x78] sm:$0xf]
        %v2418 = vld [vmem:[%s2396 + $0x7c] sm:$0xf]
        %v2419 = vld [vmem:[%s2396 + $0x84] sm:$0xf]
        %v2420 = vld [vmem:[%s2396 + $0x88] sm:$0xf]
        %v2421 = vld [vmem:[%s2396 + $0x90] sm:$0xf]
        %v2422 = vld [vmem:[%s2396 + $0x94] sm:$0xf]
        %v2423 = vld [vmem:[%s2396 + $0x9c] sm:$0xf]
        %v2424 = vld [vmem:[%s2396 + $0xa0] sm:$0xf]
        %v2425 = vld [vmem:[%s2396 + $0xa8] sm:$0xf]
        %v2426 = vld [vmem:[%s2396 + $0xac] sm:$0xf]
        %v2427 = vld [vmem:[%s2396 + $0xb4] sm:$0xf]
        %v2428 = vld [vmem:[%s2396 + $0xb8] sm:$0xf]
        %v2429 = vld [vmem:[%s2396 + $0x8] sm:$0x1]
        %v2430 = vld [vmem:[%s2396 + $0x14] sm:$0x1]
        %v2431 = vld [vmem:[%s2396 + $0x20] sm:$0x1]
        %v2432 = vld [vmem:[%s2396 + $0x2c] sm:$0x1]
        %v2433 = vld [vmem:[%s2396 + $0x38] sm:$0x1]
        %v2434 = vld [vmem:[%s2396 + $0x44] sm:$0x1]
        %v2435 = vld [vmem:[%s2396 + $0x50] sm:$0x1]
        %v2436 = vld [vmem:[%s2396 + $0x5c] sm:$0x1]
        %v2437 = vld [vmem:[%s2396 + $0x68] sm:$0x1]
        %v2438 = vld [vmem:[%s2396 + $0x74] sm:$0x1]
        %v2439 = vld [vmem:[%s2396 + $0x80] sm:$0x1]
        %v2440 = vld [vmem:[%s2396 + $0x8c] sm:$0x1]
        %v2441 = vld [vmem:[%s2396 + $0x98] sm:$0x1]
        %v2442 = vld [vmem:[%s2396 + $0xa4] sm:$0x1]
        %v2443 = vld [vmem:[%s2396 + $0xb0] sm:$0x1]
        %v2444 = vld [vmem:[%s2396 + $0xbc] sm:$0x1]
        %v2446 = vshrl.u32 %v2397, 16
        %v2448 = vrot.slane %v2446, 4
        %v2449 = vshll.u32 %v2397, 16
        %v2451 = vrot.slane %v2449, 5
        %v2452 = vor.u32 %v2448, %v2451
        %v2453 = vrot.slane %v2452, 4
        %v2455 = vshll.u32 %v2398, 16
        %v2457 = vrot.slane %v2455, 5
        %v2458 = vsel %vm1224, %v2453, %v2457
        %v2459 = vshrl.u32 %v2398, 16
        %v2461 = vrot.slane %v2459, 4
        %v2462 = vor.u32 %v2461, %v2457
        %v2463 = vrot.slane %v2462, 4
        %v2465 = vshll.u32 %v2429, 16
        %v2467 = vrot.slane %v2465, 5
        %v2468 = vsel %vm1224, %v2463, %v2467
        %v2470 = vshrl.u32 %v2399, 16
        %v2472 = vrot.slane %v2470, 4
        %v2473 = vshll.u32 %v2399, 16
        %v2475 = vrot.slane %v2473, 5
        %v2476 = vor.u32 %v2472, %v2475
        %v2477 = vrot.slane %v2476, 4
        %v2479 = vshll.u32 %v2400, 16
        %v2481 = vrot.slane %v2479, 5
        %v2482 = vsel %vm1224, %v2477, %v2481
        %v2483 = vshrl.u32 %v2400, 16
        %v2485 = vrot.slane %v2483, 4
        %v2486 = vor.u32 %v2485, %v2481
        %v2487 = vrot.slane %v2486, 4
        %v2489 = vshll.u32 %v2430, 16
        %v2491 = vrot.slane %v2489, 5
        %v2492 = vsel %vm1224, %v2487, %v2491
        %v2494 = vshrl.u32 %v2401, 16
        %v2496 = vrot.slane %v2494, 4
        %v2497 = vshll.u32 %v2401, 16
        %v2499 = vrot.slane %v2497, 5
        %v2500 = vor.u32 %v2496, %v2499
        %v2501 = vrot.slane %v2500, 4
        %v2503 = vshll.u32 %v2402, 16
        %v2505 = vrot.slane %v2503, 5
        %v2506 = vsel %vm1224, %v2501, %v2505
        %v2507 = vshrl.u32 %v2402, 16
        %v2509 = vrot.slane %v2507, 4
        %v2510 = vor.u32 %v2509, %v2505
        %v2511 = vrot.slane %v2510, 4
        %v2513 = vshll.u32 %v2431, 16
        %v2515 = vrot.slane %v2513, 5
        %v2516 = vsel %vm1224, %v2511, %v2515
        %v2518 = vshrl.u32 %v2403, 16
        %v2520 = vrot.slane %v2518, 4
        %v2521 = vshll.u32 %v2403, 16
        %v2523 = vrot.slane %v2521, 5
        %v2524 = vor.u32 %v2520, %v2523
        %v2525 = vrot.slane %v2524, 4
        %v2527 = vshll.u32 %v2404, 16
        %v2529 = vrot.slane %v2527, 5
        %v2530 = vsel %vm1224, %v2525, %v2529
        %v2531 = vshrl.u32 %v2404, 16
        %v2533 = vrot.slane %v2531, 4
        %v2534 = vor.u32 %v2533, %v2529
        %v2535 = vrot.slane %v2534, 4
        %v2537 = vshll.u32 %v2432, 16
        %v2539 = vrot.slane %v2537, 5
        %v2540 = vsel %vm1224, %v2535, %v2539
        %v2542 = vshrl.u32 %v2405, 16
        %v2544 = vrot.slane %v2542, 4
        %v2545 = vshll.u32 %v2405, 16
        %v2547 = vrot.slane %v2545, 5
        %v2548 = vor.u32 %v2544, %v2547
        %v2549 = vrot.slane %v2548, 4
        %v2551 = vshll.u32 %v2406, 16
        %v2553 = vrot.slane %v2551, 5
        %v2554 = vsel %vm1224, %v2549, %v2553
        %v2555 = vshrl.u32 %v2406, 16
        %v2557 = vrot.slane %v2555, 4
        %v2558 = vor.u32 %v2557, %v2553
        %v2559 = vrot.slane %v2558, 4
        %v2561 = vshll.u32 %v2433, 16
        %v2563 = vrot.slane %v2561, 5
        %v2564 = vsel %vm1224, %v2559, %v2563
        %v2566 = vshrl.u32 %v2407, 16
        %v2568 = vrot.slane %v2566, 4
        %v2569 = vshll.u32 %v2407, 16
        %v2571 = vrot.slane %v2569, 5
        %v2572 = vor.u32 %v2568, %v2571
        %v2573 = vrot.slane %v2572, 4
        %v2575 = vshll.u32 %v2408, 16
        %v2577 = vrot.slane %v2575, 5
        %v2578 = vsel %vm1224, %v2573, %v2577
        %v2579 = vshrl.u32 %v2408, 16
        %v2581 = vrot.slane %v2579, 4
        %v2582 = vor.u32 %v2581, %v2577
        %v2583 = vrot.slane %v2582, 4
        %v2585 = vshll.u32 %v2434, 16
        %v2587 = vrot.slane %v2585, 5
        %v2588 = vsel %vm1224, %v2583, %v2587
        %v2590 = vshrl.u32 %v2409, 16
        %v2592 = vrot.slane %v2590, 4
        %v2593 = vshll.u32 %v2409, 16
        %v2595 = vrot.slane %v2593, 5
        %v2596 = vor.u32 %v2592, %v2595
        %v2597 = vrot.slane %v2596, 4
        %v2599 = vshll.u32 %v2410, 16
        %v2601 = vrot.slane %v2599, 5
        %v2602 = vsel %vm1224, %v2597, %v2601
        %v2603 = vshrl.u32 %v2410, 16
        %v2605 = vrot.slane %v2603, 4
        %v2606 = vor.u32 %v2605, %v2601
        %v2607 = vrot.slane %v2606, 4
        %v2609 = vshll.u32 %v2435, 16
        %v2611 = vrot.slane %v2609, 5
        %v2612 = vsel %vm1224, %v2607, %v2611
        %v2614 = vshrl.u32 %v2411, 16
        %v2616 = vrot.slane %v2614, 4
        %v2617 = vshll.u32 %v2411, 16
        %v2619 = vrot.slane %v2617, 5
        %v2620 = vor.u32 %v2616, %v2619
        %v2621 = vrot.slane %v2620, 4
        %v2623 = vshll.u32 %v2412, 16
        %v2625 = vrot.slane %v2623, 5
        %v2626 = vsel %vm1224, %v2621, %v2625
        %v2627 = vshrl.u32 %v2412, 16
        %v2629 = vrot.slane %v2627, 4
        %v2630 = vor.u32 %v2629, %v2625
        %v2631 = vrot.slane %v2630, 4
        %v2633 = vshll.u32 %v2436, 16
        %v2635 = vrot.slane %v2633, 5
        %v2636 = vsel %vm1224, %v2631, %v2635
        %v2638 = vshrl.u32 %v2413, 16
        %v2640 = vrot.slane %v2638, 4
        %v2641 = vshll.u32 %v2413, 16
        %v2643 = vrot.slane %v2641, 5
        %v2644 = vor.u32 %v2640, %v2643
        %v2645 = vrot.slane %v2644, 4
        %v2647 = vshll.u32 %v2414, 16
        %v2649 = vrot.slane %v2647, 5
        %v2650 = vsel %vm1224, %v2645, %v2649
        %v2651 = vshrl.u32 %v2414, 16
        %v2653 = vrot.slane %v2651, 4
        %v2654 = vor.u32 %v2653, %v2649
        %v2655 = vrot.slane %v2654, 4
        %v2657 = vshll.u32 %v2437, 16
        %v2659 = vrot.slane %v2657, 5
        %v2660 = vsel %vm1224, %v2655, %v2659
        %v2662 = vshrl.u32 %v2415, 16
        %v2664 = vrot.slane %v2662, 4
        %v2665 = vshll.u32 %v2415, 16
        %v2667 = vrot.slane %v2665, 5
        %v2668 = vor.u32 %v2664, %v2667
        %v2669 = vrot.slane %v2668, 4
        %v2671 = vshll.u32 %v2416, 16
        %v2673 = vrot.slane %v2671, 5
        %v2674 = vsel %vm1224, %v2669, %v2673
        %v2675 = vshrl.u32 %v2416, 16
        %v2677 = vrot.slane %v2675, 4
        %v2678 = vor.u32 %v2677, %v2673
        %v2679 = vrot.slane %v2678, 4
        %v2681 = vshll.u32 %v2438, 16
        %v2683 = vrot.slane %v2681, 5
        %v2684 = vsel %vm1224, %v2679, %v2683
        %v2686 = vshrl.u32 %v2417, 16
        %v2688 = vrot.slane %v2686, 4
        %v2689 = vshll.u32 %v2417, 16
        %v2691 = vrot.slane %v2689, 5
        %v2692 = vor.u32 %v2688, %v2691
        %v2693 = vrot.slane %v2692, 4
        %v2695 = vshll.u32 %v2418, 16
        %v2697 = vrot.slane %v2695, 5
        %v2698 = vsel %vm1224, %v2693, %v2697
        %v2699 = vshrl.u32 %v2418, 16
        %v2701 = vrot.slane %v2699, 4
        %v2702 = vor.u32 %v2701, %v2697
        %v2703 = vrot.slane %v2702, 4
        %v2705 = vshll.u32 %v2439, 16
        %v2707 = vrot.slane %v2705, 5
        %v2708 = vsel %vm1224, %v2703, %v2707
        %v2710 = vshrl.u32 %v2419, 16
        %v2712 = vrot.slane %v2710, 4
        %v2713 = vshll.u32 %v2419, 16
        %v2715 = vrot.slane %v2713, 5
        %v2716 = vor.u32 %v2712, %v2715
        %v2717 = vrot.slane %v2716, 4
        %v2719 = vshll.u32 %v2420, 16
        %v2721 = vrot.slane %v2719, 5
        %v2722 = vsel %vm1224, %v2717, %v2721
        %v2723 = vshrl.u32 %v2420, 16
        %v2725 = vrot.slane %v2723, 4
        %v2726 = vor.u32 %v2725, %v2721
        %v2727 = vrot.slane %v2726, 4
        %v2729 = vshll.u32 %v2440, 16
        %v2731 = vrot.slane %v2729, 5
        %v2732 = vsel %vm1224, %v2727, %v2731
        %v2734 = vshrl.u32 %v2421, 16
        %v2736 = vrot.slane %v2734, 4
        %v2737 = vshll.u32 %v2421, 16
        %v2739 = vrot.slane %v2737, 5
        %v2740 = vor.u32 %v2736, %v2739
        %v2741 = vrot.slane %v2740, 4
        %v2743 = vshll.u32 %v2422, 16
        %v2745 = vrot.slane %v2743, 5
        %v2746 = vsel %vm1224, %v2741, %v2745
        %v2747 = vshrl.u32 %v2422, 16
        %v2749 = vrot.slane %v2747, 4
        %v2750 = vor.u32 %v2749, %v2745
        %v2751 = vrot.slane %v2750, 4
        %v2753 = vshll.u32 %v2441, 16
        %v2755 = vrot.slane %v2753, 5
        %v2756 = vsel %vm1224, %v2751, %v2755
        %v2758 = vshrl.u32 %v2423, 16
        %v2760 = vrot.slane %v2758, 4
        %v2761 = vshll.u32 %v2423, 16
        %v2763 = vrot.slane %v2761, 5
        %v2764 = vor.u32 %v2760, %v2763
        %v2765 = vrot.slane %v2764, 4
        %v2767 = vshll.u32 %v2424, 16
        %v2769 = vrot.slane %v2767, 5
        %v2770 = vsel %vm1224, %v2765, %v2769
        %v2771 = vshrl.u32 %v2424, 16
        %v2773 = vrot.slane %v2771, 4
        %v2774 = vor.u32 %v2773, %v2769
        %v2775 = vrot.slane %v2774, 4
        %v2777 = vshll.u32 %v2442, 16
        %v2779 = vrot.slane %v2777, 5
        %v2780 = vsel %vm1224, %v2775, %v2779
        %v2782 = vshrl.u32 %v2425, 16
        %v2784 = vrot.slane %v2782, 4
        %v2785 = vshll.u32 %v2425, 16
        %v2787 = vrot.slane %v2785, 5
        %v2788 = vor.u32 %v2784, %v2787
        %v2789 = vrot.slane %v2788, 4
        %v2791 = vshll.u32 %v2426, 16
        %v2793 = vrot.slane %v2791, 5
        %v2794 = vsel %vm1224, %v2789, %v2793
        %v2795 = vshrl.u32 %v2426, 16
        %v2797 = vrot.slane %v2795, 4
        %v2798 = vor.u32 %v2797, %v2793
        %v2799 = vrot.slane %v2798, 4
        %v2801 = vshll.u32 %v2443, 16
        %v2803 = vrot.slane %v2801, 5
        %v2804 = vsel %vm1224, %v2799, %v2803
        %v2806 = vshrl.u32 %v2427, 16
        %v2808 = vrot.slane %v2806, 4
        %v2809 = vshll.u32 %v2427, 16
        %v2811 = vrot.slane %v2809, 5
        %v2812 = vor.u32 %v2808, %v2811
        %v2813 = vrot.slane %v2812, 4
        %v2815 = vshll.u32 %v2428, 16
        %v2817 = vrot.slane %v2815, 5
        %v2818 = vsel %vm1224, %v2813, %v2817
        %v2819 = vshrl.u32 %v2428, 16
        %v2821 = vrot.slane %v2819, 4
        %v2822 = vor.u32 %v2821, %v2817
        %v2823 = vrot.slane %v2822, 4
        %v2825 = vshll.u32 %v2444, 16
        %v2827 = vrot.slane %v2825, 5
        %v2828 = vsel %vm1224, %v2823, %v2827
        %v2829 = vld [vmem:[%s2396] sm:$0xe]
        %v2830 = vld [vmem:[%s2396 + $0xc] sm:$0xe]
        %v2831 = vld [vmem:[%s2396 + $0x18] sm:$0xe]
        %v2832 = vld [vmem:[%s2396 + $0x24] sm:$0xe]
        %v2833 = vld [vmem:[%s2396 + $0x30] sm:$0xe]
        %v2834 = vld [vmem:[%s2396 + $0x3c] sm:$0xe]
        %v2835 = vld [vmem:[%s2396 + $0x48] sm:$0xe]
        %v2836 = vld [vmem:[%s2396 + $0x54] sm:$0xe]
        %v2837 = vld [vmem:[%s2396 + $0x60] sm:$0xe]
        %v2838 = vld [vmem:[%s2396 + $0x6c] sm:$0xe]
        %v2839 = vld [vmem:[%s2396 + $0x78] sm:$0xe]
        %v2840 = vld [vmem:[%s2396 + $0x84] sm:$0xe]
        %v2841 = vld [vmem:[%s2396 + $0x90] sm:$0xe]
        %v2842 = vld [vmem:[%s2396 + $0x9c] sm:$0xe]
        %v2843 = vld [vmem:[%s2396 + $0xa8] sm:$0xe]
        %v2844 = vld [vmem:[%s2396 + $0xb4] sm:$0xe]
        %v2893 = vrot.slane %v2829, 5
        %v2894 = vrot.slane %v2893, 4
        %v2895 = vrot.slane %v2398, 5
        %v2896 = vsel %vm1675, %v2894, %v2895
        %v2897 = vrot.slane %v2895, 4
        %v2898 = vrot.slane %v2429, 5
        %v2899 = vsel %vm1675, %v2897, %v2898
        %v2900 = vrot.slane %v2830, 5
        %v2901 = vrot.slane %v2900, 4
        %v2902 = vrot.slane %v2400, 5
        %v2903 = vsel %vm1675, %v2901, %v2902
        %v2904 = vrot.slane %v2902, 4
        %v2905 = vrot.slane %v2430, 5
        %v2906 = vsel %vm1675, %v2904, %v2905
        %v2907 = vrot.slane %v2831, 5
        %v2908 = vrot.slane %v2907, 4
        %v2909 = vrot.slane %v2402, 5
        %v2910 = vsel %vm1675, %v2908, %v2909
        %v2911 = vrot.slane %v2909, 4
        %v2912 = vrot.slane %v2431, 5
        %v2913 = vsel %vm1675, %v2911, %v2912
        %v2914 = vrot.slane %v2832, 5
        %v2915 = vrot.slane %v2914, 4
        %v2916 = vrot.slane %v2404, 5
        %v2917 = vsel %vm1675, %v2915, %v2916
        %v2918 = vrot.slane %v2916, 4
        %v2919 = vrot.slane %v2432, 5
        %v2920 = vsel %vm1675, %v2918, %v2919
        %v2921 = vrot.slane %v2833, 5
        %v2922 = vrot.slane %v2921, 4
        %v2923 = vrot.slane %v2406, 5
        %v2924 = vsel %vm1675, %v2922, %v2923
        %v2925 = vrot.slane %v2923, 4
        %v2926 = vrot.slane %v2433, 5
        %v2927 = vsel %vm1675, %v2925, %v2926
        %v2928 = vrot.slane %v2834, 5
        %v2929 = vrot.slane %v2928, 4
        %v2930 = vrot.slane %v2408, 5
        %v2931 = vsel %vm1675, %v2929, %v2930
        %v2932 = vrot.slane %v2930, 4
        %v2933 = vrot.slane %v2434, 5
        %v2934 = vsel %vm1675, %v2932, %v2933
        %v2935 = vrot.slane %v2835, 5
        %v2936 = vrot.slane %v2935, 4
        %v2937 = vrot.slane %v2410, 5
        %v2938 = vsel %vm1675, %v2936, %v2937
        %v2939 = vrot.slane %v2937, 4
        %v2940 = vrot.slane %v2435, 5
        %v2941 = vsel %vm1675, %v2939, %v2940
        %v2942 = vrot.slane %v2836, 5
        %v2943 = vrot.slane %v2942, 4
        %v2944 = vrot.slane %v2412, 5
        %v2945 = vsel %vm1675, %v2943, %v2944
        %v2946 = vrot.slane %v2944, 4
        %v2947 = vrot.slane %v2436, 5
        %v2948 = vsel %vm1675, %v2946, %v2947
        %v2949 = vrot.slane %v2837, 5
        %v2950 = vrot.slane %v2949, 4
        %v2951 = vrot.slane %v2414, 5
        %v2952 = vsel %vm1675, %v2950, %v2951
        %v2953 = vrot.slane %v2951, 4
        %v2954 = vrot.slane %v2437, 5
        %v2955 = vsel %vm1675, %v2953, %v2954
        %v2956 = vrot.slane %v2838, 5
        %v2957 = vrot.slane %v2956, 4
        %v2958 = vrot.slane %v2416, 5
        %v2959 = vsel %vm1675, %v2957, %v2958
        %v2960 = vrot.slane %v2958, 4
        %v2961 = vrot.slane %v2438, 5
        %v2962 = vsel %vm1675, %v2960, %v2961
        %v2963 = vrot.slane %v2839, 5
        %v2964 = vrot.slane %v2963, 4
        %v2965 = vrot.slane %v2418, 5
        %v2966 = vsel %vm1675, %v2964, %v2965
        %v2967 = vrot.slane %v2965, 4
        %v2968 = vrot.slane %v2439, 5
        %v2969 = vsel %vm1675, %v2967, %v2968
        %v2970 = vrot.slane %v2840, 5
        %v2971 = vrot.slane %v2970, 4
        %v2972 = vrot.slane %v2420, 5
        %v2973 = vsel %vm1675, %v2971, %v2972
        %v2974 = vrot.slane %v2972, 4
        %v2975 = vrot.slane %v2440, 5
        %v2976 = vsel %vm1675, %v2974, %v2975
        %v2977 = vrot.slane %v2841, 5
        %v2978 = vrot.slane %v2977, 4
        %v2979 = vrot.slane %v2422, 5
        %v2980 = vsel %vm1675, %v2978, %v2979
        %v2981 = vrot.slane %v2979, 4
        %v2982 = vrot.slane %v2441, 5
        %v2983 = vsel %vm1675, %v2981, %v2982
        %v2984 = vrot.slane %v2842, 5
        %v2985 = vrot.slane %v2984, 4
        %v2986 = vrot.slane %v2424, 5
        %v2987 = vsel %vm1675, %v2985, %v2986
        %v2988 = vrot.slane %v2986, 4
        %v2989 = vrot.slane %v2442, 5
        %v2990 = vsel %vm1675, %v2988, %v2989
        %v2991 = vrot.slane %v2843, 5
        %v2992 = vrot.slane %v2991, 4
        %v2993 = vrot.slane %v2426, 5
        %v2994 = vsel %vm1675, %v2992, %v2993
        %v2995 = vrot.slane %v2993, 4
        %v2996 = vrot.slane %v2443, 5
        %v2997 = vsel %vm1675, %v2995, %v2996
        %v2998 = vrot.slane %v2844, 5
        %v2999 = vrot.slane %v2998, 4
        %v3000 = vrot.slane %v2428, 5
        %v3001 = vsel %vm1675, %v2999, %v3000
        %v3002 = vrot.slane %v3000, 4
        %v3003 = vrot.slane %v2444, 5
        %v3004 = vsel %vm1675, %v3002, %v3003
        %v3021 = vunpack.c.l.b16 %v1174
        %v3022 = vunpack.c.l.b16 %v1175
        %v3023 = vunpack.c.l.b16 %v1176
        %v3024 = vunpack.c.l.b16 %v1177
        %v3025 = vunpack.c.l.b16 %v1178
        %v3026 = vunpack.c.l.b16 %v1179
        %v3027 = vunpack.c.l.b16 %v1180
        %v3028 = vunpack.c.l.b16 %v1181
        %v3029 = vunpack.c.l.b16 %v1182
        %v3030 = vunpack.c.l.b16 %v1183
        %v3031 = vunpack.c.l.b16 %v1184
        %v3032 = vunpack.c.l.b16 %v1185
        %v3033 = vunpack.c.l.b16 %v1186
        %v3034 = vunpack.c.l.b16 %v1187
        %v3035 = vunpack.c.l.b16 %v1188
        %v3036 = vunpack.c.l.b16 %v1189
        %v3037 = vunpack.c.l.b16 %v1190
        %v3038 = vunpack.c.l.b16 %v1191
        %v3039 = vunpack.c.l.b16 %v1192
        %v3040 = vunpack.c.l.b16 %v1193
        %v3041 = vunpack.c.l.b16 %v1194
        %v3042 = vunpack.c.l.b16 %v1195
        %v3043 = vunpack.c.l.b16 %v1196
        %v3044 = vunpack.c.l.b16 %v1197
        %v3045 = vunpack.c.l.b16 %v1198
        %v3046 = vunpack.c.l.b16 %v1199
        %v3047 = vunpack.c.l.b16 %v1200
        %v3048 = vunpack.c.l.b16 %v1201
        %v3049 = vunpack.c.l.b16 %v1202
        %v3050 = vunpack.c.l.b16 %v1203
        %v3051 = vunpack.c.l.b16 %v1204
        %v3052 = vunpack.c.l.b16 %v1205
        %v3053 = vpack.c.b16 %v3022, %v3021
        %v3054 = vpack.c.b16 %v3024, %v3023
        %v3055 = vpack.c.b16 %v3026, %v3025
        %v3056 = vpack.c.b16 %v3028, %v3027
        %v3057 = vpack.c.b16 %v3030, %v3029
        %v3058 = vpack.c.b16 %v3032, %v3031
        %v3059 = vpack.c.b16 %v3034, %v3033
        %v3060 = vpack.c.b16 %v3036, %v3035
        %v3061 = vpack.c.b16 %v3038, %v3037
        %v3062 = vpack.c.b16 %v3040, %v3039
        %v3063 = vpack.c.b16 %v3042, %v3041
        %v3064 = vpack.c.b16 %v3044, %v3043
        %v3065 = vpack.c.b16 %v3046, %v3045
        %v3066 = vpack.c.b16 %v3048, %v3047
        %v3067 = vpack.c.b16 %v3050, %v3049
        %v3068 = vpack.c.b16 %v3052, %v3051
        %v3069 = vunpack.c.l.b16 %v1238
        %v3070 = vunpack.c.l.b16 %v1248
        %v3071 = vunpack.c.l.b16 %v1262
        %v3072 = vunpack.c.l.b16 %v1272
        %v3073 = vunpack.c.l.b16 %v1286
        %v3074 = vunpack.c.l.b16 %v1296
        %v3075 = vunpack.c.l.b16 %v1310
        %v3076 = vunpack.c.l.b16 %v1320
        %v3077 = vunpack.c.l.b16 %v1334
        %v3078 = vunpack.c.l.b16 %v1344
        %v3079 = vunpack.c.l.b16 %v1358
        %v3080 = vunpack.c.l.b16 %v1368
        %v3081 = vunpack.c.l.b16 %v1382
        %v3082 = vunpack.c.l.b16 %v1392
        %v3083 = vunpack.c.l.b16 %v1406
        %v3084 = vunpack.c.l.b16 %v1416
        %v3085 = vunpack.c.l.b16 %v1430
        %v3086 = vunpack.c.l.b16 %v1440
        %v3087 = vunpack.c.l.b16 %v1454
        %v3088 = vunpack.c.l.b16 %v1464
        %v3089 = vunpack.c.l.b16 %v1478
        %v3090 = vunpack.c.l.b16 %v1488
        %v3091 = vunpack.c.l.b16 %v1502
        %v3092 = vunpack.c.l.b16 %v1512
        %v3093 = vunpack.c.l.b16 %v1526
        %v3094 = vunpack.c.l.b16 %v1536
        %v3095 = vunpack.c.l.b16 %v1550
        %v3096 = vunpack.c.l.b16 %v1560
        %v3097 = vunpack.c.l.b16 %v1574
        %v3098 = vunpack.c.l.b16 %v1584
        %v3099 = vunpack.c.l.b16 %v1598
        %v3100 = vunpack.c.l.b16 %v1608
        %v3101 = vpack.c.b16 %v3070, %v3069
        %v3102 = vpack.c.b16 %v3072, %v3071
        %v3103 = vpack.c.b16 %v3074, %v3073
        %v3104 = vpack.c.b16 %v3076, %v3075
        %v3105 = vpack.c.b16 %v3078, %v3077
        %v3106 = vpack.c.b16 %v3080, %v3079
        %v3107 = vpack.c.b16 %v3082, %v3081
        %v3108 = vpack.c.b16 %v3084, %v3083
        %v3109 = vpack.c.b16 %v3086, %v3085
        %v3110 = vpack.c.b16 %v3088, %v3087
        %v3111 = vpack.c.b16 %v3090, %v3089
        %v3112 = vpack.c.b16 %v3092, %v3091
        %v3113 = vpack.c.b16 %v3094, %v3093
        %v3114 = vpack.c.b16 %v3096, %v3095
        %v3115 = vpack.c.b16 %v3098, %v3097
        %v3116 = vpack.c.b16 %v3100, %v3099
        %3117 = vrot.lane.b32.xlu0 %v3101, 8
        %v3118 = vpop.permute.xlu0 %3117
        %3119 = vrot.lane.b32.xlu0 %v3102, 8
        %v3120 = vpop.permute.xlu0 %3119
        %3121 = vrot.lane.b32.xlu0 %v3103, 8
        %v3122 = vpop.permute.xlu0 %3121
        %3123 = vrot.lane.b32.xlu0 %v3104, 8
        %v3124 = vpop.permute.xlu0 %3123
        %3125 = vrot.lane.b32.xlu0 %v3105, 8
        %v3126 = vpop.permute.xlu0 %3125
        %3127 = vrot.lane.b32.xlu0 %v3106, 8
        %v3128 = vpop.permute.xlu0 %3127
        %3129 = vrot.lane.b32.xlu0 %v3107, 8
        %v3130 = vpop.permute.xlu0 %3129
        %3131 = vrot.lane.b32.xlu0 %v3108, 8
        %v3132 = vpop.permute.xlu0 %3131
        %3133 = vrot.lane.b32.xlu0 %v3109, 8
        %v3134 = vpop.permute.xlu0 %3133
        %3135 = vrot.lane.b32.xlu0 %v3110, 8
        %v3136 = vpop.permute.xlu0 %3135
        %3137 = vrot.lane.b32.xlu0 %v3111, 8
        %v3138 = vpop.permute.xlu0 %3137
        %3139 = vrot.lane.b32.xlu0 %v3112, 8
        %v3140 = vpop.permute.xlu0 %3139
        %3141 = vrot.lane.b32.xlu0 %v3113, 8
        %v3142 = vpop.permute.xlu0 %3141
        %3143 = vrot.lane.b32.xlu0 %v3114, 8
        %v3144 = vpop.permute.xlu0 %3143
        %3145 = vrot.lane.b32.xlu0 %v3115, 8
        %v3146 = vpop.permute.xlu0 %3145
        %3147 = vrot.lane.b32.xlu0 %v3116, 8
        %v3148 = vpop.permute.xlu0 %3147
        %v3149 = vunpack.c.l.b16 %v1679
        %v3150 = vunpack.c.l.b16 %v1682
        %v3151 = vunpack.c.l.b16 %v1686
        %v3152 = vunpack.c.l.b16 %v1689
        %v3153 = vunpack.c.l.b16 %v1693
        %v3154 = vunpack.c.l.b16 %v1696
        %v3155 = vunpack.c.l.b16 %v1700
        %v3156 = vunpack.c.l.b16 %v1703
        %v3157 = vunpack.c.l.b16 %v1707
        %v3158 = vunpack.c.l.b16 %v1710
        %v3159 = vunpack.c.l.b16 %v1714
        %v3160 = vunpack.c.l.b16 %v1717
        %v3161 = vunpack.c.l.b16 %v1721
        %v3162 = vunpack.c.l.b16 %v1724
        %v3163 = vunpack.c.l.b16 %v1728
        %v3164 = vunpack.c.l.b16 %v1731
        %v3165 = vunpack.c.l.b16 %v1735
        %v3166 = vunpack.c.l.b16 %v1738
        %v3167 = vunpack.c.l.b16 %v1742
        %v3168 = vunpack.c.l.b16 %v1745
        %v3169 = vunpack.c.l.b16 %v1749
        %v3170 = vunpack.c.l.b16 %v1752
        %v3171 = vunpack.c.l.b16 %v1756
        %v3172 = vunpack.c.l.b16 %v1759
        %v3173 = vunpack.c.l.b16 %v1763
        %v3174 = vunpack.c.l.b16 %v1766
        %v3175 = vunpack.c.l.b16 %v1770
        %v3176 = vunpack.c.l.b16 %v1773
        %v3177 = vunpack.c.l.b16 %v1777
        %v3178 = vunpack.c.l.b16 %v1780
        %v3179 = vunpack.c.l.b16 %v1784
        %v3180 = vunpack.c.l.b16 %v1787
        %v3181 = vpack.c.b16 %v3150, %v3149
        %v3182 = vpack.c.b16 %v3152, %v3151
        %v3183 = vpack.c.b16 %v3154, %v3153
        %v3184 = vpack.c.b16 %v3156, %v3155
        %v3185 = vpack.c.b16 %v3158, %v3157
        %v3186 = vpack.c.b16 %v3160, %v3159
        %v3187 = vpack.c.b16 %v3162, %v3161
        %v3188 = vpack.c.b16 %v3164, %v3163
        %v3189 = vpack.c.b16 %v3166, %v3165
        %v3190 = vpack.c.b16 %v3168, %v3167
        %v3191 = vpack.c.b16 %v3170, %v3169
        %v3192 = vpack.c.b16 %v3172, %v3171
        %v3193 = vpack.c.b16 %v3174, %v3173
        %v3194 = vpack.c.b16 %v3176, %v3175
        %v3195 = vpack.c.b16 %v3178, %v3177
        %v3196 = vpack.c.b16 %v3180, %v3179
        %3197 = vrot.lane.b32.xlu0 %v3181, 16
        %v3198 = vpop.permute.xlu0 %3197
        %3199 = vrot.lane.b32.xlu0 %v3182, 16
        %v3200 = vpop.permute.xlu0 %3199
        %3201 = vrot.lane.b32.xlu0 %v3183, 16
        %v3202 = vpop.permute.xlu0 %3201
        %3203 = vrot.lane.b32.xlu0 %v3184, 16
        %v3204 = vpop.permute.xlu0 %3203
        %3205 = vrot.lane.b32.xlu0 %v3185, 16
        %v3206 = vpop.permute.xlu0 %3205
        %3207 = vrot.lane.b32.xlu0 %v3186, 16
        %v3208 = vpop.permute.xlu0 %3207
        %3209 = vrot.lane.b32.xlu0 %v3187, 16
        %v3210 = vpop.permute.xlu0 %3209
        %3211 = vrot.lane.b32.xlu0 %v3188, 16
        %v3212 = vpop.permute.xlu0 %3211
        %3213 = vrot.lane.b32.xlu0 %v3189, 16
        %v3214 = vpop.permute.xlu0 %3213
        %3215 = vrot.lane.b32.xlu0 %v3190, 16
        %v3216 = vpop.permute.xlu0 %3215
        %3217 = vrot.lane.b32.xlu0 %v3191, 16
        %v3218 = vpop.permute.xlu0 %3217
        %3219 = vrot.lane.b32.xlu0 %v3192, 16
        %v3220 = vpop.permute.xlu0 %3219
        %3221 = vrot.lane.b32.xlu0 %v3193, 16
        %v3222 = vpop.permute.xlu0 %3221
        %3223 = vrot.lane.b32.xlu0 %v3194, 16
        %v3224 = vpop.permute.xlu0 %3223
        %3225 = vrot.lane.b32.xlu0 %v3195, 16
        %v3226 = vpop.permute.xlu0 %3225
        %3227 = vrot.lane.b32.xlu0 %v3196, 16
        %v3228 = vpop.permute.xlu0 %3227
        %v3245 = vunpack.c.l.b16 %v1788
        %v3246 = vunpack.c.l.b16 %v1789
        %v3247 = vunpack.c.l.b16 %v1790
        %v3248 = vunpack.c.l.b16 %v1791
        %v3249 = vunpack.c.l.b16 %v1792
        %v3250 = vunpack.c.l.b16 %v1793
        %v3251 = vunpack.c.l.b16 %v1794
        %v3252 = vunpack.c.l.b16 %v1795
        %v3253 = vunpack.c.l.b16 %v1796
        %v3254 = vunpack.c.l.b16 %v1797
        %v3255 = vunpack.c.l.b16 %v1798
        %v3256 = vunpack.c.l.b16 %v1799
        %v3257 = vunpack.c.l.b16 %v1800
        %v3258 = vunpack.c.l.b16 %v1801
        %v3259 = vunpack.c.l.b16 %v1802
        %v3260 = vunpack.c.l.b16 %v1803
        %v3261 = vunpack.c.l.b16 %v1804
        %v3262 = vunpack.c.l.b16 %v1805
        %v3263 = vunpack.c.l.b16 %v1806
        %v3264 = vunpack.c.l.b16 %v1807
        %v3265 = vunpack.c.l.b16 %v1808
        %v3266 = vunpack.c.l.b16 %v1809
        %v3267 = vunpack.c.l.b16 %v1810
        %v3268 = vunpack.c.l.b16 %v1811
        %v3269 = vunpack.c.l.b16 %v1812
        %v3270 = vunpack.c.l.b16 %v1813
        %v3271 = vunpack.c.l.b16 %v1814
        %v3272 = vunpack.c.l.b16 %v1815
        %v3273 = vunpack.c.l.b16 %v1816
        %v3274 = vunpack.c.l.b16 %v1817
        %v3275 = vunpack.c.l.b16 %v1818
        %v3276 = vunpack.c.l.b16 %v1819
        %v3277 = vpack.c.b16 %v3246, %v3245
        %v3278 = vpack.c.b16 %v3248, %v3247
        %v3279 = vpack.c.b16 %v3250, %v3249
        %v3280 = vpack.c.b16 %v3252, %v3251
        %v3281 = vpack.c.b16 %v3254, %v3253
        %v3282 = vpack.c.b16 %v3256, %v3255
        %v3283 = vpack.c.b16 %v3258, %v3257
        %v3284 = vpack.c.b16 %v3260, %v3259
        %v3285 = vpack.c.b16 %v3262, %v3261
        %v3286 = vpack.c.b16 %v3264, %v3263
        %v3287 = vpack.c.b16 %v3266, %v3265
        %v3288 = vpack.c.b16 %v3268, %v3267
        %v3289 = vpack.c.b16 %v3270, %v3269
        %v3290 = vpack.c.b16 %v3272, %v3271
        %v3291 = vpack.c.b16 %v3274, %v3273
        %v3292 = vpack.c.b16 %v3276, %v3275
        %3293 = vrot.lane.b32.xlu0 %v3277, 24
        %v3294 = vpop.permute.xlu0 %3293
        %3295 = vrot.lane.b32.xlu0 %v3278, 24
        %v3296 = vpop.permute.xlu0 %3295
        %3297 = vrot.lane.b32.xlu0 %v3279, 24
        %v3298 = vpop.permute.xlu0 %3297
        %3299 = vrot.lane.b32.xlu0 %v3280, 24
        %v3300 = vpop.permute.xlu0 %3299
        %3301 = vrot.lane.b32.xlu0 %v3281, 24
        %v3302 = vpop.permute.xlu0 %3301
        %3303 = vrot.lane.b32.xlu0 %v3282, 24
        %v3304 = vpop.permute.xlu0 %3303
        %3305 = vrot.lane.b32.xlu0 %v3283, 24
        %v3306 = vpop.permute.xlu0 %3305
        %3307 = vrot.lane.b32.xlu0 %v3284, 24
        %v3308 = vpop.permute.xlu0 %3307
        %3309 = vrot.lane.b32.xlu0 %v3285, 24
        %v3310 = vpop.permute.xlu0 %3309
        %3311 = vrot.lane.b32.xlu0 %v3286, 24
        %v3312 = vpop.permute.xlu0 %3311
        %3313 = vrot.lane.b32.xlu0 %v3287, 24
        %v3314 = vpop.permute.xlu0 %3313
        %3315 = vrot.lane.b32.xlu0 %v3288, 24
        %v3316 = vpop.permute.xlu0 %3315
        %3317 = vrot.lane.b32.xlu0 %v3289, 24
        %v3318 = vpop.permute.xlu0 %3317
        %3319 = vrot.lane.b32.xlu0 %v3290, 24
        %v3320 = vpop.permute.xlu0 %3319
        %3321 = vrot.lane.b32.xlu0 %v3291, 24
        %v3322 = vpop.permute.xlu0 %3321
        %3323 = vrot.lane.b32.xlu0 %v3292, 24
        %v3324 = vpop.permute.xlu0 %3323
        %v3325 = vunpack.c.l.b16 %v1849
        %v3326 = vunpack.c.l.b16 %v1859
        %v3327 = vunpack.c.l.b16 %v1873
        %v3328 = vunpack.c.l.b16 %v1883
        %v3329 = vunpack.c.l.b16 %v1897
        %v3330 = vunpack.c.l.b16 %v1907
        %v3331 = vunpack.c.l.b16 %v1921
        %v3332 = vunpack.c.l.b16 %v1931
        %v3333 = vunpack.c.l.b16 %v1945
        %v3334 = vunpack.c.l.b16 %v1955
        %v3335 = vunpack.c.l.b16 %v1969
        %v3336 = vunpack.c.l.b16 %v1979
        %v3337 = vunpack.c.l.b16 %v1993
        %v3338 = vunpack.c.l.b16 %v2003
        %v3339 = vunpack.c.l.b16 %v2017
        %v3340 = vunpack.c.l.b16 %v2027
        %v3341 = vunpack.c.l.b16 %v2041
        %v3342 = vunpack.c.l.b16 %v2051
        %v3343 = vunpack.c.l.b16 %v2065
        %v3344 = vunpack.c.l.b16 %v2075
        %v3345 = vunpack.c.l.b16 %v2089
        %v3346 = vunpack.c.l.b16 %v2099
        %v3347 = vunpack.c.l.b16 %v2113
        %v3348 = vunpack.c.l.b16 %v2123
        %v3349 = vunpack.c.l.b16 %v2137
        %v3350 = vunpack.c.l.b16 %v2147
        %v3351 = vunpack.c.l.b16 %v2161
        %v3352 = vunpack.c.l.b16 %v2171
        %v3353 = vunpack.c.l.b16 %v2185
        %v3354 = vunpack.c.l.b16 %v2195
        %v3355 = vunpack.c.l.b16 %v2209
        %v3356 = vunpack.c.l.b16 %v2219
        %v3357 = vpack.c.b16 %v3326, %v3325
        %v3358 = vpack.c.b16 %v3328, %v3327
        %v3359 = vpack.c.b16 %v3330, %v3329
        %v3360 = vpack.c.b16 %v3332, %v3331
        %v3361 = vpack.c.b16 %v3334, %v3333
        %v3362 = vpack.c.b16 %v3336, %v3335
        %v3363 = vpack.c.b16 %v3338, %v3337
        %v3364 = vpack.c.b16 %v3340, %v3339
        %v3365 = vpack.c.b16 %v3342, %v3341
        %v3366 = vpack.c.b16 %v3344, %v3343
        %v3367 = vpack.c.b16 %v3346, %v3345
        %v3368 = vpack.c.b16 %v3348, %v3347
        %v3369 = vpack.c.b16 %v3350, %v3349
        %v3370 = vpack.c.b16 %v3352, %v3351
        %v3371 = vpack.c.b16 %v3354, %v3353
        %v3372 = vpack.c.b16 %v3356, %v3355
        %3373 = vrot.lane.b32.xlu0 %v3357, 32
        %v3374 = vpop.permute.xlu0 %3373
        %3375 = vrot.lane.b32.xlu0 %v3358, 32
        %v3376 = vpop.permute.xlu0 %3375
        %3377 = vrot.lane.b32.xlu0 %v3359, 32
        %v3378 = vpop.permute.xlu0 %3377
        %3379 = vrot.lane.b32.xlu0 %v3360, 32
        %v3380 = vpop.permute.xlu0 %3379
        %3381 = vrot.lane.b32.xlu0 %v3361, 32
        %v3382 = vpop.permute.xlu0 %3381
        %3383 = vrot.lane.b32.xlu0 %v3362, 32
        %v3384 = vpop.permute.xlu0 %3383
        %3385 = vrot.lane.b32.xlu0 %v3363, 32
        %v3386 = vpop.permute.xlu0 %3385
        %3387 = vrot.lane.b32.xlu0 %v3364, 32
        %v3388 = vpop.permute.xlu0 %3387
        %3389 = vrot.lane.b32.xlu0 %v3365, 32
        %v3390 = vpop.permute.xlu0 %3389
        %3391 = vrot.lane.b32.xlu0 %v3366, 32
        %v3392 = vpop.permute.xlu0 %3391
        %3393 = vrot.lane.b32.xlu0 %v3367, 32
        %v3394 = vpop.permute.xlu0 %3393
        %3395 = vrot.lane.b32.xlu0 %v3368, 32
        %v3396 = vpop.permute.xlu0 %3395
        %3397 = vrot.lane.b32.xlu0 %v3369, 32
        %v3398 = vpop.permute.xlu0 %3397
        %3399 = vrot.lane.b32.xlu0 %v3370, 32
        %v3400 = vpop.permute.xlu0 %3399
        %3401 = vrot.lane.b32.xlu0 %v3371, 32
        %v3402 = vpop.permute.xlu0 %3401
        %3403 = vrot.lane.b32.xlu0 %v3372, 32
        %v3404 = vpop.permute.xlu0 %3403
        %v3405 = vunpack.c.l.b16 %v2287
        %v3406 = vunpack.c.l.b16 %v2290
        %v3407 = vunpack.c.l.b16 %v2294
        %v3408 = vunpack.c.l.b16 %v2297
        %v3409 = vunpack.c.l.b16 %v2301
        %v3410 = vunpack.c.l.b16 %v2304
        %v3411 = vunpack.c.l.b16 %v2308
        %v3412 = vunpack.c.l.b16 %v2311
        %v3413 = vunpack.c.l.b16 %v2315
        %v3414 = vunpack.c.l.b16 %v2318
        %v3415 = vunpack.c.l.b16 %v2322
        %v3416 = vunpack.c.l.b16 %v2325
        %v3417 = vunpack.c.l.b16 %v2329
        %v3418 = vunpack.c.l.b16 %v2332
        %v3419 = vunpack.c.l.b16 %v2336
        %v3420 = vunpack.c.l.b16 %v2339
        %v3421 = vunpack.c.l.b16 %v2343
        %v3422 = vunpack.c.l.b16 %v2346
        %v3423 = vunpack.c.l.b16 %v2350
        %v3424 = vunpack.c.l.b16 %v2353
        %v3425 = vunpack.c.l.b16 %v2357
        %v3426 = vunpack.c.l.b16 %v2360
        %v3427 = vunpack.c.l.b16 %v2364
        %v3428 = vunpack.c.l.b16 %v2367
        %v3429 = vunpack.c.l.b16 %v2371
        %v3430 = vunpack.c.l.b16 %v2374
        %v3431 = vunpack.c.l.b16 %v2378
        %v3432 = vunpack.c.l.b16 %v2381
        %v3433 = vunpack.c.l.b16 %v2385
        %v3434 = vunpack.c.l.b16 %v2388
        %v3435 = vunpack.c.l.b16 %v2392
        %v3436 = vunpack.c.l.b16 %v2395
        %v3437 = vpack.c.b16 %v3406, %v3405
        %v3438 = vpack.c.b16 %v3408, %v3407
        %v3439 = vpack.c.b16 %v3410, %v3409
        %v3440 = vpack.c.b16 %v3412, %v3411
        %v3441 = vpack.c.b16 %v3414, %v3413
        %v3442 = vpack.c.b16 %v3416, %v3415
        %v3443 = vpack.c.b16 %v3418, %v3417
        %v3444 = vpack.c.b16 %v3420, %v3419
        %v3445 = vpack.c.b16 %v3422, %v3421
        %v3446 = vpack.c.b16 %v3424, %v3423
        %v3447 = vpack.c.b16 %v3426, %v3425
        %v3448 = vpack.c.b16 %v3428, %v3427
        %v3449 = vpack.c.b16 %v3430, %v3429
        %v3450 = vpack.c.b16 %v3432, %v3431
        %v3451 = vpack.c.b16 %v3434, %v3433
        %v3452 = vpack.c.b16 %v3436, %v3435
        %3453 = vrot.lane.b32.xlu0 %v3437, 40
        %v3454 = vpop.permute.xlu0 %3453
        %3455 = vrot.lane.b32.xlu0 %v3438, 40
        %v3456 = vpop.permute.xlu0 %3455
        %3457 = vrot.lane.b32.xlu0 %v3439, 40
        %v3458 = vpop.permute.xlu0 %3457
        %3459 = vrot.lane.b32.xlu0 %v3440, 40
        %v3460 = vpop.permute.xlu0 %3459
        %3461 = vrot.lane.b32.xlu0 %v3441, 40
        %v3462 = vpop.permute.xlu0 %3461
        %3463 = vrot.lane.b32.xlu0 %v3442, 40
        %v3464 = vpop.permute.xlu0 %3463
        %3465 = vrot.lane.b32.xlu0 %v3443, 40
        %v3466 = vpop.permute.xlu0 %3465
        %3467 = vrot.lane.b32.xlu0 %v3444, 40
        %v3468 = vpop.permute.xlu0 %3467
        %3469 = vrot.lane.b32.xlu0 %v3445, 40
        %v3470 = vpop.permute.xlu0 %3469
        %3471 = vrot.lane.b32.xlu0 %v3446, 40
        %v3472 = vpop.permute.xlu0 %3471
        %3473 = vrot.lane.b32.xlu0 %v3447, 40
        %v3474 = vpop.permute.xlu0 %3473
        %3475 = vrot.lane.b32.xlu0 %v3448, 40
        %v3476 = vpop.permute.xlu0 %3475
        %3477 = vrot.lane.b32.xlu0 %v3449, 40
        %v3478 = vpop.permute.xlu0 %3477
        %3479 = vrot.lane.b32.xlu0 %v3450, 40
        %v3480 = vpop.permute.xlu0 %3479
        %3481 = vrot.lane.b32.xlu0 %v3451, 40
        %v3482 = vpop.permute.xlu0 %3481
        %3483 = vrot.lane.b32.xlu0 %v3452, 40
        %v3484 = vpop.permute.xlu0 %3483
        %v3501 = vunpack.c.l.b16 %v2397
        %v3502 = vunpack.c.l.b16 %v2398
        %v3503 = vunpack.c.l.b16 %v2399
        %v3504 = vunpack.c.l.b16 %v2400
        %v3505 = vunpack.c.l.b16 %v2401
        %v3506 = vunpack.c.l.b16 %v2402
        %v3507 = vunpack.c.l.b16 %v2403
        %v3508 = vunpack.c.l.b16 %v2404
        %v3509 = vunpack.c.l.b16 %v2405
        %v3510 = vunpack.c.l.b16 %v2406
        %v3511 = vunpack.c.l.b16 %v2407
        %v3512 = vunpack.c.l.b16 %v2408
        %v3513 = vunpack.c.l.b16 %v2409
        %v3514 = vunpack.c.l.b16 %v2410
        %v3515 = vunpack.c.l.b16 %v2411
        %v3516 = vunpack.c.l.b16 %v2412
        %v3517 = vunpack.c.l.b16 %v2413
        %v3518 = vunpack.c.l.b16 %v2414
        %v3519 = vunpack.c.l.b16 %v2415
        %v3520 = vunpack.c.l.b16 %v2416
        %v3521 = vunpack.c.l.b16 %v2417
        %v3522 = vunpack.c.l.b16 %v2418
        %v3523 = vunpack.c.l.b16 %v2419
        %v3524 = vunpack.c.l.b16 %v2420
        %v3525 = vunpack.c.l.b16 %v2421
        %v3526 = vunpack.c.l.b16 %v2422
        %v3527 = vunpack.c.l.b16 %v2423
        %v3528 = vunpack.c.l.b16 %v2424
        %v3529 = vunpack.c.l.b16 %v2425
        %v3530 = vunpack.c.l.b16 %v2426
        %v3531 = vunpack.c.l.b16 %v2427
        %v3532 = vunpack.c.l.b16 %v2428
        %v3533 = vpack.c.b16 %v3502, %v3501
        %v3534 = vpack.c.b16 %v3504, %v3503
        %v3535 = vpack.c.b16 %v3506, %v3505
        %v3536 = vpack.c.b16 %v3508, %v3507
        %v3537 = vpack.c.b16 %v3510, %v3509
        %v3538 = vpack.c.b16 %v3512, %v3511
        %v3539 = vpack.c.b16 %v3514, %v3513
        %v3540 = vpack.c.b16 %v3516, %v3515
        %v3541 = vpack.c.b16 %v3518, %v3517
        %v3542 = vpack.c.b16 %v3520, %v3519
        %v3543 = vpack.c.b16 %v3522, %v3521
        %v3544 = vpack.c.b16 %v3524, %v3523
        %v3545 = vpack.c.b16 %v3526, %v3525
        %v3546 = vpack.c.b16 %v3528, %v3527
        %v3547 = vpack.c.b16 %v3530, %v3529
        %v3548 = vpack.c.b16 %v3532, %v3531
        %3549 = vrot.lane.b32.xlu0 %v3533, 48
        %v3550 = vpop.permute.xlu0 %3549
        %3551 = vrot.lane.b32.xlu0 %v3534, 48
        %v3552 = vpop.permute.xlu0 %3551
        %3553 = vrot.lane.b32.xlu0 %v3535, 48
        %v3554 = vpop.permute.xlu0 %3553
        %3555 = vrot.lane.b32.xlu0 %v3536, 48
        %v3556 = vpop.permute.xlu0 %3555
        %3557 = vrot.lane.b32.xlu0 %v3537, 48
        %v3558 = vpop.permute.xlu0 %3557
        %3559 = vrot.lane.b32.xlu0 %v3538, 48
        %v3560 = vpop.permute.xlu0 %3559
        %3561 = vrot.lane.b32.xlu0 %v3539, 48
        %v3562 = vpop.permute.xlu0 %3561
        %3563 = vrot.lane.b32.xlu0 %v3540, 48
        %v3564 = vpop.permute.xlu0 %3563
        %3565 = vrot.lane.b32.xlu0 %v3541, 48
        %v3566 = vpop.permute.xlu0 %3565
        %3567 = vrot.lane.b32.xlu0 %v3542, 48
        %v3568 = vpop.permute.xlu0 %3567
        %3569 = vrot.lane.b32.xlu0 %v3543, 48
        %v3570 = vpop.permute.xlu0 %3569
        %3571 = vrot.lane.b32.xlu0 %v3544, 48
        %v3572 = vpop.permute.xlu0 %3571
        %3573 = vrot.lane.b32.xlu0 %v3545, 48
        %v3574 = vpop.permute.xlu0 %3573
        %3575 = vrot.lane.b32.xlu0 %v3546, 48
        %v3576 = vpop.permute.xlu0 %3575
        %3577 = vrot.lane.b32.xlu0 %v3547, 48
        %v3578 = vpop.permute.xlu0 %3577
        %3579 = vrot.lane.b32.xlu0 %v3548, 48
        %v3580 = vpop.permute.xlu0 %3579
        %v3581 = vunpack.c.l.b16 %v2458
        %v3582 = vunpack.c.l.b16 %v2468
        %v3583 = vunpack.c.l.b16 %v2482
        %v3584 = vunpack.c.l.b16 %v2492
        %v3585 = vunpack.c.l.b16 %v2506
        %v3586 = vunpack.c.l.b16 %v2516
        %v3587 = vunpack.c.l.b16 %v2530
        %v3588 = vunpack.c.l.b16 %v2540
        %v3589 = vunpack.c.l.b16 %v2554
        %v3590 = vunpack.c.l.b16 %v2564
        %v3591 = vunpack.c.l.b16 %v2578
        %v3592 = vunpack.c.l.b16 %v2588
        %v3593 = vunpack.c.l.b16 %v2602
        %v3594 = vunpack.c.l.b16 %v2612
        %v3595 = vunpack.c.l.b16 %v2626
        %v3596 = vunpack.c.l.b16 %v2636
        %v3597 = vunpack.c.l.b16 %v2650
        %v3598 = vunpack.c.l.b16 %v2660
        %v3599 = vunpack.c.l.b16 %v2674
        %v3600 = vunpack.c.l.b16 %v2684
        %v3601 = vunpack.c.l.b16 %v2698
        %v3602 = vunpack.c.l.b16 %v2708
        %v3603 = vunpack.c.l.b16 %v2722
        %v3604 = vunpack.c.l.b16 %v2732
        %v3605 = vunpack.c.l.b16 %v2746
        %v3606 = vunpack.c.l.b16 %v2756
        %v3607 = vunpack.c.l.b16 %v2770
        %v3608 = vunpack.c.l.b16 %v2780
        %v3609 = vunpack.c.l.b16 %v2794
        %v3610 = vunpack.c.l.b16 %v2804
        %v3611 = vunpack.c.l.b16 %v2818
        %v3612 = vunpack.c.l.b16 %v2828
        %v3613 = vpack.c.b16 %v3582, %v3581
        %v3614 = vpack.c.b16 %v3584, %v3583
        %v3615 = vpack.c.b16 %v3586, %v3585
        %v3616 = vpack.c.b16 %v3588, %v3587
        %v3617 = vpack.c.b16 %v3590, %v3589
        %v3618 = vpack.c.b16 %v3592, %v3591
        %v3619 = vpack.c.b16 %v3594, %v3593
        %v3620 = vpack.c.b16 %v3596, %v3595
        %v3621 = vpack.c.b16 %v3598, %v3597
        %v3622 = vpack.c.b16 %v3600, %v3599
        %v3623 = vpack.c.b16 %v3602, %v3601
        %v3624 = vpack.c.b16 %v3604, %v3603
        %v3625 = vpack.c.b16 %v3606, %v3605
        %v3626 = vpack.c.b16 %v3608, %v3607
        %v3627 = vpack.c.b16 %v3610, %v3609
        %v3628 = vpack.c.b16 %v3612, %v3611
        %3629 = vrot.lane.b32.xlu0 %v3613, 56
        %v3630 = vpop.permute.xlu0 %3629
        %3631 = vrot.lane.b32.xlu0 %v3614, 56
        %v3632 = vpop.permute.xlu0 %3631
        %3633 = vrot.lane.b32.xlu0 %v3615, 56
        %v3634 = vpop.permute.xlu0 %3633
        %3635 = vrot.lane.b32.xlu0 %v3616, 56
        %v3636 = vpop.permute.xlu0 %3635
        %3637 = vrot.lane.b32.xlu0 %v3617, 56
        %v3638 = vpop.permute.xlu0 %3637
        %3639 = vrot.lane.b32.xlu0 %v3618, 56
        %v3640 = vpop.permute.xlu0 %3639
        %3641 = vrot.lane.b32.xlu0 %v3619, 56
        %v3642 = vpop.permute.xlu0 %3641
        %3643 = vrot.lane.b32.xlu0 %v3620, 56
        %v3644 = vpop.permute.xlu0 %3643
        %3645 = vrot.lane.b32.xlu0 %v3621, 56
        %v3646 = vpop.permute.xlu0 %3645
        %3647 = vrot.lane.b32.xlu0 %v3622, 56
        %v3648 = vpop.permute.xlu0 %3647
        %3649 = vrot.lane.b32.xlu0 %v3623, 56
        %v3650 = vpop.permute.xlu0 %3649
        %3651 = vrot.lane.b32.xlu0 %v3624, 56
        %v3652 = vpop.permute.xlu0 %3651
        %3653 = vrot.lane.b32.xlu0 %v3625, 56
        %v3654 = vpop.permute.xlu0 %3653
        %3655 = vrot.lane.b32.xlu0 %v3626, 56
        %v3656 = vpop.permute.xlu0 %3655
        %3657 = vrot.lane.b32.xlu0 %v3627, 56
        %v3658 = vpop.permute.xlu0 %3657
        %3659 = vrot.lane.b32.xlu0 %v3628, 56
        %v3660 = vpop.permute.xlu0 %3659
        %v3661 = vunpack.c.l.b16 %v2896
        %v3662 = vunpack.c.l.b16 %v2899
        %v3663 = vunpack.c.l.b16 %v2903
        %v3664 = vunpack.c.l.b16 %v2906
        %v3665 = vunpack.c.l.b16 %v2910
        %v3666 = vunpack.c.l.b16 %v2913
        %v3667 = vunpack.c.l.b16 %v2917
        %v3668 = vunpack.c.l.b16 %v2920
        %v3669 = vunpack.c.l.b16 %v2924
        %v3670 = vunpack.c.l.b16 %v2927
        %v3671 = vunpack.c.l.b16 %v2931
        %v3672 = vunpack.c.l.b16 %v2934
        %v3673 = vunpack.c.l.b16 %v2938
        %v3674 = vunpack.c.l.b16 %v2941
        %v3675 = vunpack.c.l.b16 %v2945
        %v3676 = vunpack.c.l.b16 %v2948
        %v3677 = vunpack.c.l.b16 %v2952
        %v3678 = vunpack.c.l.b16 %v2955
        %v3679 = vunpack.c.l.b16 %v2959
        %v3680 = vunpack.c.l.b16 %v2962
        %v3681 = vunpack.c.l.b16 %v2966
        %v3682 = vunpack.c.l.b16 %v2969
        %v3683 = vunpack.c.l.b16 %v2973
        %v3684 = vunpack.c.l.b16 %v2976
        %v3685 = vunpack.c.l.b16 %v2980
        %v3686 = vunpack.c.l.b16 %v2983
        %v3687 = vunpack.c.l.b16 %v2987
        %v3688 = vunpack.c.l.b16 %v2990
        %v3689 = vunpack.c.l.b16 %v2994
        %v3690 = vunpack.c.l.b16 %v2997
        %v3691 = vunpack.c.l.b16 %v3001
        %v3692 = vunpack.c.l.b16 %v3004
        %v3693 = vpack.c.b16 %v3662, %v3661
        %v3694 = vpack.c.b16 %v3664, %v3663
        %v3695 = vpack.c.b16 %v3666, %v3665
        %v3696 = vpack.c.b16 %v3668, %v3667
        %v3697 = vpack.c.b16 %v3670, %v3669
        %v3698 = vpack.c.b16 %v3672, %v3671
        %v3699 = vpack.c.b16 %v3674, %v3673
        %v3700 = vpack.c.b16 %v3676, %v3675
        %v3701 = vpack.c.b16 %v3678, %v3677
        %v3702 = vpack.c.b16 %v3680, %v3679
        %v3703 = vpack.c.b16 %v3682, %v3681
        %v3704 = vpack.c.b16 %v3684, %v3683
        %v3705 = vpack.c.b16 %v3686, %v3685
        %v3706 = vpack.c.b16 %v3688, %v3687
        %v3707 = vpack.c.b16 %v3690, %v3689
        %v3708 = vpack.c.b16 %v3692, %v3691
        %3709 = vrot.lane.b32.xlu0 %v3693, 64
        %v3710 = vpop.permute.xlu0 %3709
        %3711 = vrot.lane.b32.xlu0 %v3694, 64
        %v3712 = vpop.permute.xlu0 %3711
        %3713 = vrot.lane.b32.xlu0 %v3695, 64
        %v3714 = vpop.permute.xlu0 %3713
        %3715 = vrot.lane.b32.xlu0 %v3696, 64
        %v3716 = vpop.permute.xlu0 %3715
        %3717 = vrot.lane.b32.xlu0 %v3697, 64
        %v3718 = vpop.permute.xlu0 %3717
        %3719 = vrot.lane.b32.xlu0 %v3698, 64
        %v3720 = vpop.permute.xlu0 %3719
        %3721 = vrot.lane.b32.xlu0 %v3699, 64
        %v3722 = vpop.permute.xlu0 %3721
        %3723 = vrot.lane.b32.xlu0 %v3700, 64
        %v3724 = vpop.permute.xlu0 %3723
        %3725 = vrot.lane.b32.xlu0 %v3701, 64
        %v3726 = vpop.permute.xlu0 %3725
        %3727 = vrot.lane.b32.xlu0 %v3702, 64
        %v3728 = vpop.permute.xlu0 %3727
        %3729 = vrot.lane.b32.xlu0 %v3703, 64
        %v3730 = vpop.permute.xlu0 %3729
        %3731 = vrot.lane.b32.xlu0 %v3704, 64
        %v3732 = vpop.permute.xlu0 %3731
        %3733 = vrot.lane.b32.xlu0 %v3705, 64
        %v3734 = vpop.permute.xlu0 %3733
        %3735 = vrot.lane.b32.xlu0 %v3706, 64
        %v3736 = vpop.permute.xlu0 %3735
        %3737 = vrot.lane.b32.xlu0 %v3707, 64
        %v3738 = vpop.permute.xlu0 %3737
        %3739 = vrot.lane.b32.xlu0 %v3708, 64
        %v3740 = vpop.permute.xlu0 %3739
        %vm3741 = vcmask 64512
        %v3744 = vsel %vm3741, %v3053, %v3118
        %v3747 = vsel %vm3741, %v3054, %v3120
        %v3750 = vsel %vm3741, %v3055, %v3122
        %v3753 = vsel %vm3741, %v3056, %v3124
        %v3756 = vsel %vm3741, %v3057, %v3126
        %v3759 = vsel %vm3741, %v3058, %v3128
        %v3762 = vsel %vm3741, %v3059, %v3130
        %v3765 = vsel %vm3741, %v3060, %v3132
        %v3768 = vsel %vm3741, %v3061, %v3134
        %v3771 = vsel %vm3741, %v3062, %v3136
        %v3774 = vsel %vm3741, %v3063, %v3138
        %v3777 = vsel %vm3741, %v3064, %v3140
        %v3780 = vsel %vm3741, %v3065, %v3142
        %v3783 = vsel %vm3741, %v3066, %v3144
        %v3786 = vsel %vm3741, %v3067, %v3146
        %v3789 = vsel %vm3741, %v3068, %v3148
        %vm3790 = vcmask 130048
        %v3792 = vsel %vm3790, %v3744, %v3198
        %v3794 = vsel %vm3790, %v3747, %v3200
        %v3796 = vsel %vm3790, %v3750, %v3202
        %v3798 = vsel %vm3790, %v3753, %v3204
        %v3800 = vsel %vm3790, %v3756, %v3206
        %v3802 = vsel %vm3790, %v3759, %v3208
        %v3804 = vsel %vm3790, %v3762, %v3210
        %v3806 = vsel %vm3790, %v3765, %v3212
        %v3808 = vsel %vm3790, %v3768, %v3214
        %v3810 = vsel %vm3790, %v3771, %v3216
        %v3812 = vsel %vm3790, %v3774, %v3218
        %v3814 = vsel %vm3790, %v3777, %v3220
        %v3816 = vsel %vm3790, %v3780, %v3222
        %v3818 = vsel %vm3790, %v3783, %v3224
        %v3820 = vsel %vm3790, %v3786, %v3226
        %v3822 = vsel %vm3790, %v3789, %v3228
        %vm3823 = vcmask 195584
        %v3825 = vsel %vm3823, %v3792, %v3294
        %v3827 = vsel %vm3823, %v3794, %v3296
        %v3829 = vsel %vm3823, %v3796, %v3298
        %v3831 = vsel %vm3823, %v3798, %v3300
        %v3833 = vsel %vm3823, %v3800, %v3302
        %v3835 = vsel %vm3823, %v3802, %v3304
        %v3837 = vsel %vm3823, %v3804, %v3306
        %v3839 = vsel %vm3823, %v3806, %v3308
        %v3841 = vsel %vm3823, %v3808, %v3310
        %v3843 = vsel %vm3823, %v3810, %v3312
        %v3845 = vsel %vm3823, %v3812, %v3314
        %v3847 = vsel %vm3823, %v3814, %v3316
        %v3849 = vsel %vm3823, %v3816, %v3318
        %v3851 = vsel %vm3823, %v3818, %v3320
        %v3853 = vsel %vm3823, %v3820, %v3322
        %v3855 = vsel %vm3823, %v3822, %v3324
        %v3857 = vsel %vm531, %v3825, %v3374
        %v3859 = vsel %vm531, %v3827, %v3376
        %v3861 = vsel %vm531, %v3829, %v3378
        %v3863 = vsel %vm531, %v3831, %v3380
        %v3865 = vsel %vm531, %v3833, %v3382
        %v3867 = vsel %vm531, %v3835, %v3384
        %v3869 = vsel %vm531, %v3837, %v3386
        %v3871 = vsel %vm531, %v3839, %v3388
        %v3873 = vsel %vm531, %v3841, %v3390
        %v3875 = vsel %vm531, %v3843, %v3392
        %v3877 = vsel %vm531, %v3845, %v3394
        %v3879 = vsel %vm531, %v3847, %v3396
        %v3881 = vsel %vm531, %v3849, %v3398
        %v3883 = vsel %vm531, %v3851, %v3400
        %v3885 = vsel %vm531, %v3853, %v3402
        %v3887 = vsel %vm531, %v3855, %v3404
        %vm3888 = vcmask 326656
        %v3890 = vsel %vm3888, %v3857, %v3454
        %v3892 = vsel %vm3888, %v3859, %v3456
        %v3894 = vsel %vm3888, %v3861, %v3458
        %v3896 = vsel %vm3888, %v3863, %v3460
        %v3898 = vsel %vm3888, %v3865, %v3462
        %v3900 = vsel %vm3888, %v3867, %v3464
        %v3902 = vsel %vm3888, %v3869, %v3466
        %v3904 = vsel %vm3888, %v3871, %v3468
        %v3906 = vsel %vm3888, %v3873, %v3470
        %v3908 = vsel %vm3888, %v3875, %v3472
        %v3910 = vsel %vm3888, %v3877, %v3474
        %v3912 = vsel %vm3888, %v3879, %v3476
        %v3914 = vsel %vm3888, %v3881, %v3478
        %v3916 = vsel %vm3888, %v3883, %v3480
        %v3918 = vsel %vm3888, %v3885, %v3482
        %v3920 = vsel %vm3888, %v3887, %v3484
        %vm3921 = vcmask 392192
        %v3923 = vsel %vm3921, %v3890, %v3550
        %v3925 = vsel %vm3921, %v3892, %v3552
        %v3927 = vsel %vm3921, %v3894, %v3554
        %v3929 = vsel %vm3921, %v3896, %v3556
        %v3931 = vsel %vm3921, %v3898, %v3558
        %v3933 = vsel %vm3921, %v3900, %v3560
        %v3935 = vsel %vm3921, %v3902, %v3562
        %v3937 = vsel %vm3921, %v3904, %v3564
        %v3939 = vsel %vm3921, %v3906, %v3566
        %v3941 = vsel %vm3921, %v3908, %v3568
        %v3943 = vsel %vm3921, %v3910, %v3570
        %v3945 = vsel %vm3921, %v3912, %v3572
        %v3947 = vsel %vm3921, %v3914, %v3574
        %v3949 = vsel %vm3921, %v3916, %v3576
        %v3951 = vsel %vm3921, %v3918, %v3578
        %v3953 = vsel %vm3921, %v3920, %v3580
        %vm3954 = vcmask 457728
        %v3956 = vsel %vm3954, %v3923, %v3630
        %v3958 = vsel %vm3954, %v3925, %v3632
        %v3960 = vsel %vm3954, %v3927, %v3634
        %v3962 = vsel %vm3954, %v3929, %v3636
        %v3964 = vsel %vm3954, %v3931, %v3638
        %v3966 = vsel %vm3954, %v3933, %v3640
        %v3968 = vsel %vm3954, %v3935, %v3642
        %v3970 = vsel %vm3954, %v3937, %v3644
        %v3972 = vsel %vm3954, %v3939, %v3646
        %v3974 = vsel %vm3954, %v3941, %v3648
        %v3976 = vsel %vm3954, %v3943, %v3650
        %v3978 = vsel %vm3954, %v3945, %v3652
        %v3980 = vsel %vm3954, %v3947, %v3654
        %v3982 = vsel %vm3954, %v3949, %v3656
        %v3984 = vsel %vm3954, %v3951, %v3658
        %v3986 = vsel %vm3954, %v3953, %v3660
        %vm3987 = vcmask 523264
        %v3989 = vsel %vm3987, %v3956, %v3710
        %v3991 = vsel %vm3987, %v3958, %v3712
        %v3993 = vsel %vm3987, %v3960, %v3714
        %v3995 = vsel %vm3987, %v3962, %v3716
        %v3997 = vsel %vm3987, %v3964, %v3718
        %v3999 = vsel %vm3987, %v3966, %v3720
        %v4001 = vsel %vm3987, %v3968, %v3722
        %v4003 = vsel %vm3987, %v3970, %v3724
        %v4005 = vsel %vm3987, %v3972, %v3726
        %v4007 = vsel %vm3987, %v3974, %v3728
        %v4009 = vsel %vm3987, %v3976, %v3730
        %v4011 = vsel %vm3987, %v3978, %v3732
        %v4013 = vsel %vm3987, %v3980, %v3734
        %v4015 = vsel %vm3987, %v3982, %v3736
        %v4017 = vsel %vm3987, %v3984, %v3738
        %v4019 = vsel %vm3987, %v3986, %v3740
        %v4020 = vld [vmem:[%s3] sm:$0xf]
        %v4021 = vld [vmem:[%s3 + $0x4] sm:$0xf]
        %v4022 = vld [vmem:[%s3 + $0x8] sm:$0xf]
        %v4023 = vld [vmem:[%s3 + $0xc] sm:$0xf]
        %v4024 = vld [vmem:[%s3 + $0x10] sm:$0xf]
        %v4025 = vld [vmem:[%s3 + $0x14] sm:$0xf]
        %v4026 = vld [vmem:[%s3 + $0x18] sm:$0xf]
        %v4027 = vld [vmem:[%s3 + $0x1c] sm:$0xf]
        %v4028 = vld [vmem:[%s3 + $0x20] sm:$0xf]
        %v4029 = vld [vmem:[%s4] sm:$0x1]
        %v4031 = vperm.slane %v4029, 0
        %v4042 = vunpack.c.l.b16 %v4020
        %v4043 = vunpack.c.l.b16 %v4021
        %v4044 = vunpack.c.l.b16 %v4022
        %v4045 = vunpack.c.l.b16 %v4023
        %v4046 = vunpack.c.l.b16 %v4024
        %v4047 = vunpack.c.l.b16 %v4025
        %v4048 = vunpack.c.l.b16 %v4026
        %v4049 = vunpack.c.l.b16 %v4027
        %v4050 = vunpack.c.l.b16 %v4028
        %v4051 = vpack.c.b16 %v4043, %v4042
        %v4052 = vpack.c.b16 %v4045, %v4044
        %v4053 = vpack.c.b16 %v4047, %v4046
        %v4054 = vpack.c.b16 %v4049, %v4048
        %v4055 = vpack.c.b16 %v4050, %v4050
        %vm4060 = vcmask 588800
        %v4061 = vsel %vm4060, %v3989, 0
        %v4063 = vsel %vm4060, %v3991, 0
        %v4065 = vsel %vm4060, %v3993, 0
        %v4067 = vsel %vm4060, %v3995, 0
        %v4069 = vsel %vm4060, %v3997, 0
        %v4071 = vsel %vm4060, %v3999, 0
        %v4073 = vsel %vm4060, %v4001, 0
        %v4075 = vsel %vm4060, %v4003, 0
        %v4077 = vsel %vm4060, %v4005, 0
        %v4079 = vsel %vm4060, %v4007, 0
        %v4081 = vsel %vm4060, %v4009, 0
        %v4083 = vsel %vm4060, %v4011, 0
        %v4085 = vsel %vm4060, %v4013, 0
        %v4087 = vsel %vm4060, %v4015, 0
        %v4089 = vsel %vm4060, %v4017, 0
        %v4091 = vsel %vm4060, %v4019, 0
        %vm4093 = vcmask 1043456
        %v4095 = vsel %vm4093, %v4055, 0
        %4097 = vmatpush.bf16.msra.mxu0 0
        %4098 = vmatpush.bf16.msra.mxu0 0
        %4099 = vmatpush.bf16.msra.mxu0 0
        %4100 = vmatpush.bf16.msra.mxu0 %v4095
        %4101 = vmatpush.bf16.msra.mxu0 %v4054
        %4102 = vmatpush.bf16.msra.mxu0 %v4053
        %4103 = vmatpush.bf16.msra.mxu0 %v4052
        %4104 = vmatpush.bf16.msra.mxu0 %v4051
        %4105 = vmatmul.bf16.gmra.mxu0 %v4061
        %v4106 = vpop.f32.mrf.mxu0
        %v4107 = vadd.f32 %v4031, %v4106
        %v4108 = vpop.f32.mrf.mxu0
        %v4109 = vadd.f32 %v4031, %v4108
        %4110 = vmatmul.bf16.gmra.mxu0 %v4063
        %v4111 = vpop.f32.mrf.mxu0
        %v4112 = vadd.f32 %v4031, %v4111
        %v4113 = vpop.f32.mrf.mxu0
        %v4114 = vadd.f32 %v4031, %v4113
        %4115 = vmatmul.bf16.gmra.mxu0 %v4065
        %v4116 = vpop.f32.mrf.mxu0
        %v4117 = vadd.f32 %v4031, %v4116
        %v4118 = vpop.f32.mrf.mxu0
        %v4119 = vadd.f32 %v4031, %v4118
        %4120 = vmatmul.bf16.gmra.mxu0 %v4067
        %v4121 = vpop.f32.mrf.mxu0
        %v4122 = vadd.f32 %v4031, %v4121
        %v4123 = vpop.f32.mrf.mxu0
        %v4124 = vadd.f32 %v4031, %v4123
        %4125 = vmatmul.bf16.gmra.mxu0 %v4069
        %v4126 = vpop.f32.mrf.mxu0
        %v4127 = vadd.f32 %v4031, %v4126
        %v4128 = vpop.f32.mrf.mxu0
        %v4129 = vadd.f32 %v4031, %v4128
        %4130 = vmatmul.bf16.gmra.mxu0 %v4071
        %v4131 = vpop.f32.mrf.mxu0
        %v4132 = vadd.f32 %v4031, %v4131
        %v4133 = vpop.f32.mrf.mxu0
        %v4134 = vadd.f32 %v4031, %v4133
        %4135 = vmatmul.bf16.gmra.mxu0 %v4073
        %v4136 = vpop.f32.mrf.mxu0
        %v4137 = vadd.f32 %v4031, %v4136
        %v4138 = vpop.f32.mrf.mxu0
        %v4139 = vadd.f32 %v4031, %v4138
        %4140 = vmatmul.bf16.gmra.mxu0 %v4075
        %v4141 = vpop.f32.mrf.mxu0
        %v4142 = vadd.f32 %v4031, %v4141
        %v4143 = vpop.f32.mrf.mxu0
        %v4144 = vadd.f32 %v4031, %v4143
        %4145 = vmatmul.bf16.gmra.mxu0 %v4077
        %v4146 = vpop.f32.mrf.mxu0
        %v4147 = vadd.f32 %v4031, %v4146
        %v4148 = vpop.f32.mrf.mxu0
        %v4149 = vadd.f32 %v4031, %v4148
        %4150 = vmatmul.bf16.gmra.mxu0 %v4079
        %v4151 = vpop.f32.mrf.mxu0
        %v4152 = vadd.f32 %v4031, %v4151
        %v4153 = vpop.f32.mrf.mxu0
        %v4154 = vadd.f32 %v4031, %v4153
        %4155 = vmatmul.bf16.gmra.mxu0 %v4081
        %v4156 = vpop.f32.mrf.mxu0
        %v4157 = vadd.f32 %v4031, %v4156
        %v4158 = vpop.f32.mrf.mxu0
        %v4159 = vadd.f32 %v4031, %v4158
        %4160 = vmatmul.bf16.gmra.mxu0 %v4083
        %v4161 = vpop.f32.mrf.mxu0
        %v4162 = vadd.f32 %v4031, %v4161
        %v4163 = vpop.f32.mrf.mxu0
        %v4164 = vadd.f32 %v4031, %v4163
        %4165 = vmatmul.bf16.gmra.mxu0 %v4085
        %v4166 = vpop.f32.mrf.mxu0
        %v4167 = vadd.f32 %v4031, %v4166
        %v4168 = vpop.f32.mrf.mxu0
        %v4169 = vadd.f32 %v4031, %v4168
        %4170 = vmatmul.bf16.gmra.mxu0 %v4087
        %v4171 = vpop.f32.mrf.mxu0
        %v4172 = vadd.f32 %v4031, %v4171
        %v4173 = vpop.f32.mrf.mxu0
        %v4174 = vadd.f32 %v4031, %v4173
        %4175 = vmatmul.bf16.gmra.mxu0 %v4089
        %v4176 = vpop.f32.mrf.mxu0
        %v4177 = vadd.f32 %v4031, %v4176
        %v4178 = vpop.f32.mrf.mxu0
        %v4179 = vadd.f32 %v4031, %v4178
        %4180 = vmatmul.bf16.gmra.mxu0 %v4091
        %v4181 = vpop.f32.mrf.mxu0
        %v4182 = vadd.f32 %v4031, %v4181
        %v4183 = vpop.f32.mrf.mxu0
        %v4184 = vadd.f32 %v4031, %v4183
        %4185 = vdwg.mxu0
        %v4186 = vmax.f32 %v4107, 0.0
        %v4187 = vmax.f32 %v4109, 0.0
        %v4188 = vmax.f32 %v4112, 0.0
        %v4189 = vmax.f32 %v4114, 0.0
        %v4190 = vmax.f32 %v4117, 0.0
        %v4191 = vmax.f32 %v4119, 0.0
        %v4192 = vmax.f32 %v4122, 0.0
        %v4193 = vmax.f32 %v4124, 0.0
        %v4194 = vmax.f32 %v4127, 0.0
        %v4195 = vmax.f32 %v4129, 0.0
        %v4196 = vmax.f32 %v4132, 0.0
        %v4197 = vmax.f32 %v4134, 0.0
        %v4198 = vmax.f32 %v4137, 0.0
        %v4199 = vmax.f32 %v4139, 0.0
        %v4200 = vmax.f32 %v4142, 0.0
        %v4201 = vmax.f32 %v4144, 0.0
        %v4202 = vmax.f32 %v4147, 0.0
        %v4203 = vmax.f32 %v4149, 0.0
        %v4204 = vmax.f32 %v4152, 0.0
        %v4205 = vmax.f32 %v4154, 0.0
        %v4206 = vmax.f32 %v4157, 0.0
        %v4207 = vmax.f32 %v4159, 0.0
        %v4208 = vmax.f32 %v4162, 0.0
        %v4209 = vmax.f32 %v4164, 0.0
        %v4210 = vmax.f32 %v4167, 0.0
        %v4211 = vmax.f32 %v4169, 0.0
        %v4212 = vmax.f32 %v4172, 0.0
        %v4213 = vmax.f32 %v4174, 0.0
        %v4214 = vmax.f32 %v4177, 0.0
        %v4215 = vmax.f32 %v4179, 0.0
        %v4216 = vmax.f32 %v4182, 0.0
        %v4217 = vmax.f32 %v4184, 0.0
        %v4218 = vpack.c.bf16 %v4187, %v4186
        %v4219 = vpack.c.bf16 %v4189, %v4188
        %v4220 = vpack.c.bf16 %v4191, %v4190
        %v4221 = vpack.c.bf16 %v4193, %v4192
        %v4222 = vpack.c.bf16 %v4195, %v4194
        %v4223 = vpack.c.bf16 %v4197, %v4196
        %v4224 = vpack.c.bf16 %v4199, %v4198
        %v4225 = vpack.c.bf16 %v4201, %v4200
        %v4226 = vpack.c.bf16 %v4203, %v4202
        %v4227 = vpack.c.bf16 %v4205, %v4204
        %v4228 = vpack.c.bf16 %v4207, %v4206
        %v4229 = vpack.c.bf16 %v4209, %v4208
        %v4230 = vpack.c.bf16 %v4211, %v4210
        %v4231 = vpack.c.bf16 %v4213, %v4212
        %v4232 = vpack.c.bf16 %v4215, %v4214
        %v4233 = vpack.c.bf16 %v4217, %v4216
        %v4234 = vld [vmem:[%s5] sm:$0xf]
        %v4235 = vld [vmem:[%s6] sm:$0x1]
        %v4237 = vperm.slane %v4235, 0
        %v4240 = vsel %vm3741, %v4218, 0
        %v4243 = vsel %vm3741, %v4219, 0
        %v4246 = vsel %vm3741, %v4220, 0
        %v4249 = vsel %vm3741, %v4221, 0
        %v4252 = vsel %vm3741, %v4222, 0
        %v4255 = vsel %vm3741, %v4223, 0
        %v4258 = vsel %vm3741, %v4224, 0
        %v4261 = vsel %vm3741, %v4225, 0
        %v4264 = vsel %vm3741, %v4226, 0
        %v4267 = vsel %vm3741, %v4227, 0
        %v4270 = vsel %vm3741, %v4228, 0
        %v4273 = vsel %vm3741, %v4229, 0
        %v4276 = vsel %vm3741, %v4230, 0
        %v4279 = vsel %vm3741, %v4231, 0
        %v4282 = vsel %vm3741, %v4232, 0
        %v4285 = vsel %vm3741, %v4233, 0
        %v4288 = vsel %vm4093, %v4234, 0
        %4290 = vmatpush.bf16.msra.mxu0 0
        %4291 = vmatpush.bf16.msra.mxu0 0
        %4292 = vmatpush.bf16.msra.mxu0 0
        %4293 = vmatpush.bf16.msra.mxu0 0
        %4294 = vmatpush.bf16.msra.mxu0 0
        %4295 = vmatpush.bf16.msra.mxu0 0
        %4296 = vmatpush.bf16.msra.mxu0 0
        %4297 = vmatpush.bf16.msra.mxu0 %v4288
        %4298 = vmatmul.bf16.gmra.mxu0 %v4240
        %v4299 = vpop.f32.mrf.mxu0
        %v4300 = vadd.f32 %v4237, %v4299
        %v4301 = vpop.f32.mrf.mxu0
        %v4302 = vadd.f32 %v4237, %v4301
        %4303 = vmatmul.bf16.gmra.mxu0 %v4243
        %v4304 = vpop.f32.mrf.mxu0
        %v4305 = vadd.f32 %v4237, %v4304
        %v4306 = vpop.f32.mrf.mxu0
        %v4307 = vadd.f32 %v4237, %v4306
        %4308 = vmatmul.bf16.gmra.mxu0 %v4246
        %v4309 = vpop.f32.mrf.mxu0
        %v4310 = vadd.f32 %v4237, %v4309
        %v4311 = vpop.f32.mrf.mxu0
        %v4312 = vadd.f32 %v4237, %v4311
        %4313 = vmatmul.bf16.gmra.mxu0 %v4249
        %v4314 = vpop.f32.mrf.mxu0
        %v4315 = vadd.f32 %v4237, %v4314
        %v4316 = vpop.f32.mrf.mxu0
        %v4317 = vadd.f32 %v4237, %v4316
        %4318 = vmatmul.bf16.gmra.mxu0 %v4252
        %v4319 = vpop.f32.mrf.mxu0
        %v4320 = vadd.f32 %v4237, %v4319
        %v4321 = vpop.f32.mrf.mxu0
        %v4322 = vadd.f32 %v4237, %v4321
        %4323 = vmatmul.bf16.gmra.mxu0 %v4255
        %v4324 = vpop.f32.mrf.mxu0
        %v4325 = vadd.f32 %v4237, %v4324
        %v4326 = vpop.f32.mrf.mxu0
        %v4327 = vadd.f32 %v4237, %v4326
        %4328 = vmatmul.bf16.gmra.mxu0 %v4258
        %v4329 = vpop.f32.mrf.mxu0
        %v4330 = vadd.f32 %v4237, %v4329
        %v4331 = vpop.f32.mrf.mxu0
        %v4332 = vadd.f32 %v4237, %v4331
        %4333 = vmatmul.bf16.gmra.mxu0 %v4261
        %v4334 = vpop.f32.mrf.mxu0
        %v4335 = vadd.f32 %v4237, %v4334
        %v4336 = vpop.f32.mrf.mxu0
        %v4337 = vadd.f32 %v4237, %v4336
        %4338 = vmatmul.bf16.gmra.mxu0 %v4264
        %v4339 = vpop.f32.mrf.mxu0
        %v4340 = vadd.f32 %v4237, %v4339
        %v4341 = vpop.f32.mrf.mxu0
        %v4342 = vadd.f32 %v4237, %v4341
        %4343 = vmatmul.bf16.gmra.mxu0 %v4267
        %v4344 = vpop.f32.mrf.mxu0
        %v4345 = vadd.f32 %v4237, %v4344
        %v4346 = vpop.f32.mrf.mxu0
        %v4347 = vadd.f32 %v4237, %v4346
        %4348 = vmatmul.bf16.gmra.mxu0 %v4270
        %v4349 = vpop.f32.mrf.mxu0
        %v4350 = vadd.f32 %v4237, %v4349
        %v4351 = vpop.f32.mrf.mxu0
        %v4352 = vadd.f32 %v4237, %v4351
        %4353 = vmatmul.bf16.gmra.mxu0 %v4273
        %v4354 = vpop.f32.mrf.mxu0
        %v4355 = vadd.f32 %v4237, %v4354
        %v4356 = vpop.f32.mrf.mxu0
        %v4357 = vadd.f32 %v4237, %v4356
        %4358 = vmatmul.bf16.gmra.mxu0 %v4276
        %v4359 = vpop.f32.mrf.mxu0
        %v4360 = vadd.f32 %v4237, %v4359
        %v4361 = vpop.f32.mrf.mxu0
        %v4362 = vadd.f32 %v4237, %v4361
        %4363 = vmatmul.bf16.gmra.mxu0 %v4279
        %v4364 = vpop.f32.mrf.mxu0
        %v4365 = vadd.f32 %v4237, %v4364
        %v4366 = vpop.f32.mrf.mxu0
        %v4367 = vadd.f32 %v4237, %v4366
        %4368 = vmatmul.bf16.gmra.mxu0 %v4282
        %v4369 = vpop.f32.mrf.mxu0
        %v4370 = vadd.f32 %v4237, %v4369
        %v4371 = vpop.f32.mrf.mxu0
        %v4372 = vadd.f32 %v4237, %v4371
        %4373 = vmatmul.bf16.gmra.mxu0 %v4285
        %v4374 = vpop.f32.mrf.mxu0
        %v4375 = vadd.f32 %v4237, %v4374
        %v4376 = vpop.f32.mrf.mxu0
        %v4377 = vadd.f32 %v4237, %v4376
        %4378 = vdwg.mxu0
        %v4379 = vsel %vm531, %v4300, 0.0
        %v4380 = vsel %vm531, %v4302, 0.0
        %v4381 = vadd.f32 %v4379, %v4380
        %v4382 = vrot.slane %v4381, 4
        %v4383 = vadd.f32 %v4381, %v4382
        %v4384 = vrot.slane %v4383, 2
        %v4385 = vadd.f32 %v4383, %v4384
        %v4386 = vrot.slane %v4385, 1
        %v4387 = vadd.f32 %v4385, %v4386
        %v4388 = vsel %vm531, %v4305, 0.0
        %v4389 = vsel %vm531, %v4307, 0.0
        %v4390 = vadd.f32 %v4388, %v4389
        %v4391 = vrot.slane %v4390, 4
        %v4392 = vadd.f32 %v4390, %v4391
        %v4393 = vrot.slane %v4392, 2
        %v4394 = vadd.f32 %v4392, %v4393
        %v4395 = vrot.slane %v4394, 1
        %v4396 = vadd.f32 %v4394, %v4395
        %v4397 = vsel %vm531, %v4310, 0.0
        %v4398 = vsel %vm531, %v4312, 0.0
        %v4399 = vadd.f32 %v4397, %v4398
        %v4400 = vrot.slane %v4399, 4
        %v4401 = vadd.f32 %v4399, %v4400
        %v4402 = vrot.slane %v4401, 2
        %v4403 = vadd.f32 %v4401, %v4402
        %v4404 = vrot.slane %v4403, 1
        %v4405 = vadd.f32 %v4403, %v4404
        %v4406 = vsel %vm531, %v4315, 0.0
        %v4407 = vsel %vm531, %v4317, 0.0
        %v4408 = vadd.f32 %v4406, %v4407
        %v4409 = vrot.slane %v4408, 4
        %v4410 = vadd.f32 %v4408, %v4409
        %v4411 = vrot.slane %v4410, 2
        %v4412 = vadd.f32 %v4410, %v4411
        %v4413 = vrot.slane %v4412, 1
        %v4414 = vadd.f32 %v4412, %v4413
        %v4415 = vsel %vm531, %v4320, 0.0
        %v4416 = vsel %vm531, %v4322, 0.0
        %v4417 = vadd.f32 %v4415, %v4416
        %v4418 = vrot.slane %v4417, 4
        %v4419 = vadd.f32 %v4417, %v4418
        %v4420 = vrot.slane %v4419, 2
        %v4421 = vadd.f32 %v4419, %v4420
        %v4422 = vrot.slane %v4421, 1
        %v4423 = vadd.f32 %v4421, %v4422
        %v4424 = vsel %vm531, %v4325, 0.0
        %v4425 = vsel %vm531, %v4327, 0.0
        %v4426 = vadd.f32 %v4424, %v4425
        %v4427 = vrot.slane %v4426, 4
        %v4428 = vadd.f32 %v4426, %v4427
        %v4429 = vrot.slane %v4428, 2
        %v4430 = vadd.f32 %v4428, %v4429
        %v4431 = vrot.slane %v4430, 1
        %v4432 = vadd.f32 %v4430, %v4431
        %v4433 = vsel %vm531, %v4330, 0.0
        %v4434 = vsel %vm531, %v4332, 0.0
        %v4435 = vadd.f32 %v4433, %v4434
        %v4436 = vrot.slane %v4435, 4
        %v4437 = vadd.f32 %v4435, %v4436
        %v4438 = vrot.slane %v4437, 2
        %v4439 = vadd.f32 %v4437, %v4438
        %v4440 = vrot.slane %v4439, 1
        %v4441 = vadd.f32 %v4439, %v4440
        %v4442 = vsel %vm531, %v4335, 0.0
        %v4443 = vsel %vm531, %v4337, 0.0
        %v4444 = vadd.f32 %v4442, %v4443
        %v4445 = vrot.slane %v4444, 4
        %v4446 = vadd.f32 %v4444, %v4445
        %v4447 = vrot.slane %v4446, 2
        %v4448 = vadd.f32 %v4446, %v4447
        %v4449 = vrot.slane %v4448, 1
        %v4450 = vadd.f32 %v4448, %v4449
        %v4451 = vsel %vm531, %v4340, 0.0
        %v4452 = vsel %vm531, %v4342, 0.0
        %v4453 = vadd.f32 %v4451, %v4452
        %v4454 = vrot.slane %v4453, 4
        %v4455 = vadd.f32 %v4453, %v4454
        %v4456 = vrot.slane %v4455, 2
        %v4457 = vadd.f32 %v4455, %v4456
        %v4458 = vrot.slane %v4457, 1
        %v4459 = vadd.f32 %v4457, %v4458
        %v4460 = vsel %vm531, %v4345, 0.0
        %v4461 = vsel %vm531, %v4347, 0.0
        %v4462 = vadd.f32 %v4460, %v4461
        %v4463 = vrot.slane %v4462, 4
        %v4464 = vadd.f32 %v4462, %v4463
        %v4465 = vrot.slane %v4464, 2
        %v4466 = vadd.f32 %v4464, %v4465
        %v4467 = vrot.slane %v4466, 1
        %v4468 = vadd.f32 %v4466, %v4467
        %v4469 = vsel %vm531, %v4350, 0.0
        %v4470 = vsel %vm531, %v4352, 0.0
        %v4471 = vadd.f32 %v4469, %v4470
        %v4472 = vrot.slane %v4471, 4
        %v4473 = vadd.f32 %v4471, %v4472
        %v4474 = vrot.slane %v4473, 2
        %v4475 = vadd.f32 %v4473, %v4474
        %v4476 = vrot.slane %v4475, 1
        %v4477 = vadd.f32 %v4475, %v4476
        %v4478 = vsel %vm531, %v4355, 0.0
        %v4479 = vsel %vm531, %v4357, 0.0
        %v4480 = vadd.f32 %v4478, %v4479
        %v4481 = vrot.slane %v4480, 4
        %v4482 = vadd.f32 %v4480, %v4481
        %v4483 = vrot.slane %v4482, 2
        %v4484 = vadd.f32 %v4482, %v4483
        %v4485 = vrot.slane %v4484, 1
        %v4486 = vadd.f32 %v4484, %v4485
        %v4487 = vsel %vm531, %v4360, 0.0
        %v4488 = vsel %vm531, %v4362, 0.0
        %v4489 = vadd.f32 %v4487, %v4488
        %v4490 = vrot.slane %v4489, 4
        %v4491 = vadd.f32 %v4489, %v4490
        %v4492 = vrot.slane %v4491, 2
        %v4493 = vadd.f32 %v4491, %v4492
        %v4494 = vrot.slane %v4493, 1
        %v4495 = vadd.f32 %v4493, %v4494
        %v4496 = vsel %vm531, %v4365, 0.0
        %v4497 = vsel %vm531, %v4367, 0.0
        %v4498 = vadd.f32 %v4496, %v4497
        %v4499 = vrot.slane %v4498, 4
        %v4500 = vadd.f32 %v4498, %v4499
        %v4501 = vrot.slane %v4500, 2
        %v4502 = vadd.f32 %v4500, %v4501
        %v4503 = vrot.slane %v4502, 1
        %v4504 = vadd.f32 %v4502, %v4503
        %v4505 = vsel %vm531, %v4370, 0.0
        %v4506 = vsel %vm531, %v4372, 0.0
        %v4507 = vadd.f32 %v4505, %v4506
        %v4508 = vrot.slane %v4507, 4
        %v4509 = vadd.f32 %v4507, %v4508
        %v4510 = vrot.slane %v4509, 2
        %v4511 = vadd.f32 %v4509, %v4510
        %v4512 = vrot.slane %v4511, 1
        %v4513 = vadd.f32 %v4511, %v4512
        %v4514 = vsel %vm531, %v4375, 0.0
        %v4515 = vsel %vm531, %v4377, 0.0
        %v4516 = vadd.f32 %v4514, %v4515
        %v4517 = vrot.slane %v4516, 4
        %v4518 = vadd.f32 %v4516, %v4517
        %v4519 = vrot.slane %v4518, 2
        %v4520 = vadd.f32 %v4518, %v4519
        %v4521 = vrot.slane %v4520, 1
        %v4522 = vadd.f32 %v4520, %v4521
        %v4523 = vrcp.pop 16.0
        %v4524 = vmul.f32 16.0, %v4523
        %v4525 = vsub.f32 1.0, %v4524
        %v4526 = vmul.f32 %v4523, %v4525
        %v4527 = vadd.f32 %v4523, %v4526
        %vm4528 = vweird.f32 %v4523
        %v4529 = vsel %vm4528, %v4523, %v4527
        %v4530 = vmul.f32 %v4387, %v4529
        %v4531 = vmul.f32 %v4396, %v4529
        %v4532 = vmul.f32 %v4405, %v4529
        %v4533 = vmul.f32 %v4414, %v4529
        %v4534 = vmul.f32 %v4423, %v4529
        %v4535 = vmul.f32 %v4432, %v4529
        %v4536 = vmul.f32 %v4441, %v4529
        %v4537 = vmul.f32 %v4450, %v4529
        %v4538 = vmul.f32 %v4459, %v4529
        %v4539 = vmul.f32 %v4468, %v4529
        %v4540 = vmul.f32 %v4477, %v4529
        %v4541 = vmul.f32 %v4486, %v4529
        %v4542 = vmul.f32 %v4495, %v4529
        %v4543 = vmul.f32 %v4504, %v4529
        %v4544 = vmul.f32 %v4513, %v4529
        %v4545 = vmul.f32 %v4522, %v4529
        %v4546 = vadd.f32 %v4379, %v4388
        %v4547 = vadd.f32 %v4546, %v4397
        %v4548 = vadd.f32 %v4547, %v4406
        %v4549 = vadd.f32 %v4548, %v4415
        %v4550 = vadd.f32 %v4549, %v4424
        %v4551 = vadd.f32 %v4550, %v4433
        %v4552 = vadd.f32 %v4551, %v4442
        %v4553 = vadd.f32 %v4552, %v4451
        %v4554 = vadd.f32 %v4553, %v4460
        %v4555 = vadd.f32 %v4554, %v4469
        %v4556 = vadd.f32 %v4555, %v4478
        %v4557 = vadd.f32 %v4556, %v4487
        %v4558 = vadd.f32 %v4557, %v4496
        %v4559 = vadd.f32 %v4558, %v4505
        %v4560 = vadd.f32 %v4559, %v4514
        %v4561 = vadd.f32 %v4380, %v4389
        %v4562 = vadd.f32 %v4561, %v4398
        %v4563 = vadd.f32 %v4562, %v4407
        %v4564 = vadd.f32 %v4563, %v4416
        %v4565 = vadd.f32 %v4564, %v4425
        %v4566 = vadd.f32 %v4565, %v4434
        %v4567 = vadd.f32 %v4566, %v4443
        %v4568 = vadd.f32 %v4567, %v4452
        %v4569 = vadd.f32 %v4568, %v4461
        %v4570 = vadd.f32 %v4569, %v4470
        %v4571 = vadd.f32 %v4570, %v4479
        %v4572 = vadd.f32 %v4571, %v4488
        %v4573 = vadd.f32 %v4572, %v4497
        %v4574 = vadd.f32 %v4573, %v4506
        %v4575 = vadd.f32 %v4574, %v4515
        %v4576 = vmul.f32 %v4560, %v4529
        %v4577 = vmul.f32 %v4575, %v4529
        %vm4594 = vcmask 1041409
        %v4595 = vsel %vm4594, %v4531, %v4530
        %vm4596 = vcmask 1042434
        %v4597 = vsel %vm4596, %v4532, %v4595
        %vm4598 = vcmask 1043459
        %v4599 = vsel %vm4598, %v4533, %v4597
        %vm4600 = vcmask 1044484
        %v4601 = vsel %vm4600, %v4534, %v4599
        %vm4602 = vcmask 1045509
        %v4603 = vsel %vm4602, %v4535, %v4601
        %vm4604 = vcmask 1046534
        %v4605 = vsel %vm4604, %v4536, %v4603
        %vm4606 = vcmask 1047559
        %v4607 = vsel %vm4606, %v4537, %v4605
        %v4608 = vsel %vm4594, %v4539, %v4538
        %v4609 = vsel %vm4596, %v4540, %v4608
        %v4610 = vsel %vm4598, %v4541, %v4609
        %v4611 = vsel %vm4600, %v4542, %v4610
        %v4612 = vsel %vm4602, %v4543, %v4611
        %v4613 = vsel %vm4604, %v4544, %v4612
        %v4614 = vsel %vm4606, %v4545, %v4613
        %v4615 = vld [vmem:[%s7] sm:$0xff]
        %v4616 = vld [vmem:[%s7 + $0x8] sm:$0xff]
        %v4617 = vld [vmem:[%s7 + $0x10] sm:$0xff]
        %v4618 = vld [vmem:[%s7 + $0x18] sm:$0xff]
        %v4619 = vld [vmem:[%s8] sm:$0x1]
        %v4621 = vperm.slane %v4619, 0
        %v4623 = vsel %vm531, %v4607, 0
        %v4625 = vsel %vm531, %v4614, 0
        %v4628 = vsel %vm531, %v4576, 0
        %v4631 = vsel %vm531, %v4577, 0
        %4633 = vmatpush.msra.mxu0 0.0
        %4634 = vmatpush.msra.mxu0 0.0
        %4635 = vmatpush.msra.mxu0 0.0
        %4636 = vmatpush.msra.mxu0 0.0
        %4637 = vmatpush.msra.mxu0 0.0
        %4638 = vmatpush.msra.mxu0 0.0
        %4639 = vmatpush.msra.mxu0 0.0
        %4640 = vmatpush.msra.mxu0 0.0
        %4641 = vmatpush.msra.mxu0 0.0
        %4642 = vmatpush.msra.mxu0 0.0
        %4643 = vmatpush.msra.mxu0 0.0
        %4644 = vmatpush.msra.mxu0 0.0
        %4645 = vmatpush.msra.mxu0 %v4618
        %4646 = vmatpush.msra.mxu0 %v4617
        %4647 = vmatpush.msra.mxu0 %v4616
        %4648 = vmatpush.msra.mxu0 %v4615
        %4649 = vmatmul.f32.gmra.mxu0 %v4623
        %v4650 = vpop.f32.mrf.mxu0
        %v4651 = vadd.f32 %v4621, %v4650
        %4652 = vmatmul.f32.gmra.mxu0 %v4625
        %v4653 = vpop.f32.mrf.mxu0
        %v4654 = vadd.f32 %v4621, %v4653
        %4655 = vmatmul.f32.gmra.mxu0 %v4628
        %v4656 = vpop.f32.mrf.mxu0
        %v4657 = vadd.f32 %v4621, %v4656
        %4658 = vmatmul.f32.gmra.mxu0 %v4631
        %v4659 = vpop.f32.mrf.mxu0
        %v4660 = vadd.f32 %v4621, %v4659
        %4661 = vdwg.mxu0
        %v4662 = vadd.f32 %v4651, 3.0
        %v4663 = vadd.f32 %v4654, 3.0
        %v4664 = vadd.f32 %v4657, 3.0
        %v4665 = vadd.f32 %v4660, 3.0
        %v4666 = vmax.f32 %v4662, 0.0
        %v4667 = vmax.f32 %v4663, 0.0
        %v4668 = vmax.f32 %v4664, 0.0
        %v4669 = vmax.f32 %v4665, 0.0
        %v4670 = vmin.f32 %v4666, 6.0
        %v4671 = vmin.f32 %v4667, 6.0
        %v4672 = vmin.f32 %v4668, 6.0
        %v4673 = vmin.f32 %v4669, 6.0
        %v4674 = vmul.f32 %v4670, 0.16666667
        %v4675 = vmul.f32 %v4671, 0.16666667
        %v4676 = vmul.f32 %v4672, 0.16666667
        %v4677 = vmul.f32 %v4673, 0.16666667
        %v4678 = vmul.f32 %v4651, %v4674
        %v4679 = vmul.f32 %v4654, %v4675
        %v4680 = vmul.f32 %v4657, %v4676
        %v4681 = vmul.f32 %v4660, %v4677
        %v4682 = vld [vmem:[%s9] sm:$0xff]
        %v4683 = vld [vmem:[%s10] sm:$0x1]
        %v4685 = vperm.slane %v4683, 0
        %v4688 = vsel %vm3741, %v4678, 0
        %v4691 = vsel %vm3741, %v4679, 0
        %v4694 = vsel %vm3741, %v4680, 0
        %v4697 = vsel %vm3741, %v4681, 0
        %4699 = vmatpush.msra.mxu0 0.0
        %4700 = vmatpush.msra.mxu0 0.0
        %4701 = vmatpush.msra.mxu0 0.0
        %4702 = vmatpush.msra.mxu0 0.0
        %4703 = vmatpush.msra.mxu0 0.0
        %4704 = vmatpush.msra.mxu0 0.0
        %4705 = vmatpush.msra.mxu0 0.0
        %4706 = vmatpush.msra.mxu0 0.0
        %4707 = vmatpush.msra.mxu0 0.0
        %4708 = vmatpush.msra.mxu0 0.0
        %4709 = vmatpush.msra.mxu0 0.0
        %4710 = vmatpush.msra.mxu0 0.0
        %4711 = vmatpush.msra.mxu0 0.0
        %4712 = vmatpush.msra.mxu0 0.0
        %4713 = vmatpush.msra.mxu0 0.0
        %4714 = vmatpush.msra.mxu0 %v4682
        %4715 = vmatmul.f32.gmra.mxu0 %v4688
        %v4716 = vpop.f32.mrf.mxu0
        %v4717 = vadd.f32 %v4685, %v4716
        %4718 = vmatmul.f32.gmra.mxu0 %v4691
        %v4719 = vpop.f32.mrf.mxu0
        %v4720 = vadd.f32 %v4685, %v4719
        %4721 = vmatmul.f32.gmra.mxu0 %v4694
        %v4722 = vpop.f32.mrf.mxu0
        %v4723 = vadd.f32 %v4685, %v4722
        %4724 = vmatmul.f32.gmra.mxu0 %v4697
        %v4725 = vpop.f32.mrf.mxu0
        %v4726 = vadd.f32 %v4685, %v4725
        %4727 = vdwg.mxu0
        %v4728 = vxor.u32 %v4717, 2147483648
        %v4729 = vxor.u32 %v4720, 2147483648
        %v4730 = vxor.u32 %v4723, 2147483648
        %v4731 = vxor.u32 %v4726, 2147483648
        %v4732 = vmul.f32 %v4728, 1.442695
        %v4733 = vpow.pop %v4732
        %v4734 = vmul.f32 %v4729, 1.442695
        %v4735 = vpow.pop %v4734
        %v4736 = vmul.f32 %v4730, 1.442695
        %v4737 = vpow.pop %v4736
        %v4738 = vmul.f32 %v4731, 1.442695
        %v4739 = vpow.pop %v4738
        %v4740 = vadd.f32 %v4733, 1.0
        %v4741 = vadd.f32 %v4735, 1.0
        %v4742 = vadd.f32 %v4737, 1.0
        %v4743 = vadd.f32 %v4739, 1.0
        %v4744 = vrcp.pop %v4740
        %v4745 = vmul.f32 %v4740, %v4744
        %v4746 = vsub.f32 1.0, %v4745
        %v4747 = vmul.f32 %v4744, %v4746
        %v4748 = vadd.f32 %v4744, %v4747
        %vm4749 = vweird.f32 %v4740
        %vm4750 = vweird.f32 %v4744
        %vm4751 = vmor %vm4749, %vm4750
        %v4752 = vsel %vm4751, %v4744, %v4748
        %v4753 = vand.u32 2147483647, %v4740
        %vm4754 = vcmp.eq.f32.partialorder %v4753, 8.507059e+37
        %v4755 = vand.u32 %v4740, 2147483648
        %v4756 = vor.u32 1.1754944e-38, %v4755
        %v4757 = vsel %vm4754, %v4756, %v4752
        %v4758 = vmul.f32 1.0, %v4757
        %v4759 = vrcp.pop %v4741
        %v4760 = vmul.f32 %v4741, %v4759
        %v4761 = vsub.f32 1.0, %v4760
        %v4762 = vmul.f32 %v4759, %v4761
        %v4763 = vadd.f32 %v4759, %v4762
        %vm4764 = vweird.f32 %v4741
        %vm4765 = vweird.f32 %v4759
        %vm4766 = vmor %vm4764, %vm4765
        %v4767 = vsel %vm4766, %v4759, %v4763
        %v4768 = vand.u32 2147483647, %v4741
        %vm4769 = vcmp.eq.f32.partialorder %v4768, 8.507059e+37
        %v4770 = vand.u32 %v4741, 2147483648
        %v4771 = vor.u32 1.1754944e-38, %v4770
        %v4772 = vsel %vm4769, %v4771, %v4767
        %v4773 = vmul.f32 1.0, %v4772
        %v4774 = vrcp.pop %v4742
        %v4775 = vmul.f32 %v4742, %v4774
        %v4776 = vsub.f32 1.0, %v4775
        %v4777 = vmul.f32 %v4774, %v4776
        %v4778 = vadd.f32 %v4774, %v4777
        %vm4779 = vweird.f32 %v4742
        %vm4780 = vweird.f32 %v4774
        %vm4781 = vmor %vm4779, %vm4780
        %v4782 = vsel %vm4781, %v4774, %v4778
        %v4783 = vand.u32 2147483647, %v4742
        %vm4784 = vcmp.eq.f32.partialorder %v4783, 8.507059e+37
        %v4785 = vand.u32 %v4742, 2147483648
        %v4786 = vor.u32 1.1754944e-38, %v4785
        %v4787 = vsel %vm4784, %v4786, %v4782
        %v4788 = vmul.f32 1.0, %v4787
        %v4789 = vrcp.pop %v4743
        %v4790 = vmul.f32 %v4743, %v4789
        %v4791 = vsub.f32 1.0, %v4790
        %v4792 = vmul.f32 %v4789, %v4791
        %v4793 = vadd.f32 %v4789, %v4792
        %vm4794 = vweird.f32 %v4743
        %vm4795 = vweird.f32 %v4789
        %vm4796 = vmor %vm4794, %vm4795
        %v4797 = vsel %vm4796, %v4789, %v4793
        %v4798 = vand.u32 2147483647, %v4743
        %vm4799 = vcmp.eq.f32.partialorder %v4798, 8.507059e+37
        %v4800 = vand.u32 %v4743, 2147483648
        %v4801 = vor.u32 1.1754944e-38, %v4800
        %v4802 = vsel %vm4799, %v4801, %v4797
        %v4803 = vmul.f32 1.0, %v4802
        %4806 = vrot.lane.b32.xlu0 %v4788, 96
        %v4807 = vpop.permute.xlu0 %4806
        %4808 = vrot.lane.b32.xlu0 %v4803, 96
        %v4809 = vpop.permute.xlu0 %4808
        %v4812 = vmul.f32 %v4300, %v4807
        %v4813 = vmul.f32 %v4302, %v4809
        %v4814 = vmul.f32 %v4305, %v4807
        %v4815 = vmul.f32 %v4307, %v4809
        %v4816 = vmul.f32 %v4310, %v4807
        %v4817 = vmul.f32 %v4312, %v4809
        %v4818 = vmul.f32 %v4315, %v4807
        %v4819 = vmul.f32 %v4317, %v4809
        %v4820 = vmul.f32 %v4320, %v4807
        %v4821 = vmul.f32 %v4322, %v4809
        %v4822 = vmul.f32 %v4325, %v4807
        %v4823 = vmul.f32 %v4327, %v4809
        %v4824 = vmul.f32 %v4330, %v4807
        %v4825 = vmul.f32 %v4332, %v4809
        %v4826 = vmul.f32 %v4335, %v4807
        %v4827 = vmul.f32 %v4337, %v4809
        %v4828 = vmul.f32 %v4340, %v4807
        %v4829 = vmul.f32 %v4342, %v4809
        %v4830 = vmul.f32 %v4345, %v4807
        %v4831 = vmul.f32 %v4347, %v4809
        %v4832 = vmul.f32 %v4350, %v4807
        %v4833 = vmul.f32 %v4352, %v4809
        %v4834 = vmul.f32 %v4355, %v4807
        %v4835 = vmul.f32 %v4357, %v4809
        %v4836 = vmul.f32 %v4360, %v4807
        %v4837 = vmul.f32 %v4362, %v4809
        %v4838 = vmul.f32 %v4365, %v4807
        %v4839 = vmul.f32 %v4367, %v4809
        %v4840 = vmul.f32 %v4370, %v4807
        %v4841 = vmul.f32 %v4372, %v4809
        %v4842 = vmul.f32 %v4375, %v4807
        %v4843 = vmul.f32 %v4377, %v4809
        %v4846 = vrot.slane %v4758, 1
        %v4847 = vrot.slane %v4758, 2
        %v4848 = vrot.slane %v4758, 3
        %v4849 = vrot.slane %v4758, 4
        %v4850 = vrot.slane %v4758, 5
        %v4851 = vrot.slane %v4758, 6
        %v4852 = vrot.slane %v4758, 7
        %v4853 = vrot.slane %v4773, 1
        %v4854 = vrot.slane %v4773, 2
        %v4855 = vrot.slane %v4773, 3
        %v4856 = vrot.slane %v4773, 4
        %v4857 = vrot.slane %v4773, 5
        %v4858 = vrot.slane %v4773, 6
        %v4859 = vrot.slane %v4773, 7
        %v4860 = vperm.slane %v4758, 0
        %v4861 = vperm.slane %v4846, 0
        %v4862 = vperm.slane %v4847, 0
        %v4863 = vperm.slane %v4848, 0
        %v4864 = vperm.slane %v4849, 0
        %v4865 = vperm.slane %v4850, 0
        %v4866 = vperm.slane %v4851, 0
        %v4867 = vperm.slane %v4852, 0
        %v4868 = vperm.slane %v4773, 0
        %v4869 = vperm.slane %v4853, 0
        %v4870 = vperm.slane %v4854, 0
        %v4871 = vperm.slane %v4855, 0
        %v4872 = vperm.slane %v4856, 0
        %v4873 = vperm.slane %v4857, 0
        %v4874 = vperm.slane %v4858, 0
        %v4875 = vperm.slane %v4859, 0
        %v4892 = vmul.f32 %v4812, %v4860
        %v4893 = vmul.f32 %v4813, %v4860
        %v4894 = vmul.f32 %v4814, %v4861
        %v4895 = vmul.f32 %v4815, %v4861
        %v4896 = vmul.f32 %v4816, %v4862
        %v4897 = vmul.f32 %v4817, %v4862
        %v4898 = vmul.f32 %v4818, %v4863
        %v4899 = vmul.f32 %v4819, %v4863
        %v4900 = vmul.f32 %v4820, %v4864
        %v4901 = vmul.f32 %v4821, %v4864
        %v4902 = vmul.f32 %v4822, %v4865
        %v4903 = vmul.f32 %v4823, %v4865
        %v4904 = vmul.f32 %v4824, %v4866
        %v4905 = vmul.f32 %v4825, %v4866
        %v4906 = vmul.f32 %v4826, %v4867
        %v4907 = vmul.f32 %v4827, %v4867
        %v4908 = vmul.f32 %v4828, %v4868
        %v4909 = vmul.f32 %v4829, %v4868
        %v4910 = vmul.f32 %v4830, %v4869
        %v4911 = vmul.f32 %v4831, %v4869
        %v4912 = vmul.f32 %v4832, %v4870
        %v4913 = vmul.f32 %v4833, %v4870
        %v4914 = vmul.f32 %v4834, %v4871
        %v4915 = vmul.f32 %v4835, %v4871
        %v4916 = vmul.f32 %v4836, %v4872
        %v4917 = vmul.f32 %v4837, %v4872
        %v4918 = vmul.f32 %v4838, %v4873
        %v4919 = vmul.f32 %v4839, %v4873
        %v4920 = vmul.f32 %v4840, %v4874
        %v4921 = vmul.f32 %v4841, %v4874
        %v4922 = vmul.f32 %v4842, %v4875
        %v4923 = vmul.f32 %v4843, %v4875
        %v4924 = vadd.f32 %v4892, %v463
        %v4925 = vadd.f32 %v4893, %v464
        %v4926 = vadd.f32 %v4894, %v465
        %v4927 = vadd.f32 %v4895, %v466
        %v4928 = vadd.f32 %v4896, %v467
        %v4929 = vadd.f32 %v4897, %v468
        %v4930 = vadd.f32 %v4898, %v469
        %v4931 = vadd.f32 %v4899, %v470
        %v4932 = vadd.f32 %v4900, %v471
        %v4933 = vadd.f32 %v4901, %v472
        %v4934 = vadd.f32 %v4902, %v473
        %v4935 = vadd.f32 %v4903, %v474
        %v4936 = vadd.f32 %v4904, %v475
        %v4937 = vadd.f32 %v4905, %v476
        %v4938 = vadd.f32 %v4906, %v477
        %v4939 = vadd.f32 %v4907, %v478
        %v4940 = vadd.f32 %v4908, %v479
        %v4941 = vadd.f32 %v4909, %v480
        %v4942 = vadd.f32 %v4910, %v481
        %v4943 = vadd.f32 %v4911, %v482
        %v4944 = vadd.f32 %v4912, %v483
        %v4945 = vadd.f32 %v4913, %v484
        %v4946 = vadd.f32 %v4914, %v485
        %v4947 = vadd.f32 %v4915, %v486
        %v4948 = vadd.f32 %v4916, %v487
        %v4949 = vadd.f32 %v4917, %v488
        %v4950 = vadd.f32 %v4918, %v489
        %v4951 = vadd.f32 %v4919, %v490
        %v4952 = vadd.f32 %v4920, %v491
        %v4953 = vadd.f32 %v4921, %v492
        %v4954 = vadd.f32 %v4922, %v493
        %v4955 = vadd.f32 %v4923, %v494
        %v4956 = vmax.f32 %v4924, 0.0
        %v4957 = vmax.f32 %v4925, 0.0
        %v4958 = vmax.f32 %v4926, 0.0
        %v4959 = vmax.f32 %v4927, 0.0
        %v4960 = vmax.f32 %v4928, 0.0
        %v4961 = vmax.f32 %v4929, 0.0
        %v4962 = vmax.f32 %v4930, 0.0
        %v4963 = vmax.f32 %v4931, 0.0
        %v4964 = vmax.f32 %v4932, 0.0
        %v4965 = vmax.f32 %v4933, 0.0
        %v4966 = vmax.f32 %v4934, 0.0
        %v4967 = vmax.f32 %v4935, 0.0
        %v4968 = vmax.f32 %v4936, 0.0
        %v4969 = vmax.f32 %v4937, 0.0
        %v4970 = vmax.f32 %v4938, 0.0
        %v4971 = vmax.f32 %v4939, 0.0
        %v4972 = vmax.f32 %v4940, 0.0
        %v4973 = vmax.f32 %v4941, 0.0
        %v4974 = vmax.f32 %v4942, 0.0
        %v4975 = vmax.f32 %v4943, 0.0
        %v4976 = vmax.f32 %v4944, 0.0
        %v4977 = vmax.f32 %v4945, 0.0
        %v4978 = vmax.f32 %v4946, 0.0
        %v4979 = vmax.f32 %v4947, 0.0
        %v4980 = vmax.f32 %v4948, 0.0
        %v4981 = vmax.f32 %v4949, 0.0
        %v4982 = vmax.f32 %v4950, 0.0
        %v4983 = vmax.f32 %v4951, 0.0
        %v4984 = vmax.f32 %v4952, 0.0
        %v4985 = vmax.f32 %v4953, 0.0
        %v4986 = vmax.f32 %v4954, 0.0
        %v4987 = vmax.f32 %v4955, 0.0
        %4988 = vst.msk [vmem:[%s406] sm:$0xff] %vm531, %v4956
        %4989 = vst.msk [vmem:[%s406 + $0x8] sm:$0xff] %vm531, %v4957
        %4990 = vst.msk [vmem:[%s406 + $0x10] sm:$0xff] %vm531, %v4958
        %4991 = vst.msk [vmem:[%s406 + $0x18] sm:$0xff] %vm531, %v4959
        %4992 = vst.msk [vmem:[%s406 + $0x20] sm:$0xff] %vm531, %v4960
        %4993 = vst.msk [vmem:[%s406 + $0x28] sm:$0xff] %vm531, %v4961
        %4994 = vst.msk [vmem:[%s406 + $0x30] sm:$0xff] %vm531, %v4962
        %4995 = vst.msk [vmem:[%s406 + $0x38] sm:$0xff] %vm531, %v4963
        %4996 = vst.msk [vmem:[%s406 + $0x40] sm:$0xff] %vm531, %v4964
        %4997 = vst.msk [vmem:[%s406 + $0x48] sm:$0xff] %vm531, %v4965
        %4998 = vst.msk [vmem:[%s406 + $0x50] sm:$0xff] %vm531, %v4966
        %4999 = vst.msk [vmem:[%s406 + $0x58] sm:$0xff] %vm531, %v4967
        %5000 = vst.msk [vmem:[%s406 + $0x60] sm:$0xff] %vm531, %v4968
        %5001 = vst.msk [vmem:[%s406 + $0x68] sm:$0xff] %vm531, %v4969
        %5002 = vst.msk [vmem:[%s406 + $0x70] sm:$0xff] %vm531, %v4970
        %5003 = vst.msk [vmem:[%s406 + $0x78] sm:$0xff] %vm531, %v4971
        %5004 = vst.msk [vmem:[%s406 + $0x80] sm:$0xff] %vm531, %v4972
        %5005 = vst.msk [vmem:[%s406 + $0x88] sm:$0xff] %vm531, %v4973
        %5006 = vst.msk [vmem:[%s406 + $0x90] sm:$0xff] %vm531, %v4974
        %5007 = vst.msk [vmem:[%s406 + $0x98] sm:$0xff] %vm531, %v4975
        %5008 = vst.msk [vmem:[%s406 + $0xa0] sm:$0xff] %vm531, %v4976
        %5009 = vst.msk [vmem:[%s406 + $0xa8] sm:$0xff] %vm531, %v4977
        %5010 = vst.msk [vmem:[%s406 + $0xb0] sm:$0xff] %vm531, %v4978
        %5011 = vst.msk [vmem:[%s406 + $0xb8] sm:$0xff] %vm531, %v4979
        %5012 = vst.msk [vmem:[%s406 + $0xc0] sm:$0xff] %vm531, %v4980
        %5013 = vst.msk [vmem:[%s406 + $0xc8] sm:$0xff] %vm531, %v4981
        %5014 = vst.msk [vmem:[%s406 + $0xd0] sm:$0xff] %vm531, %v4982
        %5015 = vst.msk [vmem:[%s406 + $0xd8] sm:$0xff] %vm531, %v4983
        %5016 = vst.msk [vmem:[%s406 + $0xe0] sm:$0xff] %vm531, %v4984
        %5017 = vst.msk [vmem:[%s406 + $0xe8] sm:$0xff] %vm531, %v4985
        %5018 = vst.msk [vmem:[%s406 + $0xf0] sm:$0xff] %vm531, %v4986
        %5019 = vst.msk [vmem:[%s406 + $0xf8] sm:$0xff] %vm531, %v4987
        %s5020 = sand.u32 %s272, 1
        %s5021 = scalar_lea.sflag [#allocation5], %s5020
        %s5022 = sand.u32 %s272, 1
        %s5023 = smul.addr %s5022, 256
        %s5024 = scalar_lea.vmem [#allocation6], %s5023
        // Predicated region
        $region69: #{bottleneck_forward.1} parent=63 // pred_check
          %p5025 = pneg %p282
        $region70: #{bottleneck_forward.1} parent=63 // pred_check_branch
          %5027 = sbr.rel (%p5025) target = $region72
        $region71: #{bottleneck_forward.1} parent=63 // pred_region
          %5029 = vsyncadd %s5021, 0
          %s5030 = smul.addr %s28, 32
          %s5031 = smul.addr %s5030, 8
          %s5032 = scalar_lea.hbm %s11, %s5031
          %s5033 = sshll.u32 %s5024, 4
          %s5034 = int_to_ptr.vmem [resolvable:$true] %s5033
          %s5035 = sshll.u32 %s5032, 4
          %s5036 = int_to_ptr.hbm [resolvable:$true] %s5035
          %5041 = dma.vmem_to_hbm [thread:$0]  %s5034, 4096, %s5036, %s5021, 128, 128, 8
        $region72: #{bottleneck_forward.1} parent=63 // pred_fallthru
          _
      $region64: #{bottleneck_forward.1} parent=5 // pred_fallthru
        _
      %p5042 = scmp.le.s32.totalorder 2, %s23
      // Predicated region
      $region73: #{bottleneck_forward.1} parent=5 // pred_check
        %p5043 = pneg %p5042
      $region74: #{bottleneck_forward.1} parent=5 // pred_check_branch
        %5045 = sbr.rel (%p5043) target = $region76
      $region75: #{bottleneck_forward.1} parent=5 // pred_region
        %s5046 = ssub.s32 %s23, 2
        // Predicated region
        $region77: #{bottleneck_forward.1} parent=75 // pred_check
          %p5047 = pneg %p288
        $region78: #{bottleneck_forward.1} parent=75 // pred_check_branch
          %5049 = sbr.rel (%p5047) target = $region80
        $region79: #{bottleneck_forward.1} parent=75 // pred_region
          %s5050 = sand.u32 %s273, 1
          %s5051 = scalar_lea.sflag [#allocation5], %s5050
          %s5052 = sand.u32 %s273, 1
          %s5053 = smul.addr %s5052, 256
          %s5054 = scalar_lea.vmem [#allocation6], %s5053
          %5056 = dma.done %s5051, 4096
        $region80: #{bottleneck_forward.1} parent=75 // pred_fallthru
          _
      $region76: #{bottleneck_forward.1} parent=5 // pred_fallthru
        _
    $region6: #{bottleneck_forward.1} parent=1 // loop_footer
      %s27 = sadd.s32 1, %s23
    $region7: #{bottleneck_forward.1} parent=1 // loop_footer_branch
      %22 = sbr.rel target = $region3
    $region8: #{bottleneck_forward.1} parent=1 // loop_exit
      _
    %5057 = vsyncpa [#allocation4], 1
    %s5058 = scalar_lea.sflag [#allocation4], 1
    %5059 = vsyncpa %s5058, 1
    %5060 = vsyncpa [#allocation5], 1
    %s5061 = scalar_lea.sflag [#allocation5], 1
    %5062 = vsyncpa %s5061, 1

</llo_original>
